<compile_context>
chip_gen: v5e
topology: v5e:2x2
jax: 0.10.0
libtpu: 0.0.40
codegen_flags: <defaults>
</compile_context>

<pallas_src>
import functools

import numpy as np
import jax
import jax.numpy as jnp
from jax import lax
from jax.experimental import pallas as pl
from jax.experimental.pallas import tpu as pltpu


# Set True when building for real-TPU execution to route the cyclic lane shifts
# through the XLU (pltpu.roll / vrot) instead of VALU concat-of-slices.  Kept
# False here so the kernel also runs under Pallas interpret mode.
_USE_XLU_ROLL = False


def _round_up(x, m):
    return ((x + m - 1) // m) * m


# ----------------------------------------------------------------------------
# In-kernel helpers (trace-time Python; everything lowers to Mosaic vector ops)
# ----------------------------------------------------------------------------
def _shift_lanes(x, d):
    """result[:, l] = x[:, (l + d) % L]  (cyclic shift along the lane axis)."""
    L = x.shape[-1]
    d = d % L
    if d == 0:
        return x
    if _USE_XLU_ROLL:
        return pltpu.roll(x, L - d, axis=1)            # jnp.roll sign convention
    return jnp.concatenate([x[:, d:], x[:, :d]], axis=-1)


def _conv3x3_relu(act, w_packed, bias, masks, width, dil):
    """3x3 'same' conv + bias + ReLU as ONE stacked-K MXU matmul.

    act:      [C, M] activations (compute dtype); lanes = (sample, y, x); valid
              values live at physical positions that are multiples of `dil`.
    w_packed: [OC, 9*C] weights, column order (tap-major, then channel).
    bias:     [OC, 1] float32.
    masks:    [9, M] {0,1} boundary masks (compute dtype) for this dilation.
    Returns float32 [OC, M] (valid at the same dilated positions)."""
    rows = []
    for t in range(9):
        oy, ox = t // 3 - 1, t % 3 - 1
        shifted = _shift_lanes(act, dil * (oy * width + ox))
        if t != 4:                                  # center tap mask is all-ones
            shifted = shifted * masks[t:t + 1, :]
        rows.append(shifted)
    stacked = jnp.concatenate(rows, axis=0)          # [9*C, M]
    acc = jnp.dot(w_packed, stacked, preferred_element_type=jnp.float32)
    return jnp.maximum(acc + bias, 0.0)


def _maxpool2x2(act, width, dil):
    """MaxPool2d(2, 2) on the dilation-`dil` grid.  Valid outputs land at
    physical positions that are multiples of 2*dil; other lanes hold finite junk
    that downstream stages never read (masked / zero-weighted)."""
    rm = jnp.maximum(act, _shift_lanes(act, dil))
    return jnp.maximum(rm, _shift_lanes(rm, dil * width))


# ----------------------------------------------------------------------------
# The fused kernel: conv1+relu+pool1+conv2+relu+pool2+fc1+relu+fc2
# ----------------------------------------------------------------------------
def _sketch_cnn_kernel(x_ref, m1_ref, m2_ref, w1_ref, b1_ref, w2_ref, b2_ref,
                       fc1w_ref, fc1b_ref, fc2w_ref, fc2b_ref, o_ref,
                       *, tb, h, w):
    hw = h * w
    cdt = w1_ref.dtype                                   # compute dtype (f32/bf16)

    x = x_ref[...].astype(cdt)                           # [1, M], M = tb*h*w
    m1 = m1_ref[...]                                     # [9, M]
    m2 = m2_ref[...]                                     # [9, M]

    a1 = _conv3x3_relu(x, w1_ref[...], b1_ref[...], m1, w, dil=1)     # f32 [8, M]
    p1 = _maxpool2x2(a1.astype(cdt), w, dil=1)                        # valid @ (2Y,2X)
    a2 = _conv3x3_relu(p1, w2_ref[...], b2_ref[...], m2, w, dil=2)    # f32 [16, M]
    p2 = _maxpool2x2(a2.astype(cdt), w, dil=2)                        # valid @ (4Y,4X)

    # Flatten + fc1: per input channel, unflatten the lane axis to [tb, 256] and
    # contract against the dilated-grid fc1 weight (zero rows at junk lanes), so
    # the "Flatten" gather is folded into the matmul.  16 fixed relayouts,
    # independent of the batch tile size.
    acc = jnp.zeros((tb, 32), jnp.float32)
    for c in range(p2.shape[0]):
        xc = p2[c:c + 1, :].reshape(tb, hw)                           # [tb, 256]
        acc = acc + jnp.dot(xc, fc1w_ref[c], preferred_element_type=jnp.float32)
    h1 = jnp.maximum(acc + fc1b_ref[...], 0.0).astype(cdt)            # [tb, 32]

    # fc2, padded to 128 output columns -> lane-dense store.
    out = jnp.dot(h1, fc2w_ref[...], preferred_element_type=jnp.float32) + fc2b_ref[...]
    o_ref[...] = out.astype(o_ref.dtype)                              # [tb, 128]


# ----------------------------------------------------------------------------
# Parameter init (kaiming_normal_ on weights, bias = 0.1), deterministic.
# ----------------------------------------------------------------------------
def _kaiming_normal(key, shape, fan_in):
    std = jnp.sqrt(2.0 / fan_in)
    return jax.random.normal(key, shape, dtype=jnp.float32) * std


def init_params(key):
    k1, k2, k3, k4 = jax.random.split(key, 4)
    return {
        "conv1_w": _kaiming_normal(k1, (8, 1, 3, 3), 1 * 3 * 3),
        "conv1_b": jnp.full((8,), 0.1, jnp.float32),
        "conv2_w": _kaiming_normal(k2, (16, 8, 3, 3), 8 * 3 * 3),
        "conv2_b": jnp.full((16,), 0.1, jnp.float32),
        "fc1_w": _kaiming_normal(k3, (32, 256), 256),
        "fc1_b": jnp.full((32,), 0.1, jnp.float32),
        "fc2_w": _kaiming_normal(k4, (10, 32), 32),
        "fc2_b": jnp.full((10,), 0.1, jnp.float32),
    }


def prepare_kernel_params(params, compute_dtype=jnp.float32):
    """One-time rearrangement of PyTorch-layout parameters into kernel-resident
    layouts (hoisted out of the forward pass).  `compute_dtype=jnp.bfloat16` is
    recommended on v6e/v7x; keep float32 on v5e."""
    cdt = compute_dtype
    c1, c2 = params["conv1_w"], params["conv2_w"]
    # Stacked-tap packed conv weights: column order = (tap-major, channel).
    w1_packed = c1.reshape(8, 9).astype(cdt)                               # [8, 9]
    w2_packed = jnp.transpose(c2, (0, 2, 3, 1)).reshape(16, 72).astype(cdt)  # [16, 72]
    # Expand fc1 weight onto the dilated 16x16 grid (valid pool2 outputs live at
    # physical (4Y, 4X); all other rows are zero) and split per input channel.
    w1r = params["fc1_w"].reshape(32, 16, 4, 4)
    w1e = jnp.zeros((32, 16, 16, 16), jnp.float32).at[:, :, ::4, ::4].set(w1r)
    fc1_perchan = jnp.transpose(w1e.reshape(32, 16, 256), (1, 2, 0)).astype(cdt)  # [16,256,32]
    # fc2 padded to 128 output columns -> lane-dense output block.
    fc2_pad = jnp.zeros((32, 128), jnp.float32).at[:, :10].set(params["fc2_w"].T).astype(cdt)
    fc2_b_pad = jnp.zeros((1, 128), jnp.float32).at[0, :10].set(params["fc2_b"])
    return {
        "w1_packed": w1_packed,
        "b1": params["conv1_b"].reshape(-1, 1).astype(jnp.float32),        # [8, 1]
        "w2_packed": w2_packed,
        "b2": params["conv2_b"].reshape(-1, 1).astype(jnp.float32),        # [16, 1]
        "fc1_perchan": fc1_perchan,                                        # [16, 256, 32]
        "fc1_b": params["fc1_b"].reshape(1, -1).astype(jnp.float32),       # [1, 32]
        "fc2_pad": fc2_pad,                                                # [32, 128]
        "fc2_b_pad": fc2_b_pad,                                            # [1, 128]
    }


@functools.lru_cache(maxsize=None)
def _conv_tap_masks(tb, h, w, dil):
    """Stacked {0,1} float32 masks [9, tb*h*w] for the dilation-`dil` grid.
    A tap is valid where the shifted logical position stays inside the
    (h//dil) x (w//dil) feature map of the SAME sample."""
    py = np.arange(h)[:, None]
    px = np.arange(w)[None, :]
    yy, xx = py // dil, px // dil
    hl, wl = h // dil, w // dil
    masks = []
    for t in range(9):
        oy, ox = t // 3 - 1, t % 3 - 1
        m = (yy + oy >= 0) & (yy + oy < hl) & (xx + ox >= 0) & (xx + ox < wl)
        masks.append(np.tile(m.reshape(-1), tb).astype(np.float32))
    return np.stack(masks, axis=0)


def _choose_block_batch(n, cap=64):
    """Large batch tile (amortizes per-step overhead, fills MXU rows), padded to
    a multiple of 8, while keeping >= 2 grid steps when possible (v7x megacore)."""
    tb = min(cap, _round_up(n, 8))
    g = -(-n // tb)
    if g < 2 and tb > 8:
        g = 2
    tb = min(cap, _round_up(-(-n // g), 8))
    return max(tb, 8)


# ----------------------------------------------------------------------------
# Forward pass: single fused pallas_call, grid over batch blocks.
# ----------------------------------------------------------------------------
def sketch_cnn_forward(kparams, x, *, block_batch=None, max_block_batch=64):
    n, c, h, w = x.shape
    assert c == 1 and h == 16 and w == 16, "kernel instantiated for 1x16x16 sketches"
    cdt = kparams["w1_packed"].dtype

    tb = _round_up(block_batch, 8) if block_batch is not None \
        else _choose_block_batch(n, max_block_batch)
    n_pad = _round_up(n, tb)
    grid = n_pad // tb
    M = tb * h * w

    xp = x.astype(jnp.float32)
    if n_pad != n:
        xp = jnp.pad(xp, ((0, n_pad - n), (0, 0), (0, 0), (0, 0)))
    x2d = xp.reshape(1, n_pad * h * w)                     # lane-dense input slab

    m1 = jnp.asarray(_conv_tap_masks(tb, h, w, 1), dtype=cdt)   # [9, M]
    m2 = jnp.asarray(_conv_tap_masks(tb, h, w, 2), dtype=cdt)   # [9, M]

    # VMEM scoped limit sized from the real footprint (activation slabs + masks
    # + weights + pipelining headroom), clamped well below v7x's 64 MiB physical.
    vmem_limit = int(min(48 * 2**20, max(16 * 2**20, 4 * 2**20 + 220 * M * cdt.itemsize)))

    kernel = functools.partial(_sketch_cnn_kernel, tb=tb, h=h, w=w)

    def resident():
        return pl.BlockSpec(memory_space=pltpu.MemorySpace.VMEM)

    out = pl.pallas_call(
        kernel,
        out_shape=jax.ShapeDtypeStruct((n_pad, 128), jnp.float32),
        grid=(grid,),
        in_specs=[
            pl.BlockSpec((1, tb * h * w), lambda b: (0, b)),   # batch block of inputs
            resident(), resident(),                            # conv1 / conv2 tap masks
            resident(), resident(), resident(), resident(),    # conv weights / biases
            resident(), resident(), resident(), resident(),    # fc weights / biases
        ],
        out_specs=pl.BlockSpec((tb, 128), lambda b: (b, 0)),   # lane-dense output block
        compiler_params=pltpu.CompilerParams(
            dimension_semantics=("parallel",),
            vmem_limit_bytes=vmem_limit,
        ),
    )(x2d, m1, m2,
      kparams["w1_packed"], kparams["b1"], kparams["w2_packed"], kparams["b2"],
      kparams["fc1_perchan"], kparams["fc1_b"], kparams["fc2_pad"], kparams["fc2_b_pad"])
    return out[:n, :10]


# ----------------------------------------------------------------------------
# Pure-JAX reference (mirrors the nn.Sequential exactly) for validation.
# ----------------------------------------------------------------------------
def reference_forward(params, x):
    n = x.shape[0]
    hi = lax.Precision.HIGHEST
    y = lax.conv_general_dilated(x, params["conv1_w"], (1, 1), ((1, 1), (1, 1)),
                                 dimension_numbers=("NCHW", "OIHW", "NCHW"),
                                 precision=hi)
    y = jnp.maximum(y + params["conv1_b"][None, :, None, None], 0.0)
    y = y.reshape(n, 8, 8, 2, 8, 2).max(axis=(3, 5))
    y = lax.conv_general_dilated(y, params["conv2_w"], (1, 1), ((1, 1), (1, 1)),
                                 dimension_numbers=("NCHW", "OIHW", "NCHW"),
                                 precision=hi)
    y = jnp.maximum(y + params["conv2_b"][None, :, None, None], 0.0)
    y = y.reshape(n, 16, 4, 2, 4, 2).max(axis=(3, 5))
    y = y.reshape(n, 256)
    y = jnp.maximum(jnp.dot(y, params["fc1_w"].T, precision=hi) + params["fc1_b"], 0.0)
    return jnp.dot(y, params["fc2_w"].T, precision=hi) + params["fc2_b"]


if __name__ == "__main__":
    key = jax.random.PRNGKey(0)
    pkey, xkey = jax.random.split(key)
    params = init_params(pkey)

    # Small deterministic input: batch=12 (NOT a multiple of the tile -> exercises
    # batch padding and a >=2-step grid), 1 channel, 16x16 "sketch".
    n = 12
    x = jax.random.normal(xkey, (n, 1, 16, 16), dtype=jnp.float32)
    ref = reference_forward(params, x)

    # float32 compute path (v5e-safe), forced small tile -> grid of 2 blocks.
    kp32 = prepare_kernel_params(params, jnp.float32)
    fwd32 = jax.jit(functools.partial(sketch_cnn_forward, block_batch=8))
    out32 = jax.block_until_ready(fwd32(kp32, x))
    assert out32.shape == (n, 10), out32.shape
    assert bool(jnp.all(jnp.isfinite(out32)))
    err32 = float(jnp.max(jnp.abs(out32 - ref)))
    assert err32 < 2e-3, f"f32 kernel/reference mismatch: max abs err {err32}"

    # bfloat16 compute path (recommended on v6e/v7x), automatic tile choice.
    # Accumulation stays f32; bf16 rounding of inputs/weights gives ~1e-2 abs err.
    kpbf = prepare_kernel_params(params, jnp.bfloat16)
    fwdbf = jax.jit(sketch_cnn_forward)
    outbf = jax.block_until_ready(fwdbf(kpbf, x))
    assert outbf.shape == (n, 10)
    errbf = float(jnp.max(jnp.abs(outbf - ref)))
    assert errbf < 2e-1, f"bf16 kernel/reference mismatch: max abs err {errbf}"

    print("KERNEL_OK")
</pallas_src>

<mosaic_0001>
module attributes {stable_mosaic.version = 11 : i64} {
  func.func @_sketch_cnn_kernel(%arg0: i32, %arg1: memref<1x2048xf32, #tpu.memory_space<vmem>>, %arg2: memref<9x2048xf32, #tpu.memory_space<vmem>>, %arg3: memref<9x2048xf32, #tpu.memory_space<vmem>>, %arg4: memref<8x9xf32, #tpu.memory_space<vmem>>, %arg5: memref<8x1xf32, #tpu.memory_space<vmem>>, %arg6: memref<16x72xf32, #tpu.memory_space<vmem>>, %arg7: memref<16x1xf32, #tpu.memory_space<vmem>>, %arg8: memref<16x256x32xf32, #tpu.memory_space<vmem>>, %arg9: memref<1x32xf32, #tpu.memory_space<vmem>>, %arg10: memref<32x128xf32, #tpu.memory_space<vmem>>, %arg11: memref<1x128xf32, #tpu.memory_space<vmem>>, %arg12: memref<8x128xf32, #tpu.memory_space<vmem>>) attributes {dimension_semantics = [#tpu.dimension_semantics<parallel>], iteration_bounds = array<i64: 2>, scalar_prefetch = 0 : i64, scratch_operands = 0 : i64, tpu.core_type = #tpu.core_type<tc>, window_params = [{transform_indices = @transform_0, window_bounds = array<i64: 1, 2048>}, {pipeline_mode = #tpu.pipeline_mode<synchronous>, transform_indices = @transform_1, window_bounds = array<i64: 9, 2048>}, {pipeline_mode = #tpu.pipeline_mode<synchronous>, transform_indices = @transform_2, window_bounds = array<i64: 9, 2048>}, {pipeline_mode = #tpu.pipeline_mode<synchronous>, transform_indices = @transform_3, window_bounds = array<i64: 8, 9>}, {pipeline_mode = #tpu.pipeline_mode<synchronous>, transform_indices = @transform_4, window_bounds = array<i64: 8, 1>}, {pipeline_mode = #tpu.pipeline_mode<synchronous>, transform_indices = @transform_5, window_bounds = array<i64: 16, 72>}, {pipeline_mode = #tpu.pipeline_mode<synchronous>, transform_indices = @transform_6, window_bounds = array<i64: 16, 1>}, {pipeline_mode = #tpu.pipeline_mode<synchronous>, transform_indices = @transform_7, window_bounds = array<i64: 16, 256, 32>}, {pipeline_mode = #tpu.pipeline_mode<synchronous>, transform_indices = @transform_8, window_bounds = array<i64: 1, 32>}, {pipeline_mode = #tpu.pipeline_mode<synchronous>, transform_indices = @transform_9, window_bounds = array<i64: 32, 128>}, {pipeline_mode = #tpu.pipeline_mode<synchronous>, transform_indices = @transform_10, window_bounds = array<i64: 1, 128>}, {transform_indices = @transform_11, window_bounds = array<i64: 8, 128>}]} {
    %c0 = arith.constant 0 : index
    %c0_0 = arith.constant 0 : index
    %0 = vector.load %arg1[%c0, %c0_0] : memref<1x2048xf32, #tpu.memory_space<vmem>>, vector<1x2048xf32>
    %c0_1 = arith.constant 0 : index
    %c0_2 = arith.constant 0 : index
    %1 = vector.load %arg2[%c0_1, %c0_2] : memref<9x2048xf32, #tpu.memory_space<vmem>>, vector<9x2048xf32>
    %c0_3 = arith.constant 0 : index
    %c0_4 = arith.constant 0 : index
    %2 = vector.load %arg3[%c0_3, %c0_4] : memref<9x2048xf32, #tpu.memory_space<vmem>>, vector<9x2048xf32>
    %c0_5 = arith.constant 0 : index
    %c0_6 = arith.constant 0 : index
    %3 = vector.load %arg4[%c0_5, %c0_6] : memref<8x9xf32, #tpu.memory_space<vmem>>, vector<8x9xf32>
    %c0_7 = arith.constant 0 : index
    %c0_8 = arith.constant 0 : index
    %4 = vector.load %arg5[%c0_7, %c0_8] : memref<8x1xf32, #tpu.memory_space<vmem>>, vector<8x1xf32>
    %5 = vector.extract_strided_slice %0 {offsets = [0, 2031], sizes = [1, 17], strides = [1, 1]} : vector<1x2048xf32> to vector<1x17xf32>
    %6 = vector.extract_strided_slice %0 {offsets = [0, 0], sizes = [1, 2031], strides = [1, 1]} : vector<1x2048xf32> to vector<1x2031xf32>
    %7 = tpu.concatenate %5, %6 in 1 : vector<1x17xf32>, vector<1x2031xf32> -> vector<1x2048xf32>
    %8 = vector.extract_strided_slice %1 {offsets = [0, 0], sizes = [1, 2048], strides = [1, 1]} : vector<9x2048xf32> to vector<1x2048xf32>
    %9 = arith.mulf %7, %8 : vector<1x2048xf32>
    %10 = vector.extract_strided_slice %0 {offsets = [0, 2032], sizes = [1, 16], strides = [1, 1]} : vector<1x2048xf32> to vector<1x16xf32>
    %11 = vector.extract_strided_slice %0 {offsets = [0, 0], sizes = [1, 2032], strides = [1, 1]} : vector<1x2048xf32> to vector<1x2032xf32>
    %12 = tpu.concatenate %10, %11 in 1 : vector<1x16xf32>, vector<1x2032xf32> -> vector<1x2048xf32>
    %13 = vector.extract_strided_slice %1 {offsets = [1, 0], sizes = [1, 2048], strides = [1, 1]} : vector<9x2048xf32> to vector<1x2048xf32>
    %14 = arith.mulf %12, %13 : vector<1x2048xf32>
    %15 = vector.extract_strided_slice %0 {offsets = [0, 2033], sizes = [1, 15], strides = [1, 1]} : vector<1x2048xf32> to vector<1x15xf32>
    %16 = vector.extract_strided_slice %0 {offsets = [0, 0], sizes = [1, 2033], strides = [1, 1]} : vector<1x2048xf32> to vector<1x2033xf32>
    %17 = tpu.concatenate %15, %16 in 1 : vector<1x15xf32>, vector<1x2033xf32> -> vector<1x2048xf32>
    %18 = vector.extract_strided_slice %1 {offsets = [2, 0], sizes = [1, 2048], strides = [1, 1]} : vector<9x2048xf32> to vector<1x2048xf32>
    %19 = arith.mulf %17, %18 : vector<1x2048xf32>
    %20 = vector.extract_strided_slice %0 {offsets = [0, 2047], sizes = [1, 1], strides = [1, 1]} : vector<1x2048xf32> to vector<1x1xf32>
    %21 = vector.extract_strided_slice %0 {offsets = [0, 0], sizes = [1, 2047], strides = [1, 1]} : vector<1x2048xf32> to vector<1x2047xf32>
    %22 = tpu.concatenate %20, %21 in 1 : vector<1x1xf32>, vector<1x2047xf32> -> vector<1x2048xf32>
    %23 = vector.extract_strided_slice %1 {offsets = [3, 0], sizes = [1, 2048], strides = [1, 1]} : vector<9x2048xf32> to vector<1x2048xf32>
    %24 = arith.mulf %22, %23 : vector<1x2048xf32>
    %25 = vector.extract_strided_slice %0 {offsets = [0, 1], sizes = [1, 2047], strides = [1, 1]} : vector<1x2048xf32> to vector<1x2047xf32>
    %26 = vector.extract_strided_slice %0 {offsets = [0, 0], sizes = [1, 1], strides = [1, 1]} : vector<1x2048xf32> to vector<1x1xf32>
    %27 = tpu.concatenate %25, %26 in 1 : vector<1x2047xf32>, vector<1x1xf32> -> vector<1x2048xf32>
    %28 = vector.extract_strided_slice %1 {offsets = [5, 0], sizes = [1, 2048], strides = [1, 1]} : vector<9x2048xf32> to vector<1x2048xf32>
    %29 = arith.mulf %27, %28 : vector<1x2048xf32>
    %30 = vector.extract_strided_slice %0 {offsets = [0, 15], sizes = [1, 2033], strides = [1, 1]} : vector<1x2048xf32> to vector<1x2033xf32>
    %31 = vector.extract_strided_slice %0 {offsets = [0, 0], sizes = [1, 15], strides = [1, 1]} : vector<1x2048xf32> to vector<1x15xf32>
    %32 = tpu.concatenate %30, %31 in 1 : vector<1x2033xf32>, vector<1x15xf32> -> vector<1x2048xf32>
    %33 = vector.extract_strided_slice %1 {offsets = [6, 0], sizes = [1, 2048], strides = [1, 1]} : vector<9x2048xf32> to vector<1x2048xf32>
    %34 = arith.mulf %32, %33 : vector<1x2048xf32>
    %35 = vector.extract_strided_slice %0 {offsets = [0, 16], sizes = [1, 2032], strides = [1, 1]} : vector<1x2048xf32> to vector<1x2032xf32>
    %36 = vector.extract_strided_slice %0 {offsets = [0, 0], sizes = [1, 16], strides = [1, 1]} : vector<1x2048xf32> to vector<1x16xf32>
    %37 = tpu.concatenate %35, %36 in 1 : vector<1x2032xf32>, vector<1x16xf32> -> vector<1x2048xf32>
    %38 = vector.extract_strided_slice %1 {offsets = [7, 0], sizes = [1, 2048], strides = [1, 1]} : vector<9x2048xf32> to vector<1x2048xf32>
    %39 = arith.mulf %37, %38 : vector<1x2048xf32>
    %40 = vector.extract_strided_slice %0 {offsets = [0, 17], sizes = [1, 2031], strides = [1, 1]} : vector<1x2048xf32> to vector<1x2031xf32>
    %41 = vector.extract_strided_slice %0 {offsets = [0, 0], sizes = [1, 17], strides = [1, 1]} : vector<1x2048xf32> to vector<1x17xf32>
    %42 = tpu.concatenate %40, %41 in 1 : vector<1x2031xf32>, vector<1x17xf32> -> vector<1x2048xf32>
    %43 = vector.extract_strided_slice %1 {offsets = [8, 0], sizes = [1, 2048], strides = [1, 1]} : vector<9x2048xf32> to vector<1x2048xf32>
    %44 = arith.mulf %42, %43 : vector<1x2048xf32>
    %45 = tpu.concatenate %9, %14, %19, %24, %0, %29, %34, %39, %44 in 0 : vector<1x2048xf32>, vector<1x2048xf32>, vector<1x2048xf32>, vector<1x2048xf32>, vector<1x2048xf32>, vector<1x2048xf32>, vector<1x2048xf32>, vector<1x2048xf32>, vector<1x2048xf32> -> vector<9x2048xf32>
    %cst = arith.constant dense<0.000000e+00> : vector<8x2048xf32>
    %46 = tpu.matmul %3, %45, %cst {dimension_numbers = #tpu.dot_dimension_numbers<[1], [0], [0], [1], [0, 0, 1, 1], [], []>} : vector<8x9xf32>, vector<9x2048xf32>, vector<8x2048xf32> -> vector<8x2048xf32>
    %47 = vector.broadcast %4 : vector<8x1xf32> to vector<8x2048xf32>
    %48 = arith.addf %46, %47 : vector<8x2048xf32>
    %cst_9 = arith.constant 0.000000e+00 : f32
    %49 = vector.broadcast %cst_9 : f32 to vector<8x2048xf32>
    %50 = arith.maximumf %48, %49 : vector<8x2048xf32>
    %51 = vector.extract_strided_slice %50 {offsets = [0, 1], sizes = [8, 2047], strides = [1, 1]} : vector<8x2048xf32> to vector<8x2047xf32>
    %52 = vector.extract_strided_slice %50 {offsets = [0, 0], sizes = [8, 1], strides = [1, 1]} : vector<8x2048xf32> to vector<8x1xf32>
    %53 = tpu.concatenate %51, %52 in 1 : vector<8x2047xf32>, vector<8x1xf32> -> vector<8x2048xf32>
    %54 = arith.maximumf %50, %53 : vector<8x2048xf32>
    %55 = vector.extract_strided_slice %54 {offsets = [0, 16], sizes = [8, 2032], strides = [1, 1]} : vector<8x2048xf32> to vector<8x2032xf32>
    %56 = vector.extract_strided_slice %54 {offsets = [0, 0], sizes = [8, 16], strides = [1, 1]} : vector<8x2048xf32> to vector<8x16xf32>
    %57 = tpu.concatenate %55, %56 in 1 : vector<8x2032xf32>, vector<8x16xf32> -> vector<8x2048xf32>
    %58 = arith.maximumf %54, %57 : vector<8x2048xf32>
    %c0_10 = arith.constant 0 : index
    %c0_11 = arith.constant 0 : index
    %59 = vector.load %arg6[%c0_10, %c0_11] : memref<16x72xf32, #tpu.memory_space<vmem>>, vector<16x72xf32>
    %c0_12 = arith.constant 0 : index
    %c0_13 = arith.constant 0 : index
    %60 = vector.load %arg7[%c0_12, %c0_13] : memref<16x1xf32, #tpu.memory_space<vmem>>, vector<16x1xf32>
    %61 = vector.extract_strided_slice %58 {offsets = [0, 2014], sizes = [8, 34], strides = [1, 1]} : vector<8x2048xf32> to vector<8x34xf32>
    %62 = vector.extract_strided_slice %58 {offsets = [0, 0], sizes = [8, 2014], strides = [1, 1]} : vector<8x2048xf32> to vector<8x2014xf32>
    %63 = tpu.concatenate %61, %62 in 1 : vector<8x34xf32>, vector<8x2014xf32> -> vector<8x2048xf32>
    %64 = vector.extract_strided_slice %2 {offsets = [0, 0], sizes = [1, 2048], strides = [1, 1]} : vector<9x2048xf32> to vector<1x2048xf32>
    %65 = vector.broadcast %64 : vector<1x2048xf32> to vector<8x2048xf32>
    %66 = arith.mulf %63, %65 : vector<8x2048xf32>
    %67 = vector.extract_strided_slice %58 {offsets = [0, 2016], sizes = [8, 32], strides = [1, 1]} : vector<8x2048xf32> to vector<8x32xf32>
    %68 = vector.extract_strided_slice %58 {offsets = [0, 0], sizes = [8, 2016], strides = [1, 1]} : vector<8x2048xf32> to vector<8x2016xf32>
    %69 = tpu.concatenate %67, %68 in 1 : vector<8x32xf32>, vector<8x2016xf32> -> vector<8x2048xf32>
    %70 = vector.extract_strided_slice %2 {offsets = [1, 0], sizes = [1, 2048], strides = [1, 1]} : vector<9x2048xf32> to vector<1x2048xf32>
    %71 = vector.broadcast %70 : vector<1x2048xf32> to vector<8x2048xf32>
    %72 = arith.mulf %69, %71 : vector<8x2048xf32>
    %73 = vector.extract_strided_slice %58 {offsets = [0, 2018], sizes = [8, 30], strides = [1, 1]} : vector<8x2048xf32> to vector<8x30xf32>
    %74 = vector.extract_strided_slice %58 {offsets = [0, 0], sizes = [8, 2018], strides = [1, 1]} : vector<8x2048xf32> to vector<8x2018xf32>
    %75 = tpu.concatenate %73, %74 in 1 : vector<8x30xf32>, vector<8x2018xf32> -> vector<8x2048xf32>
    %76 = vector.extract_strided_slice %2 {offsets = [2, 0], sizes = [1, 2048], strides = [1, 1]} : vector<9x2048xf32> to vector<1x2048xf32>
    %77 = vector.broadcast %76 : vector<1x2048xf32> to vector<8x2048xf32>
    %78 = arith.mulf %75, %77 : vector<8x2048xf32>
    %79 = vector.extract_strided_slice %58 {offsets = [0, 2046], sizes = [8, 2], strides = [1, 1]} : vector<8x2048xf32> to vector<8x2xf32>
    %80 = vector.extract_strided_slice %58 {offsets = [0, 0], sizes = [8, 2046], strides = [1, 1]} : vector<8x2048xf32> to vector<8x2046xf32>
    %81 = tpu.concatenate %79, %80 in 1 : vector<8x2xf32>, vector<8x2046xf32> -> vector<8x2048xf32>
    %82 = vector.extract_strided_slice %2 {offsets = [3, 0], sizes = [1, 2048], strides = [1, 1]} : vector<9x2048xf32> to vector<1x2048xf32>
    %83 = vector.broadcast %82 : vector<1x2048xf32> to vector<8x2048xf32>
    %84 = arith.mulf %81, %83 : vector<8x2048xf32>
    %85 = vector.extract_strided_slice %58 {offsets = [0, 2], sizes = [8, 2046], strides = [1, 1]} : vector<8x2048xf32> to vector<8x2046xf32>
    %86 = vector.extract_strided_slice %58 {offsets = [0, 0], sizes = [8, 2], strides = [1, 1]} : vector<8x2048xf32> to vector<8x2xf32>
    %87 = tpu.concatenate %85, %86 in 1 : vector<8x2046xf32>, vector<8x2xf32> -> vector<8x2048xf32>
    %88 = vector.extract_strided_slice %2 {offsets = [5, 0], sizes = [1, 2048], strides = [1, 1]} : vector<9x2048xf32> to vector<1x2048xf32>
    %89 = vector.broadcast %88 : vector<1x2048xf32> to vector<8x2048xf32>
    %90 = arith.mulf %87, %89 : vector<8x2048xf32>
    %91 = vector.extract_strided_slice %58 {offsets = [0, 30], sizes = [8, 2018], strides = [1, 1]} : vector<8x2048xf32> to vector<8x2018xf32>
    %92 = vector.extract_strided_slice %58 {offsets = [0, 0], sizes = [8, 30], strides = [1, 1]} : vector<8x2048xf32> to vector<8x30xf32>
    %93 = tpu.concatenate %91, %92 in 1 : vector<8x2018xf32>, vector<8x30xf32> -> vector<8x2048xf32>
    %94 = vector.extract_strided_slice %2 {offsets = [6, 0], sizes = [1, 2048], strides = [1, 1]} : vector<9x2048xf32> to vector<1x2048xf32>
    %95 = vector.broadcast %94 : vector<1x2048xf32> to vector<8x2048xf32>
    %96 = arith.mulf %93, %95 : vector<8x2048xf32>
    %97 = vector.extract_strided_slice %58 {offsets = [0, 32], sizes = [8, 2016], strides = [1, 1]} : vector<8x2048xf32> to vector<8x2016xf32>
    %98 = vector.extract_strided_slice %58 {offsets = [0, 0], sizes = [8, 32], strides = [1, 1]} : vector<8x2048xf32> to vector<8x32xf32>
    %99 = tpu.concatenate %97, %98 in 1 : vector<8x2016xf32>, vector<8x32xf32> -> vector<8x2048xf32>
    %100 = vector.extract_strided_slice %2 {offsets = [7, 0], sizes = [1, 2048], strides = [1, 1]} : vector<9x2048xf32> to vector<1x2048xf32>
    %101 = vector.broadcast %100 : vector<1x2048xf32> to vector<8x2048xf32>
    %102 = arith.mulf %99, %101 : vector<8x2048xf32>
    %103 = vector.extract_strided_slice %58 {offsets = [0, 34], sizes = [8, 2014], strides = [1, 1]} : vector<8x2048xf32> to vector<8x2014xf32>
    %104 = vector.extract_strided_slice %58 {offsets = [0, 0], sizes = [8, 34], strides = [1, 1]} : vector<8x2048xf32> to vector<8x34xf32>
    %105 = tpu.concatenate %103, %104 in 1 : vector<8x2014xf32>, vector<8x34xf32> -> vector<8x2048xf32>
    %106 = vector.extract_strided_slice %2 {offsets = [8, 0], sizes = [1, 2048], strides = [1, 1]} : vector<9x2048xf32> to vector<1x2048xf32>
    %107 = vector.broadcast %106 : vector<1x2048xf32> to vector<8x2048xf32>
    %108 = arith.mulf %105, %107 : vector<8x2048xf32>
    %109 = tpu.concatenate %66, %72, %78, %84, %58, %90, %96, %102, %108 in 0 : vector<8x2048xf32>, vector<8x2048xf32>, vector<8x2048xf32>, vector<8x2048xf32>, vector<8x2048xf32>, vector<8x2048xf32>, vector<8x2048xf32>, vector<8x2048xf32>, vector<8x2048xf32> -> vector<72x2048xf32>
    %cst_14 = arith.constant dense<0.000000e+00> : vector<16x2048xf32>
    %110 = tpu.matmul %59, %109, %cst_14 {dimension_numbers = #tpu.dot_dimension_numbers<[1], [0], [0], [1], [0, 0, 1, 1], [], []>} : vector<16x72xf32>, vector<72x2048xf32>, vector<16x2048xf32> -> vector<16x2048xf32>
    %111 = vector.broadcast %60 : vector<16x1xf32> to vector<16x2048xf32>
    %112 = arith.addf %110, %111 : vector<16x2048xf32>
    %cst_15 = arith.constant 0.000000e+00 : f32
    %113 = vector.broadcast %cst_15 : f32 to vector<16x2048xf32>
    %114 = arith.maximumf %112, %113 : vector<16x2048xf32>
    %115 = vector.extract_strided_slice %114 {offsets = [0, 2], sizes = [16, 2046], strides = [1, 1]} : vector<16x2048xf32> to vector<16x2046xf32>
    %116 = vector.extract_strided_slice %114 {offsets = [0, 0], sizes = [16, 2], strides = [1, 1]} : vector<16x2048xf32> to vector<16x2xf32>
    %117 = tpu.concatenate %115, %116 in 1 : vector<16x2046xf32>, vector<16x2xf32> -> vector<16x2048xf32>
    %118 = arith.maximumf %114, %117 : vector<16x2048xf32>
    %119 = vector.extract_strided_slice %118 {offsets = [0, 32], sizes = [16, 2016], strides = [1, 1]} : vector<16x2048xf32> to vector<16x2016xf32>
    %120 = vector.extract_strided_slice %118 {offsets = [0, 0], sizes = [16, 32], strides = [1, 1]} : vector<16x2048xf32> to vector<16x32xf32>
    %121 = tpu.concatenate %119, %120 in 1 : vector<16x2016xf32>, vector<16x32xf32> -> vector<16x2048xf32>
    %122 = arith.maximumf %118, %121 : vector<16x2048xf32>
    %cst_16 = arith.constant 0.000000e+00 : f32
    %123 = vector.broadcast %cst_16 : f32 to vector<8x32xf32>
    %124 = vector.extract_strided_slice %122 {offsets = [0, 0], sizes = [1, 2048], strides = [1, 1]} : vector<16x2048xf32> to vector<1x2048xf32>
    %125 = vector.shape_cast %124 : vector<1x2048xf32> to vector<8x256xf32>
    %c0_17 = arith.constant 0 : index
    %c0_18 = arith.constant 0 : index
    %c0_19 = arith.constant 0 : index
    %126 = vector.load %arg8[%c0_17, %c0_18, %c0_19] : memref<16x256x32xf32, #tpu.memory_space<vmem>>, vector<1x256x32xf32>
    %127 = vector.shape_cast %126 : vector<1x256x32xf32> to vector<256x32xf32>
    %cst_20 = arith.constant dense<0.000000e+00> : vector<8x32xf32>
    %128 = tpu.matmul %125, %127, %cst_20 {dimension_numbers = #tpu.dot_dimension_numbers<[1], [0], [0], [1], [0, 0, 1, 1], [], []>} : vector<8x256xf32>, vector<256x32xf32>, vector<8x32xf32> -> vector<8x32xf32>
    %129 = arith.addf %123, %128 : vector<8x32xf32>
    %130 = vector.extract_strided_slice %122 {offsets = [1, 0], sizes = [1, 2048], strides = [1, 1]} : vector<16x2048xf32> to vector<1x2048xf32>
    %131 = vector.shape_cast %130 : vector<1x2048xf32> to vector<8x256xf32>
    %c1 = arith.constant 1 : index
    %c0_21 = arith.constant 0 : index
    %c0_22 = arith.constant 0 : index
    %132 = vector.load %arg8[%c1, %c0_21, %c0_22] : memref<16x256x32xf32, #tpu.memory_space<vmem>>, vector<1x256x32xf32>
    %133 = vector.shape_cast %132 : vector<1x256x32xf32> to vector<256x32xf32>
    %cst_23 = arith.constant dense<0.000000e+00> : vector<8x32xf32>
    %134 = tpu.matmul %131, %133, %cst_23 {dimension_numbers = #tpu.dot_dimension_numbers<[1], [0], [0], [1], [0, 0, 1, 1], [], []>} : vector<8x256xf32>, vector<256x32xf32>, vector<8x32xf32> -> vector<8x32xf32>
    %135 = arith.addf %129, %134 : vector<8x32xf32>
    %136 = vector.extract_strided_slice %122 {offsets = [2, 0], sizes = [1, 2048], strides = [1, 1]} : vector<16x2048xf32> to vector<1x2048xf32>
    %137 = vector.shape_cast %136 : vector<1x2048xf32> to vector<8x256xf32>
    %c2 = arith.constant 2 : index
    %c0_24 = arith.constant 0 : index
    %c0_25 = arith.constant 0 : index
    %138 = vector.load %arg8[%c2, %c0_24, %c0_25] : memref<16x256x32xf32, #tpu.memory_space<vmem>>, vector<1x256x32xf32>
    %139 = vector.shape_cast %138 : vector<1x256x32xf32> to vector<256x32xf32>
    %cst_26 = arith.constant dense<0.000000e+00> : vector<8x32xf32>
    %140 = tpu.matmul %137, %139, %cst_26 {dimension_numbers = #tpu.dot_dimension_numbers<[1], [0], [0], [1], [0, 0, 1, 1], [], []>} : vector<8x256xf32>, vector<256x32xf32>, vector<8x32xf32> -> vector<8x32xf32>
    %141 = arith.addf %135, %140 : vector<8x32xf32>
    %142 = vector.extract_strided_slice %122 {offsets = [3, 0], sizes = [1, 2048], strides = [1, 1]} : vector<16x2048xf32> to vector<1x2048xf32>
    %143 = vector.shape_cast %142 : vector<1x2048xf32> to vector<8x256xf32>
    %c3 = arith.constant 3 : index
    %c0_27 = arith.constant 0 : index
    %c0_28 = arith.constant 0 : index
    %144 = vector.load %arg8[%c3, %c0_27, %c0_28] : memref<16x256x32xf32, #tpu.memory_space<vmem>>, vector<1x256x32xf32>
    %145 = vector.shape_cast %144 : vector<1x256x32xf32> to vector<256x32xf32>
    %cst_29 = arith.constant dense<0.000000e+00> : vector<8x32xf32>
    %146 = tpu.matmul %143, %145, %cst_29 {dimension_numbers = #tpu.dot_dimension_numbers<[1], [0], [0], [1], [0, 0, 1, 1], [], []>} : vector<8x256xf32>, vector<256x32xf32>, vector<8x32xf32> -> vector<8x32xf32>
    %147 = arith.addf %141, %146 : vector<8x32xf32>
    %148 = vector.extract_strided_slice %122 {offsets = [4, 0], sizes = [1, 2048], strides = [1, 1]} : vector<16x2048xf32> to vector<1x2048xf32>
    %149 = vector.shape_cast %148 : vector<1x2048xf32> to vector<8x256xf32>
    %c4 = arith.constant 4 : index
    %c0_30 = arith.constant 0 : index
    %c0_31 = arith.constant 0 : index
    %150 = vector.load %arg8[%c4, %c0_30, %c0_31] : memref<16x256x32xf32, #tpu.memory_space<vmem>>, vector<1x256x32xf32>
    %151 = vector.shape_cast %150 : vector<1x256x32xf32> to vector<256x32xf32>
    %cst_32 = arith.constant dense<0.000000e+00> : vector<8x32xf32>
    %152 = tpu.matmul %149, %151, %cst_32 {dimension_numbers = #tpu.dot_dimension_numbers<[1], [0], [0], [1], [0, 0, 1, 1], [], []>} : vector<8x256xf32>, vector<256x32xf32>, vector<8x32xf32> -> vector<8x32xf32>
    %153 = arith.addf %147, %152 : vector<8x32xf32>
    %154 = vector.extract_strided_slice %122 {offsets = [5, 0], sizes = [1, 2048], strides = [1, 1]} : vector<16x2048xf32> to vector<1x2048xf32>
    %155 = vector.shape_cast %154 : vector<1x2048xf32> to vector<8x256xf32>
    %c5 = arith.constant 5 : index
    %c0_33 = arith.constant 0 : index
    %c0_34 = arith.constant 0 : index
    %156 = vector.load %arg8[%c5, %c0_33, %c0_34] : memref<16x256x32xf32, #tpu.memory_space<vmem>>, vector<1x256x32xf32>
    %157 = vector.shape_cast %156 : vector<1x256x32xf32> to vector<256x32xf32>
    %cst_35 = arith.constant dense<0.000000e+00> : vector<8x32xf32>
    %158 = tpu.matmul %155, %157, %cst_35 {dimension_numbers = #tpu.dot_dimension_numbers<[1], [0], [0], [1], [0, 0, 1, 1], [], []>} : vector<8x256xf32>, vector<256x32xf32>, vector<8x32xf32> -> vector<8x32xf32>
    %159 = arith.addf %153, %158 : vector<8x32xf32>
    %160 = vector.extract_strided_slice %122 {offsets = [6, 0], sizes = [1, 2048], strides = [1, 1]} : vector<16x2048xf32> to vector<1x2048xf32>
    %161 = vector.shape_cast %160 : vector<1x2048xf32> to vector<8x256xf32>
    %c6 = arith.constant 6 : index
    %c0_36 = arith.constant 0 : index
    %c0_37 = arith.constant 0 : index
    %162 = vector.load %arg8[%c6, %c0_36, %c0_37] : memref<16x256x32xf32, #tpu.memory_space<vmem>>, vector<1x256x32xf32>
    %163 = vector.shape_cast %162 : vector<1x256x32xf32> to vector<256x32xf32>
    %cst_38 = arith.constant dense<0.000000e+00> : vector<8x32xf32>
    %164 = tpu.matmul %161, %163, %cst_38 {dimension_numbers = #tpu.dot_dimension_numbers<[1], [0], [0], [1], [0, 0, 1, 1], [], []>} : vector<8x256xf32>, vector<256x32xf32>, vector<8x32xf32> -> vector<8x32xf32>
    %165 = arith.addf %159, %164 : vector<8x32xf32>
    %166 = vector.extract_strided_slice %122 {offsets = [7, 0], sizes = [1, 2048], strides = [1, 1]} : vector<16x2048xf32> to vector<1x2048xf32>
    %167 = vector.shape_cast %166 : vector<1x2048xf32> to vector<8x256xf32>
    %c7 = arith.constant 7 : index
    %c0_39 = arith.constant 0 : index
    %c0_40 = arith.constant 0 : index
    %168 = vector.load %arg8[%c7, %c0_39, %c0_40] : memref<16x256x32xf32, #tpu.memory_space<vmem>>, vector<1x256x32xf32>
    %169 = vector.shape_cast %168 : vector<1x256x32xf32> to vector<256x32xf32>
    %cst_41 = arith.constant dense<0.000000e+00> : vector<8x32xf32>
    %170 = tpu.matmul %167, %169, %cst_41 {dimension_numbers = #tpu.dot_dimension_numbers<[1], [0], [0], [1], [0, 0, 1, 1], [], []>} : vector<8x256xf32>, vector<256x32xf32>, vector<8x32xf32> -> vector<8x32xf32>
    %171 = arith.addf %165, %170 : vector<8x32xf32>
    %172 = vector.extract_strided_slice %122 {offsets = [8, 0], sizes = [1, 2048], strides = [1, 1]} : vector<16x2048xf32> to vector<1x2048xf32>
    %173 = vector.shape_cast %172 : vector<1x2048xf32> to vector<8x256xf32>
    %c8 = arith.constant 8 : index
    %c0_42 = arith.constant 0 : index
    %c0_43 = arith.constant 0 : index
    %174 = vector.load %arg8[%c8, %c0_42, %c0_43] : memref<16x256x32xf32, #tpu.memory_space<vmem>>, vector<1x256x32xf32>
    %175 = vector.shape_cast %174 : vector<1x256x32xf32> to vector<256x32xf32>
    %cst_44 = arith.constant dense<0.000000e+00> : vector<8x32xf32>
    %176 = tpu.matmul %173, %175, %cst_44 {dimension_numbers = #tpu.dot_dimension_numbers<[1], [0], [0], [1], [0, 0, 1, 1], [], []>} : vector<8x256xf32>, vector<256x32xf32>, vector<8x32xf32> -> vector<8x32xf32>
    %177 = arith.addf %171, %176 : vector<8x32xf32>
    %178 = vector.extract_strided_slice %122 {offsets = [9, 0], sizes = [1, 2048], strides = [1, 1]} : vector<16x2048xf32> to vector<1x2048xf32>
    %179 = vector.shape_cast %178 : vector<1x2048xf32> to vector<8x256xf32>
    %c9 = arith.constant 9 : index
    %c0_45 = arith.constant 0 : index
    %c0_46 = arith.constant 0 : index
    %180 = vector.load %arg8[%c9, %c0_45, %c0_46] : memref<16x256x32xf32, #tpu.memory_space<vmem>>, vector<1x256x32xf32>
    %181 = vector.shape_cast %180 : vector<1x256x32xf32> to vector<256x32xf32>
    %cst_47 = arith.constant dense<0.000000e+00> : vector<8x32xf32>
    %182 = tpu.matmul %179, %181, %cst_47 {dimension_numbers = #tpu.dot_dimension_numbers<[1], [0], [0], [1], [0, 0, 1, 1], [], []>} : vector<8x256xf32>, vector<256x32xf32>, vector<8x32xf32> -> vector<8x32xf32>
    %183 = arith.addf %177, %182 : vector<8x32xf32>
    %184 = vector.extract_strided_slice %122 {offsets = [10, 0], sizes = [1, 2048], strides = [1, 1]} : vector<16x2048xf32> to vector<1x2048xf32>
    %185 = vector.shape_cast %184 : vector<1x2048xf32> to vector<8x256xf32>
    %c10 = arith.constant 10 : index
    %c0_48 = arith.constant 0 : index
    %c0_49 = arith.constant 0 : index
    %186 = vector.load %arg8[%c10, %c0_48, %c0_49] : memref<16x256x32xf32, #tpu.memory_space<vmem>>, vector<1x256x32xf32>
    %187 = vector.shape_cast %186 : vector<1x256x32xf32> to vector<256x32xf32>
    %cst_50 = arith.constant dense<0.000000e+00> : vector<8x32xf32>
    %188 = tpu.matmul %185, %187, %cst_50 {dimension_numbers = #tpu.dot_dimension_numbers<[1], [0], [0], [1], [0, 0, 1, 1], [], []>} : vector<8x256xf32>, vector<256x32xf32>, vector<8x32xf32> -> vector<8x32xf32>
    %189 = arith.addf %183, %188 : vector<8x32xf32>
    %190 = vector.extract_strided_slice %122 {offsets = [11, 0], sizes = [1, 2048], strides = [1, 1]} : vector<16x2048xf32> to vector<1x2048xf32>
    %191 = vector.shape_cast %190 : vector<1x2048xf32> to vector<8x256xf32>
    %c11 = arith.constant 11 : index
    %c0_51 = arith.constant 0 : index
    %c0_52 = arith.constant 0 : index
    %192 = vector.load %arg8[%c11, %c0_51, %c0_52] : memref<16x256x32xf32, #tpu.memory_space<vmem>>, vector<1x256x32xf32>
    %193 = vector.shape_cast %192 : vector<1x256x32xf32> to vector<256x32xf32>
    %cst_53 = arith.constant dense<0.000000e+00> : vector<8x32xf32>
    %194 = tpu.matmul %191, %193, %cst_53 {dimension_numbers = #tpu.dot_dimension_numbers<[1], [0], [0], [1], [0, 0, 1, 1], [], []>} : vector<8x256xf32>, vector<256x32xf32>, vector<8x32xf32> -> vector<8x32xf32>
    %195 = arith.addf %189, %194 : vector<8x32xf32>
    %196 = vector.extract_strided_slice %122 {offsets = [12, 0], sizes = [1, 2048], strides = [1, 1]} : vector<16x2048xf32> to vector<1x2048xf32>
    %197 = vector.shape_cast %196 : vector<1x2048xf32> to vector<8x256xf32>
    %c12 = arith.constant 12 : index
    %c0_54 = arith.constant 0 : index
    %c0_55 = arith.constant 0 : index
    %198 = vector.load %arg8[%c12, %c0_54, %c0_55] : memref<16x256x32xf32, #tpu.memory_space<vmem>>, vector<1x256x32xf32>
    %199 = vector.shape_cast %198 : vector<1x256x32xf32> to vector<256x32xf32>
    %cst_56 = arith.constant dense<0.000000e+00> : vector<8x32xf32>
    %200 = tpu.matmul %197, %199, %cst_56 {dimension_numbers = #tpu.dot_dimension_numbers<[1], [0], [0], [1], [0, 0, 1, 1], [], []>} : vector<8x256xf32>, vector<256x32xf32>, vector<8x32xf32> -> vector<8x32xf32>
    %201 = arith.addf %195, %200 : vector<8x32xf32>
    %202 = vector.extract_strided_slice %122 {offsets = [13, 0], sizes = [1, 2048], strides = [1, 1]} : vector<16x2048xf32> to vector<1x2048xf32>
    %203 = vector.shape_cast %202 : vector<1x2048xf32> to vector<8x256xf32>
    %c13 = arith.constant 13 : index
    %c0_57 = arith.constant 0 : index
    %c0_58 = arith.constant 0 : index
    %204 = vector.load %arg8[%c13, %c0_57, %c0_58] : memref<16x256x32xf32, #tpu.memory_space<vmem>>, vector<1x256x32xf32>
    %205 = vector.shape_cast %204 : vector<1x256x32xf32> to vector<256x32xf32>
    %cst_59 = arith.constant dense<0.000000e+00> : vector<8x32xf32>
    %206 = tpu.matmul %203, %205, %cst_59 {dimension_numbers = #tpu.dot_dimension_numbers<[1], [0], [0], [1], [0, 0, 1, 1], [], []>} : vector<8x256xf32>, vector<256x32xf32>, vector<8x32xf32> -> vector<8x32xf32>
    %207 = arith.addf %201, %206 : vector<8x32xf32>
    %208 = vector.extract_strided_slice %122 {offsets = [14, 0], sizes = [1, 2048], strides = [1, 1]} : vector<16x2048xf32> to vector<1x2048xf32>
    %209 = vector.shape_cast %208 : vector<1x2048xf32> to vector<8x256xf32>
    %c14 = arith.constant 14 : index
    %c0_60 = arith.constant 0 : index
    %c0_61 = arith.constant 0 : index
    %210 = vector.load %arg8[%c14, %c0_60, %c0_61] : memref<16x256x32xf32, #tpu.memory_space<vmem>>, vector<1x256x32xf32>
    %211 = vector.shape_cast %210 : vector<1x256x32xf32> to vector<256x32xf32>
    %cst_62 = arith.constant dense<0.000000e+00> : vector<8x32xf32>
    %212 = tpu.matmul %209, %211, %cst_62 {dimension_numbers = #tpu.dot_dimension_numbers<[1], [0], [0], [1], [0, 0, 1, 1], [], []>} : vector<8x256xf32>, vector<256x32xf32>, vector<8x32xf32> -> vector<8x32xf32>
    %213 = arith.addf %207, %212 : vector<8x32xf32>
    %214 = vector.extract_strided_slice %122 {offsets = [15, 0], sizes = [1, 2048], strides = [1, 1]} : vector<16x2048xf32> to vector<1x2048xf32>
    %215 = vector.shape_cast %214 : vector<1x2048xf32> to vector<8x256xf32>
    %c15 = arith.constant 15 : index
    %c0_63 = arith.constant 0 : index
    %c0_64 = arith.constant 0 : index
    %216 = vector.load %arg8[%c15, %c0_63, %c0_64] : memref<16x256x32xf32, #tpu.memory_space<vmem>>, vector<1x256x32xf32>
    %217 = vector.shape_cast %216 : vector<1x256x32xf32> to vector<256x32xf32>
    %cst_65 = arith.constant dense<0.000000e+00> : vector<8x32xf32>
    %218 = tpu.matmul %215, %217, %cst_65 {dimension_numbers = #tpu.dot_dimension_numbers<[1], [0], [0], [1], [0, 0, 1, 1], [], []>} : vector<8x256xf32>, vector<256x32xf32>, vector<8x32xf32> -> vector<8x32xf32>
    %219 = arith.addf %213, %218 : vector<8x32xf32>
    %c0_66 = arith.constant 0 : index
    %c0_67 = arith.constant 0 : index
    %220 = vector.load %arg9[%c0_66, %c0_67] : memref<1x32xf32, #tpu.memory_space<vmem>>, vector<1x32xf32>
    %221 = vector.broadcast %220 : vector<1x32xf32> to vector<8x32xf32>
    %222 = arith.addf %219, %221 : vector<8x32xf32>
    %cst_68 = arith.constant 0.000000e+00 : f32
    %223 = vector.broadcast %cst_68 : f32 to vector<8x32xf32>
    %224 = arith.maximumf %222, %223 : vector<8x32xf32>
    %c0_69 = arith.constant 0 : index
    %c0_70 = arith.constant 0 : index
    %225 = vector.load %arg10[%c0_69, %c0_70] : memref<32x128xf32, #tpu.memory_space<vmem>>, vector<32x128xf32>
    %cst_71 = arith.constant dense<0.000000e+00> : vector<8x128xf32>
    %226 = tpu.matmul %224, %225, %cst_71 {dimension_numbers = #tpu.dot_dimension_numbers<[1], [0], [0], [1], [0, 0, 1, 1], [], []>} : vector<8x32xf32>, vector<32x128xf32>, vector<8x128xf32> -> vector<8x128xf32>
    %c0_72 = arith.constant 0 : index
    %c0_73 = arith.constant 0 : index
    %227 = vector.load %arg11[%c0_72, %c0_73] : memref<1x128xf32, #tpu.memory_space<vmem>>, vector<1x128xf32>
    %228 = vector.broadcast %227 : vector<1x128xf32> to vector<8x128xf32>
    %229 = arith.addf %226, %228 : vector<8x128xf32>
    %c0_74 = arith.constant 0 : index
    %c0_75 = arith.constant 0 : index
    %230 = vector.load %arg12[%c0_74, %c0_75] : memref<8x128xf32, #tpu.memory_space<vmem>>, vector<8x128xf32>
    tpu.vector_store %arg12[%c0_74, %c0_75], %229 {strides = array<i32>} : memref<8x128xf32, #tpu.memory_space<vmem>>, vector<8x128xf32>,
    return
  }
  func.func @transform_0(%arg0: i32) -> (i32, i32) {
    %c0_i32 = arith.constant 0 : i32
    %c0_i32_0 = arith.constant 0 : i32
    return %c0_i32, %arg0 : i32, i32
  }
  func.func @transform_1(%arg0: i32) -> (i32, i32) {
    %c0_i32 = arith.constant 0 : i32
    %c0_i32_0 = arith.constant 0 : i32
    %c0_i32_1 = arith.constant 0 : i32
    return %c0_i32, %c0_i32_0 : i32, i32
  }
  func.func @transform_2(%arg0: i32) -> (i32, i32) {
    %c0_i32 = arith.constant 0 : i32
    %c0_i32_0 = arith.constant 0 : i32
    %c0_i32_1 = arith.constant 0 : i32
    return %c0_i32, %c0_i32_0 : i32, i32
  }
  func.func @transform_3(%arg0: i32) -> (i32, i32) {
    %c0_i32 = arith.constant 0 : i32
    %c0_i32_0 = arith.constant 0 : i32
    %c0_i32_1 = arith.constant 0 : i32
    return %c0_i32, %c0_i32_0 : i32, i32
  }
  func.func @transform_4(%arg0: i32) -> (i32, i32) {
    %c0_i32 = arith.constant 0 : i32
    %c0_i32_0 = arith.constant 0 : i32
    %c0_i32_1 = arith.constant 0 : i32
    return %c0_i32, %c0_i32_0 : i32, i32
  }
  func.func @transform_5(%arg0: i32) -> (i32, i32) {
    %c0_i32 = arith.constant 0 : i32
    %c0_i32_0 = arith.constant 0 : i32
    %c0_i32_1 = arith.constant 0 : i32
    return %c0_i32, %c0_i32_0 : i32, i32
  }
  func.func @transform_6(%arg0: i32) -> (i32, i32) {
    %c0_i32 = arith.constant 0 : i32
    %c0_i32_0 = arith.constant 0 : i32
    %c0_i32_1 = arith.constant 0 : i32
    return %c0_i32, %c0_i32_0 : i32, i32
  }
  func.func @transform_7(%arg0: i32) -> (i32, i32, i32) {
    %c0_i32 = arith.constant 0 : i32
    %c0_i32_0 = arith.constant 0 : i32
    %c0_i32_1 = arith.constant 0 : i32
    %c0_i32_2 = arith.constant 0 : i32
    return %c0_i32, %c0_i32_0, %c0_i32_1 : i32, i32, i32
  }
  func.func @transform_8(%arg0: i32) -> (i32, i32) {
    %c0_i32 = arith.constant 0 : i32
    %c0_i32_0 = arith.constant 0 : i32
    %c0_i32_1 = arith.constant 0 : i32
    return %c0_i32, %c0_i32_0 : i32, i32
  }
  func.func @transform_9(%arg0: i32) -> (i32, i32) {
    %c0_i32 = arith.constant 0 : i32
    %c0_i32_0 = arith.constant 0 : i32
    %c0_i32_1 = arith.constant 0 : i32
    return %c0_i32, %c0_i32_0 : i32, i32
  }
  func.func @transform_10(%arg0: i32) -> (i32, i32) {
    %c0_i32 = arith.constant 0 : i32
    %c0_i32_0 = arith.constant 0 : i32
    %c0_i32_1 = arith.constant 0 : i32
    return %c0_i32, %c0_i32_0 : i32, i32
  }
  func.func @transform_11(%arg0: i32) -> (i32, i32) {
    %c0_i32 = arith.constant 0 : i32
    %c0_i32_0 = arith.constant 0 : i32
    return %arg0, %c0_i32 : i32, i32
  }
}

</mosaic_0001>

<llo_original>
// kernel: sketch_cnn_forward.1
$region0: #{sketch_cnn_forward.1}
  #allocation0 [shape = 'u32[]', space=smem, size = 0x4, offset = 0x4, fixed_abs, tag = 'smem constant byte address 0x4 - core index']
  #allocation1 [shape = 'u32[72,128]{1,0:T(1,128)}', space=vmem, size = 0x9000, scoped, tag = 'internal scratch']
  %s0 = inlined_call_operand.vmem [shape: f32[1,4096], index: 0, kind: input, shape index: {}]
  %s1 = inlined_call_operand.vmem [shape: f32[9,2048], index: 1, kind: input, shape index: {}]
  %s2 = inlined_call_operand.vmem [shape: f32[9,2048], index: 2, kind: input, shape index: {}]
  %s3 = inlined_call_operand.vmem [shape: f32[8,9], index: 3, kind: input, shape index: {}]
  %s4 = inlined_call_operand.vmem [shape: f32[8,1], index: 4, kind: input, shape index: {}]
  %s5 = inlined_call_operand.vmem [shape: f32[16,72], index: 5, kind: input, shape index: {}]
  %s6 = inlined_call_operand.vmem [shape: f32[16,1], index: 6, kind: input, shape index: {}]
  %s7 = inlined_call_operand.vmem [shape: f32[16,256,32], index: 7, kind: input, shape index: {}]
  %s8 = inlined_call_operand.vmem [shape: f32[1,32], index: 8, kind: input, shape index: {}]
  %s9 = inlined_call_operand.vmem [shape: f32[32,128], index: 9, kind: input, shape index: {}]
  %s10 = inlined_call_operand.vmem [shape: f32[1,128], index: 10, kind: input, shape index: {}]
  %s11 = inlined_call_operand.hbm [shape: f32[16,128], index: 11, kind: output, shape index: {}]
  %s12 = sld [smem:[#allocation0]]
  $region77: #{sketch_cnn_forward.1} parent=0
    _
  %s14 = ssub.s32 1, %s12
  %s15 = scalar_select 0, %s14, %s12
  $region1: #{sketch_cnn_forward.1} parent=0
    #allocation2 [shape = 'u8[8192]{0}', space=vmem, size = 0x2000, scoped, tag = 'output window, operand 0']
    #allocation3 [shape = 's32[2]{0}', space=sflag, size = 0x8, scoped, tag = 'scoped memory for sketch_cnn_forward.1']
    %16 = vsyncpa [#allocation3], 0
    %s17 = scalar_lea.sflag [#allocation3], 1
    %18 = vsyncpa %s17, 0
    loop: start=0, step=1, limit=4
    $region2: #{sketch_cnn_forward.1} parent=1 // loop_pre_header
      _
    $region3: #{sketch_cnn_forward.1} parent=1 // loop_header
      %s20 = sphi 0, %s24
      %p21 = scmp.ge.s32.totalorder %s20, 4
      %s30 = sphi 0, %s32
      %s33 = sphi 0, %s30
      %s34 = sphi 0, %s33
      %s50 = sphi 0, %s34
      %s54 = sphi 0, %s54
      %s56 = sphi 0, %s54
      %s57 = sphi 0, %s56
      %s71 = sphi 0, %s57
      %s75 = sphi 0, %s75
      %s77 = sphi 0, %s75
      %s78 = sphi 0, %s77
      %s92 = sphi 0, %s78
      %s96 = sphi 0, %s96
      %s98 = sphi 0, %s96
      %s99 = sphi 0, %s98
      %s113 = sphi 0, %s99
      %s117 = sphi 0, %s117
      %s119 = sphi 0, %s117
      %s120 = sphi 0, %s119
      %s134 = sphi 0, %s120
      %s138 = sphi 0, %s138
      %s140 = sphi 0, %s138
      %s141 = sphi 0, %s140
      %s155 = sphi 0, %s141
      %s159 = sphi 0, %s159
      %s161 = sphi 0, %s159
      %s162 = sphi 0, %s161
      %s176 = sphi 0, %s162
      %s180 = sphi 0, %s180
      %s182 = sphi 0, %s180
      %s183 = sphi 0, %s182
      %s197 = sphi 0, %s183
      %s201 = sphi 0, %s201
      %s203 = sphi 0, %s201
      %s204 = sphi 0, %s203
      %s218 = sphi 0, %s204
      %s222 = sphi 0, %s222
      %s224 = sphi 0, %s222
      %s225 = sphi 0, %s224
      %s239 = sphi 0, %s225
      %s243 = sphi 0, %s243
      %s245 = sphi 0, %s243
      %s246 = sphi 0, %s245
      %s260 = sphi 0, %s246
      %s266 = sphi 0, %s268
      %s269 = sphi 0, %s266
      %s270 = sphi 0, %s269
      %s286 = sphi 0, %s270
    $region4: #{sketch_cnn_forward.1} parent=1 // loop_header_branch
      %23 = sbr.rel (%p21) target = $region8
    $region5: #{sketch_cnn_forward.1} parent=1 // loop_body
      %s25 = ssub.s32 %s20, 1
      %s26 = ssub.s32 %s20, 2
      %s27 = sadd.s32 %s20, 1
      %s28 = ssub.s32 %s20, %s27
      %p29 = scmp.eq.s32.totalorder %s28, 0
      %s31 = sadd.s32 %s30, 1
      %s32 = scalar_select %p29, %s30, %s31
      %p35 = pneg %p29
      %p36 = scmp.eq.s32.totalorder %s20, 1
      %p37 = por %p35, %p36
      %p38 = scmp.ne.s32.totalorder %s30, %s33
      %p39 = scmp.eq.s32.totalorder %s20, 0
      %p40 = por %p38, %p39
      %p41 = scmp.ne.s32.totalorder %s30, %s33
      %p42 = scmp.eq.s32.totalorder %s25, 1
      %p43 = por %p41, %p42
      %p44 = scmp.ne.s32.totalorder %s33, %s34
      %p45 = scmp.eq.s32.totalorder %s25, 0
      %p46 = por %p44, %p45
      %p47 = scmp.ne.s32.totalorder %s33, %s34
      %p48 = scmp.eq.s32.totalorder %s26, 1
      %p49 = por %p47, %p48
      %p51 = scmp.ne.s32.totalorder %s34, %s50
      %p52 = scmp.eq.s32.totalorder %s26, 0
      %p53 = por %p51, %p52
      %s55 = sadd.s32 %s54, 1
      %p58 = scmp.eq.s32.totalorder %s20, 1
      %p59 = scmp.ne.s32.totalorder %s54, %s56
      %p60 = scmp.eq.s32.totalorder %s20, 0
      %p61 = por %p59, %p60
      %p62 = scmp.ne.s32.totalorder %s54, %s56
      %p63 = scmp.eq.s32.totalorder %s25, 1
      %p64 = por %p62, %p63
      %p65 = scmp.ne.s32.totalorder %s56, %s57
      %p66 = scmp.eq.s32.totalorder %s25, 0
      %p67 = por %p65, %p66
      %p68 = scmp.ne.s32.totalorder %s56, %s57
      %p69 = scmp.eq.s32.totalorder %s26, 1
      %p70 = por %p68, %p69
      %p72 = scmp.ne.s32.totalorder %s57, %s71
      %p73 = scmp.eq.s32.totalorder %s26, 0
      %p74 = por %p72, %p73
      %s76 = sadd.s32 %s75, 1
      %p79 = scmp.eq.s32.totalorder %s20, 1
      %p80 = scmp.ne.s32.totalorder %s75, %s77
      %p81 = scmp.eq.s32.totalorder %s20, 0
      %p82 = por %p80, %p81
      %p83 = scmp.ne.s32.totalorder %s75, %s77
      %p84 = scmp.eq.s32.totalorder %s25, 1
      %p85 = por %p83, %p84
      %p86 = scmp.ne.s32.totalorder %s77, %s78
      %p87 = scmp.eq.s32.totalorder %s25, 0
      %p88 = por %p86, %p87
      %p89 = scmp.ne.s32.totalorder %s77, %s78
      %p90 = scmp.eq.s32.totalorder %s26, 1
      %p91 = por %p89, %p90
      %p93 = scmp.ne.s32.totalorder %s78, %s92
      %p94 = scmp.eq.s32.totalorder %s26, 0
      %p95 = por %p93, %p94
      %s97 = sadd.s32 %s96, 1
      %p100 = scmp.eq.s32.totalorder %s20, 1
      %p101 = scmp.ne.s32.totalorder %s96, %s98
      %p102 = scmp.eq.s32.totalorder %s20, 0
      %p103 = por %p101, %p102
      %p104 = scmp.ne.s32.totalorder %s96, %s98
      %p105 = scmp.eq.s32.totalorder %s25, 1
      %p106 = por %p104, %p105
      %p107 = scmp.ne.s32.totalorder %s98, %s99
      %p108 = scmp.eq.s32.totalorder %s25, 0
      %p109 = por %p107, %p108
      %p110 = scmp.ne.s32.totalorder %s98, %s99
      %p111 = scmp.eq.s32.totalorder %s26, 1
      %p112 = por %p110, %p111
      %p114 = scmp.ne.s32.totalorder %s99, %s113
      %p115 = scmp.eq.s32.totalorder %s26, 0
      %p116 = por %p114, %p115
      %s118 = sadd.s32 %s117, 1
      %p121 = scmp.eq.s32.totalorder %s20, 1
      %p122 = scmp.ne.s32.totalorder %s117, %s119
      %p123 = scmp.eq.s32.totalorder %s20, 0
      %p124 = por %p122, %p123
      %p125 = scmp.ne.s32.totalorder %s117, %s119
      %p126 = scmp.eq.s32.totalorder %s25, 1
      %p127 = por %p125, %p126
      %p128 = scmp.ne.s32.totalorder %s119, %s120
      %p129 = scmp.eq.s32.totalorder %s25, 0
      %p130 = por %p128, %p129
      %p131 = scmp.ne.s32.totalorder %s119, %s120
      %p132 = scmp.eq.s32.totalorder %s26, 1
      %p133 = por %p131, %p132
      %p135 = scmp.ne.s32.totalorder %s120, %s134
      %p136 = scmp.eq.s32.totalorder %s26, 0
      %p137 = por %p135, %p136
      %s139 = sadd.s32 %s138, 1
      %p142 = scmp.eq.s32.totalorder %s20, 1
      %p143 = scmp.ne.s32.totalorder %s138, %s140
      %p144 = scmp.eq.s32.totalorder %s20, 0
      %p145 = por %p143, %p144
      %p146 = scmp.ne.s32.totalorder %s138, %s140
      %p147 = scmp.eq.s32.totalorder %s25, 1
      %p148 = por %p146, %p147
      %p149 = scmp.ne.s32.totalorder %s140, %s141
      %p150 = scmp.eq.s32.totalorder %s25, 0
      %p151 = por %p149, %p150
      %p152 = scmp.ne.s32.totalorder %s140, %s141
      %p153 = scmp.eq.s32.totalorder %s26, 1
      %p154 = por %p152, %p153
      %p156 = scmp.ne.s32.totalorder %s141, %s155
      %p157 = scmp.eq.s32.totalorder %s26, 0
      %p158 = por %p156, %p157
      %s160 = sadd.s32 %s159, 1
      %p163 = scmp.eq.s32.totalorder %s20, 1
      %p164 = scmp.ne.s32.totalorder %s159, %s161
      %p165 = scmp.eq.s32.totalorder %s20, 0
      %p166 = por %p164, %p165
      %p167 = scmp.ne.s32.totalorder %s159, %s161
      %p168 = scmp.eq.s32.totalorder %s25, 1
      %p169 = por %p167, %p168
      %p170 = scmp.ne.s32.totalorder %s161, %s162
      %p171 = scmp.eq.s32.totalorder %s25, 0
      %p172 = por %p170, %p171
      %p173 = scmp.ne.s32.totalorder %s161, %s162
      %p174 = scmp.eq.s32.totalorder %s26, 1
      %p175 = por %p173, %p174
      %p177 = scmp.ne.s32.totalorder %s162, %s176
      %p178 = scmp.eq.s32.totalorder %s26, 0
      %p179 = por %p177, %p178
      %s181 = sadd.s32 %s180, 1
      %p184 = scmp.eq.s32.totalorder %s20, 1
      %p185 = scmp.ne.s32.totalorder %s180, %s182
      %p186 = scmp.eq.s32.totalorder %s20, 0
      %p187 = por %p185, %p186
      %p188 = scmp.ne.s32.totalorder %s180, %s182
      %p189 = scmp.eq.s32.totalorder %s25, 1
      %p190 = por %p188, %p189
      %p191 = scmp.ne.s32.totalorder %s182, %s183
      %p192 = scmp.eq.s32.totalorder %s25, 0
      %p193 = por %p191, %p192
      %p194 = scmp.ne.s32.totalorder %s182, %s183
      %p195 = scmp.eq.s32.totalorder %s26, 1
      %p196 = por %p194, %p195
      %p198 = scmp.ne.s32.totalorder %s183, %s197
      %p199 = scmp.eq.s32.totalorder %s26, 0
      %p200 = por %p198, %p199
      %s202 = sadd.s32 %s201, 1
      %p205 = scmp.eq.s32.totalorder %s20, 1
      %p206 = scmp.ne.s32.totalorder %s201, %s203
      %p207 = scmp.eq.s32.totalorder %s20, 0
      %p208 = por %p206, %p207
      %p209 = scmp.ne.s32.totalorder %s201, %s203
      %p210 = scmp.eq.s32.totalorder %s25, 1
      %p211 = por %p209, %p210
      %p212 = scmp.ne.s32.totalorder %s203, %s204
      %p213 = scmp.eq.s32.totalorder %s25, 0
      %p214 = por %p212, %p213
      %p215 = scmp.ne.s32.totalorder %s203, %s204
      %p216 = scmp.eq.s32.totalorder %s26, 1
      %p217 = por %p215, %p216
      %p219 = scmp.ne.s32.totalorder %s204, %s218
      %p220 = scmp.eq.s32.totalorder %s26, 0
      %p221 = por %p219, %p220
      %s223 = sadd.s32 %s222, 1
      %p226 = scmp.eq.s32.totalorder %s20, 1
      %p227 = scmp.ne.s32.totalorder %s222, %s224
      %p228 = scmp.eq.s32.totalorder %s20, 0
      %p229 = por %p227, %p228
      %p230 = scmp.ne.s32.totalorder %s222, %s224
      %p231 = scmp.eq.s32.totalorder %s25, 1
      %p232 = por %p230, %p231
      %p233 = scmp.ne.s32.totalorder %s224, %s225
      %p234 = scmp.eq.s32.totalorder %s25, 0
      %p235 = por %p233, %p234
      %p236 = scmp.ne.s32.totalorder %s224, %s225
      %p237 = scmp.eq.s32.totalorder %s26, 1
      %p238 = por %p236, %p237
      %p240 = scmp.ne.s32.totalorder %s225, %s239
      %p241 = scmp.eq.s32.totalorder %s26, 0
      %p242 = por %p240, %p241
      %s244 = sadd.s32 %s243, 1
      %p247 = scmp.eq.s32.totalorder %s20, 1
      %p248 = scmp.ne.s32.totalorder %s243, %s245
      %p249 = scmp.eq.s32.totalorder %s20, 0
      %p250 = por %p248, %p249
      %p251 = scmp.ne.s32.totalorder %s243, %s245
      %p252 = scmp.eq.s32.totalorder %s25, 1
      %p253 = por %p251, %p252
      %p254 = scmp.ne.s32.totalorder %s245, %s246
      %p255 = scmp.eq.s32.totalorder %s25, 0
      %p256 = por %p254, %p255
      %p257 = scmp.ne.s32.totalorder %s245, %s246
      %p258 = scmp.eq.s32.totalorder %s26, 1
      %p259 = por %p257, %p258
      %p261 = scmp.ne.s32.totalorder %s246, %s260
      %p262 = scmp.eq.s32.totalorder %s26, 0
      %p263 = por %p261, %p262
      %s264 = ssub.s32 %s20, %s27
      %p265 = scmp.eq.s32.totalorder %s264, 0
      %s267 = sadd.s32 %s266, 1
      %s268 = scalar_select %p265, %s266, %s267
      %p271 = pneg %p265
      %p272 = scmp.eq.s32.totalorder %s20, 1
      %p273 = por %p271, %p272
      %p274 = scmp.ne.s32.totalorder %s266, %s269
      %p275 = scmp.eq.s32.totalorder %s20, 0
      %p276 = por %p274, %p275
      %p277 = scmp.ne.s32.totalorder %s266, %s269
      %p278 = scmp.eq.s32.totalorder %s25, 1
      %p279 = por %p277, %p278
      %p280 = scmp.ne.s32.totalorder %s269, %s270
      %p281 = scmp.eq.s32.totalorder %s25, 0
      %p282 = por %p280, %p281
      %p283 = scmp.ne.s32.totalorder %s269, %s270
      %p284 = scmp.eq.s32.totalorder %s26, 1
      %p285 = por %p283, %p284
      %p287 = scmp.ne.s32.totalorder %s270, %s286
      %p288 = scmp.eq.s32.totalorder %s26, 0
      %p289 = por %p287, %p288
      %p290 = scmp.le.s32.totalorder 1, %s20
      %p291 = scmp.lt.s32.totalorder %s20, 3
      %p292 = pnand %p290, %p291
      %p293 = pneg %p292
      // Predicated region
      $region9: #{sketch_cnn_forward.1} parent=5 // pred_check
        _
      $region10: #{sketch_cnn_forward.1} parent=5 // pred_check_branch
        %295 = sbr.rel (%p292) target = $region12
      $region11: #{sketch_cnn_forward.1} parent=5 // pred_region
        %s296 = ssub.s32 %s20, 1
        // Predicated region
        $region13: #{sketch_cnn_forward.1} parent=11 // pred_check
          %p297 = pneg %p67
        $region14: #{sketch_cnn_forward.1} parent=11 // pred_check_branch
          %299 = sbr.rel (%p297) target = $region16
        $region15: #{sketch_cnn_forward.1} parent=11 // pred_region
          _
        $region16: #{sketch_cnn_forward.1} parent=11 // pred_fallthru
          _
        // Predicated region
        $region17: #{sketch_cnn_forward.1} parent=11 // pred_check
          %p300 = pneg %p88
        $region18: #{sketch_cnn_forward.1} parent=11 // pred_check_branch
          %302 = sbr.rel (%p300) target = $region20
        $region19: #{sketch_cnn_forward.1} parent=11 // pred_region
          _
        $region20: #{sketch_cnn_forward.1} parent=11 // pred_fallthru
          _
        // Predicated region
        $region21: #{sketch_cnn_forward.1} parent=11 // pred_check
          %p303 = pneg %p109
        $region22: #{sketch_cnn_forward.1} parent=11 // pred_check_branch
          %305 = sbr.rel (%p303) target = $region24
        $region23: #{sketch_cnn_forward.1} parent=11 // pred_region
          _
        $region24: #{sketch_cnn_forward.1} parent=11 // pred_fallthru
          _
        // Predicated region
        $region25: #{sketch_cnn_forward.1} parent=11 // pred_check
          %p306 = pneg %p130
        $region26: #{sketch_cnn_forward.1} parent=11 // pred_check_branch
          %308 = sbr.rel (%p306) target = $region28
        $region27: #{sketch_cnn_forward.1} parent=11 // pred_region
          _
        $region28: #{sketch_cnn_forward.1} parent=11 // pred_fallthru
          _
        // Predicated region
        $region29: #{sketch_cnn_forward.1} parent=11 // pred_check
          %p309 = pneg %p151
        $region30: #{sketch_cnn_forward.1} parent=11 // pred_check_branch
          %311 = sbr.rel (%p309) target = $region32
        $region31: #{sketch_cnn_forward.1} parent=11 // pred_region
          _
        $region32: #{sketch_cnn_forward.1} parent=11 // pred_fallthru
          _
        // Predicated region
        $region33: #{sketch_cnn_forward.1} parent=11 // pred_check
          %p312 = pneg %p172
        $region34: #{sketch_cnn_forward.1} parent=11 // pred_check_branch
          %314 = sbr.rel (%p312) target = $region36
        $region35: #{sketch_cnn_forward.1} parent=11 // pred_region
          _
        $region36: #{sketch_cnn_forward.1} parent=11 // pred_fallthru
          _
        // Predicated region
        $region37: #{sketch_cnn_forward.1} parent=11 // pred_check
          %p315 = pneg %p193
        $region38: #{sketch_cnn_forward.1} parent=11 // pred_check_branch
          %317 = sbr.rel (%p315) target = $region40
        $region39: #{sketch_cnn_forward.1} parent=11 // pred_region
          _
        $region40: #{sketch_cnn_forward.1} parent=11 // pred_fallthru
          _
        // Predicated region
        $region41: #{sketch_cnn_forward.1} parent=11 // pred_check
          %p318 = pneg %p214
        $region42: #{sketch_cnn_forward.1} parent=11 // pred_check_branch
          %320 = sbr.rel (%p318) target = $region44
        $region43: #{sketch_cnn_forward.1} parent=11 // pred_region
          _
        $region44: #{sketch_cnn_forward.1} parent=11 // pred_fallthru
          _
        // Predicated region
        $region45: #{sketch_cnn_forward.1} parent=11 // pred_check
          %p321 = pneg %p235
        $region46: #{sketch_cnn_forward.1} parent=11 // pred_check_branch
          %323 = sbr.rel (%p321) target = $region48
        $region47: #{sketch_cnn_forward.1} parent=11 // pred_region
          _
        $region48: #{sketch_cnn_forward.1} parent=11 // pred_fallthru
          _
        // Predicated region
        $region49: #{sketch_cnn_forward.1} parent=11 // pred_check
          %p324 = pneg %p256
        $region50: #{sketch_cnn_forward.1} parent=11 // pred_check_branch
          %326 = sbr.rel (%p324) target = $region52
        $region51: #{sketch_cnn_forward.1} parent=11 // pred_region
          _
        $region52: #{sketch_cnn_forward.1} parent=11 // pred_fallthru
          _
      $region12: #{sketch_cnn_forward.1} parent=5 // pred_fallthru
        _
      %p327 = scmp.lt.s32.totalorder %s20, 2
      // Predicated region
      $region53: #{sketch_cnn_forward.1} parent=5 // pred_check
        %p328 = pneg %p327
      $region54: #{sketch_cnn_forward.1} parent=5 // pred_check_branch
        %330 = sbr.rel (%p328) target = $region56
      $region55: #{sketch_cnn_forward.1} parent=5 // pred_region
        // Predicated region
        $region57: #{sketch_cnn_forward.1} parent=55 // pred_check
          %p331 = pneg %p40
        $region58: #{sketch_cnn_forward.1} parent=55 // pred_check_branch
          %333 = sbr.rel (%p331) target = $region60
        $region59: #{sketch_cnn_forward.1} parent=55 // pred_region
          %s334 = smul.u32 16, %s20
          %p335 = scmp.lt.s32.totalorder %s334, 31
          %s336 = scalar_select %p335, %s334, 31
          %s337 = scalar_lea.vmem %s0, %s336
          %s338 = smul.u32 16, %s20
        $region60: #{sketch_cnn_forward.1} parent=55 // pred_fallthru
          _
      $region56: #{sketch_cnn_forward.1} parent=5 // pred_fallthru
        _
      %p339 = scmp.le.s32.totalorder 1, %s20
      %p340 = scmp.lt.s32.totalorder %s20, 3
      %p341 = pnand %p339, %p340
      %p342 = pneg %p341
      // Predicated region
      $region61: #{sketch_cnn_forward.1} parent=5 // pred_check
        _
      $region62: #{sketch_cnn_forward.1} parent=5 // pred_check_branch
        %344 = sbr.rel (%p341) target = $region64
      $region63: #{sketch_cnn_forward.1} parent=5 // pred_region
        %s345 = ssub.s32 %s20, 1
        %s346 = smul.u32 16, %s25
        %p347 = scmp.lt.s32.totalorder %s346, 31
        %s348 = scalar_select %p347, %s346, 31
        %s349 = scalar_lea.vmem %s0, %s348
        %p350 = pneg %p46
        %p351 = pneg %p43
        %p352 = pneg %p67
        %p353 = pneg %p64
        %p354 = pneg %p88
        %p355 = pneg %p85
        %p356 = pneg %p109
        %p357 = pneg %p106
        %p358 = pneg %p130
        %p359 = pneg %p127
        %p360 = pneg %p151
        %p361 = pneg %p148
        %p362 = pneg %p172
        %p363 = pneg %p169
        %p364 = pneg %p193
        %p365 = pneg %p190
        %p366 = pneg %p214
        %p367 = pneg %p211
        %p368 = pneg %p235
        %p369 = pneg %p232
        %p370 = pneg %p256
        %p371 = pneg %p253
        %p372 = pneg %p282
        %p373 = pneg %p279
        %s374 = sand.u32 %s269, 1
        %s375 = scalar_lea.sflag [#allocation3], %s374
        %s376 = sand.u32 %s269, 1
        %s377 = smul.addr %s376, 8
        %s378 = scalar_lea.vmem [#allocation2], %s377
        %s379 = smul.u32 16, %s25
        %p380 = scmp.lt.s32.totalorder %s379, 31
        %s381 = scalar_select %p380, %s379, 31
        %s382 = scalar_lea.vmem %s0, %s381
        %s383 = smul.u32 16, %s25
        %v384 = vld [vmem:[%s382] sm:$0xff]
        %v385 = vld [vmem:[%s382 + $0x8] sm:$0xff]
        %v386 = vld [vmem:[%s1] sm:$0xff]
        %v387 = vld [vmem:[%s1 + $0x8] sm:$0xff]
        %v388 = vld [vmem:[%s1 + $0x10] sm:$0xff]
        %v389 = vld [vmem:[%s1 + $0x18] sm:$0xff]
        %v390 = vld [vmem:[%s1 + $0x20] sm:$0xff]
        %v391 = vld [vmem:[%s1 + $0x28] sm:$0xff]
        %v392 = vld [vmem:[%s1 + $0x30] sm:$0xff]
        %v393 = vld [vmem:[%s1 + $0x38] sm:$0xff]
        %v394 = vld [vmem:[%s1 + $0x40] sm:$0xff]
        %v395 = vld [vmem:[%s1 + $0x48] sm:$0xff]
        %v396 = vld [vmem:[%s1 + $0x50] sm:$0xff]
        %v397 = vld [vmem:[%s1 + $0x58] sm:$0xff]
        %v398 = vld [vmem:[%s1 + $0x60] sm:$0xff]
        %v399 = vld [vmem:[%s1 + $0x68] sm:$0xff]
        %v400 = vld [vmem:[%s1 + $0x70] sm:$0xff]
        %v401 = vld [vmem:[%s1 + $0x78] sm:$0xff]
        %v402 = vld [vmem:[%s1 + $0x80] sm:$0x1]
        %v403 = vld [vmem:[%s1 + $0x88] sm:$0x1]
        %v404 = vld [vmem:[%s1 + $0x90] sm:$0x1]
        %v405 = vld [vmem:[%s1 + $0x98] sm:$0x1]
        %v406 = vld [vmem:[%s1 + $0xa0] sm:$0x1]
        %v407 = vld [vmem:[%s1 + $0xa8] sm:$0x1]
        %v408 = vld [vmem:[%s1 + $0xb0] sm:$0x1]
        %v409 = vld [vmem:[%s1 + $0xb8] sm:$0x1]
        %v410 = vld [vmem:[%s1 + $0xc0] sm:$0x1]
        %v411 = vld [vmem:[%s1 + $0xc8] sm:$0x1]
        %v412 = vld [vmem:[%s1 + $0xd0] sm:$0x1]
        %v413 = vld [vmem:[%s1 + $0xd8] sm:$0x1]
        %v414 = vld [vmem:[%s1 + $0xe0] sm:$0x1]
        %v415 = vld [vmem:[%s1 + $0xe8] sm:$0x1]
        %v416 = vld [vmem:[%s1 + $0xf0] sm:$0x1]
        %v417 = vld [vmem:[%s1 + $0xf8] sm:$0x1]
        %v418 = vld [vmem:[%s2] sm:$0xff]
        %v419 = vld [vmem:[%s2 + $0x8] sm:$0xff]
        %v420 = vld [vmem:[%s2 + $0x10] sm:$0xff]
        %v421 = vld [vmem:[%s2 + $0x18] sm:$0xff]
        %v422 = vld [vmem:[%s2 + $0x20] sm:$0xff]
        %v423 = vld [vmem:[%s2 + $0x28] sm:$0xff]
        %v424 = vld [vmem:[%s2 + $0x30] sm:$0xff]
        %v425 = vld [vmem:[%s2 + $0x38] sm:$0xff]
        %v426 = vld [vmem:[%s2 + $0x40] sm:$0xff]
        %v427 = vld [vmem:[%s2 + $0x48] sm:$0xff]
        %v428 = vld [vmem:[%s2 + $0x50] sm:$0xff]
        %v429 = vld [vmem:[%s2 + $0x58] sm:$0xff]
        %v430 = vld [vmem:[%s2 + $0x60] sm:$0xff]
        %v431 = vld [vmem:[%s2 + $0x68] sm:$0xff]
        %v432 = vld [vmem:[%s2 + $0x70] sm:$0xff]
        %v433 = vld [vmem:[%s2 + $0x78] sm:$0xff]
        %v434 = vld [vmem:[%s2 + $0x80] sm:$0x1]
        %v435 = vld [vmem:[%s2 + $0x88] sm:$0x1]
        %v436 = vld [vmem:[%s2 + $0x90] sm:$0x1]
        %v437 = vld [vmem:[%s2 + $0x98] sm:$0x1]
        %v438 = vld [vmem:[%s2 + $0xa0] sm:$0x1]
        %v439 = vld [vmem:[%s2 + $0xa8] sm:$0x1]
        %v440 = vld [vmem:[%s2 + $0xb0] sm:$0x1]
        %v441 = vld [vmem:[%s2 + $0xb8] sm:$0x1]
        %v442 = vld [vmem:[%s2 + $0xc0] sm:$0x1]
        %v443 = vld [vmem:[%s2 + $0xc8] sm:$0x1]
        %v444 = vld [vmem:[%s2 + $0xd0] sm:$0x1]
        %v445 = vld [vmem:[%s2 + $0xd8] sm:$0x1]
        %v446 = vld [vmem:[%s2 + $0xe0] sm:$0x1]
        %v447 = vld [vmem:[%s2 + $0xe8] sm:$0x1]
        %v448 = vld [vmem:[%s2 + $0xf0] sm:$0x1]
        %v449 = vld [vmem:[%s2 + $0xf8] sm:$0x1]
        %v450 = vld [vmem:[%s3] sm:$0xff]
        %v451 = vld [vmem:[%s4] sm:$0xff]
        %v453 = vperm.slane %v385, 7
        %454 = vrot.lane.b32.xlu0 %v453, 17
        %v455 = vpop.permute.xlu0 %454
        %v458 = vperm.slane %v384, 0
        %v459 = vperm.slane %v384, 1
        %v460 = vperm.slane %v384, 2
        %v461 = vperm.slane %v384, 3
        %v462 = vperm.slane %v384, 4
        %v463 = vperm.slane %v384, 5
        %v464 = vperm.slane %v384, 6
        %v465 = vperm.slane %v384, 7
        %v466 = vperm.slane %v385, 0
        %v467 = vperm.slane %v385, 1
        %v468 = vperm.slane %v385, 2
        %v469 = vperm.slane %v385, 3
        %v470 = vperm.slane %v385, 4
        %v471 = vperm.slane %v385, 5
        %v472 = vperm.slane %v385, 6
        %473 = vrot.lane.b32.xlu0 %v458, 17
        %v474 = vpop.permute.xlu0 %473
        %475 = vrot.lane.b32.xlu0 %v459, 17
        %v476 = vpop.permute.xlu0 %475
        %477 = vrot.lane.b32.xlu0 %v460, 17
        %v478 = vpop.permute.xlu0 %477
        %479 = vrot.lane.b32.xlu0 %v461, 17
        %v480 = vpop.permute.xlu0 %479
        %481 = vrot.lane.b32.xlu0 %v462, 17
        %v482 = vpop.permute.xlu0 %481
        %483 = vrot.lane.b32.xlu0 %v463, 17
        %v484 = vpop.permute.xlu0 %483
        %485 = vrot.lane.b32.xlu0 %v464, 17
        %v486 = vpop.permute.xlu0 %485
        %487 = vrot.lane.b32.xlu0 %v465, 17
        %v488 = vpop.permute.xlu0 %487
        %489 = vrot.lane.b32.xlu0 %v466, 17
        %v490 = vpop.permute.xlu0 %489
        %491 = vrot.lane.b32.xlu0 %v467, 17
        %v492 = vpop.permute.xlu0 %491
        %493 = vrot.lane.b32.xlu0 %v468, 17
        %v494 = vpop.permute.xlu0 %493
        %495 = vrot.lane.b32.xlu0 %v469, 17
        %v496 = vpop.permute.xlu0 %495
        %497 = vrot.lane.b32.xlu0 %v470, 17
        %v498 = vpop.permute.xlu0 %497
        %499 = vrot.lane.b32.xlu0 %v471, 17
        %v500 = vpop.permute.xlu0 %499
        %501 = vrot.lane.b32.xlu0 %v472, 17
        %v502 = vpop.permute.xlu0 %501
        %vm503 = vcmask 138240
        %v504 = vsel %vm503, %v474, %v476
        %v505 = vsel %vm503, %v476, %v478
        %v506 = vsel %vm503, %v478, %v480
        %v507 = vsel %vm503, %v480, %v482
        %v508 = vsel %vm503, %v482, %v484
        %v509 = vsel %vm503, %v484, %v486
        %v510 = vsel %vm503, %v486, %v488
        %v511 = vsel %vm503, %v488, %v490
        %v512 = vsel %vm503, %v490, %v492
        %v513 = vsel %vm503, %v492, %v494
        %v514 = vsel %vm503, %v494, %v496
        %v515 = vsel %vm503, %v496, %v498
        %v516 = vsel %vm503, %v498, %v500
        %v517 = vsel %vm503, %v500, %v502
        %v518 = vsel %vm503, %v502, %v455
        %v535 = vsel %vm503, %v455, %v474
        %v536 = vmul.f32 %v535, %v386
        %v537 = vmul.f32 %v504, %v387
        %v538 = vmul.f32 %v505, %v388
        %v539 = vmul.f32 %v506, %v389
        %v540 = vmul.f32 %v507, %v390
        %v541 = vmul.f32 %v508, %v391
        %v542 = vmul.f32 %v509, %v392
        %v543 = vmul.f32 %v510, %v393
        %v544 = vmul.f32 %v511, %v394
        %v545 = vmul.f32 %v512, %v395
        %v546 = vmul.f32 %v513, %v396
        %v547 = vmul.f32 %v514, %v397
        %v548 = vmul.f32 %v515, %v398
        %v549 = vmul.f32 %v516, %v399
        %v550 = vmul.f32 %v517, %v400
        %v551 = vmul.f32 %v518, %v401
        %552 = vrot.lane.b32.xlu0 %v453, 16
        %v553 = vpop.permute.xlu0 %552
        %555 = vrot.lane.b32.xlu0 %v458, 16
        %v556 = vpop.permute.xlu0 %555
        %557 = vrot.lane.b32.xlu0 %v459, 16
        %v558 = vpop.permute.xlu0 %557
        %559 = vrot.lane.b32.xlu0 %v460, 16
        %v560 = vpop.permute.xlu0 %559
        %561 = vrot.lane.b32.xlu0 %v461, 16
        %v562 = vpop.permute.xlu0 %561
        %563 = vrot.lane.b32.xlu0 %v462, 16
        %v564 = vpop.permute.xlu0 %563
        %565 = vrot.lane.b32.xlu0 %v463, 16
        %v566 = vpop.permute.xlu0 %565
        %567 = vrot.lane.b32.xlu0 %v464, 16
        %v568 = vpop.permute.xlu0 %567
        %569 = vrot.lane.b32.xlu0 %v465, 16
        %v570 = vpop.permute.xlu0 %569
        %571 = vrot.lane.b32.xlu0 %v466, 16
        %v572 = vpop.permute.xlu0 %571
        %573 = vrot.lane.b32.xlu0 %v467, 16
        %v574 = vpop.permute.xlu0 %573
        %575 = vrot.lane.b32.xlu0 %v468, 16
        %v576 = vpop.permute.xlu0 %575
        %577 = vrot.lane.b32.xlu0 %v469, 16
        %v578 = vpop.permute.xlu0 %577
        %579 = vrot.lane.b32.xlu0 %v470, 16
        %v580 = vpop.permute.xlu0 %579
        %581 = vrot.lane.b32.xlu0 %v471, 16
        %v582 = vpop.permute.xlu0 %581
        %583 = vrot.lane.b32.xlu0 %v472, 16
        %v584 = vpop.permute.xlu0 %583
        %vm585 = vcmask 130048
        %v586 = vsel %vm585, %v556, %v558
        %v587 = vsel %vm585, %v558, %v560
        %v588 = vsel %vm585, %v560, %v562
        %v589 = vsel %vm585, %v562, %v564
        %v590 = vsel %vm585, %v564, %v566
        %v591 = vsel %vm585, %v566, %v568
        %v592 = vsel %vm585, %v568, %v570
        %v593 = vsel %vm585, %v570, %v572
        %v594 = vsel %vm585, %v572, %v574
        %v595 = vsel %vm585, %v574, %v576
        %v596 = vsel %vm585, %v576, %v578
        %v597 = vsel %vm585, %v578, %v580
        %v598 = vsel %vm585, %v580, %v582
        %v599 = vsel %vm585, %v582, %v584
        %v600 = vsel %vm585, %v584, %v553
        %v617 = vsel %vm585, %v553, %v556
        %v634 = vrot.slane %v386, 1
        %v635 = vrot.slane %v387, 1
        %v636 = vrot.slane %v388, 1
        %v637 = vrot.slane %v389, 1
        %v638 = vrot.slane %v390, 1
        %v639 = vrot.slane %v391, 1
        %v640 = vrot.slane %v392, 1
        %v641 = vrot.slane %v393, 1
        %v642 = vrot.slane %v394, 1
        %v643 = vrot.slane %v395, 1
        %v644 = vrot.slane %v396, 1
        %v645 = vrot.slane %v397, 1
        %v646 = vrot.slane %v398, 1
        %v647 = vrot.slane %v399, 1
        %v648 = vrot.slane %v400, 1
        %v649 = vrot.slane %v401, 1
        %v666 = vmul.f32 %v617, %v634
        %v667 = vmul.f32 %v586, %v635
        %v668 = vmul.f32 %v587, %v636
        %v669 = vmul.f32 %v588, %v637
        %v670 = vmul.f32 %v589, %v638
        %v671 = vmul.f32 %v590, %v639
        %v672 = vmul.f32 %v591, %v640
        %v673 = vmul.f32 %v592, %v641
        %v674 = vmul.f32 %v593, %v642
        %v675 = vmul.f32 %v594, %v643
        %v676 = vmul.f32 %v595, %v644
        %v677 = vmul.f32 %v596, %v645
        %v678 = vmul.f32 %v597, %v646
        %v679 = vmul.f32 %v598, %v647
        %v680 = vmul.f32 %v599, %v648
        %v681 = vmul.f32 %v600, %v649
        %682 = vrot.lane.b32.xlu0 %v453, 15
        %v683 = vpop.permute.xlu0 %682
        %685 = vrot.lane.b32.xlu0 %v458, 15
        %v686 = vpop.permute.xlu0 %685
        %687 = vrot.lane.b32.xlu0 %v459, 15
        %v688 = vpop.permute.xlu0 %687
        %689 = vrot.lane.b32.xlu0 %v460, 15
        %v690 = vpop.permute.xlu0 %689
        %691 = vrot.lane.b32.xlu0 %v461, 15
        %v692 = vpop.permute.xlu0 %691
        %693 = vrot.lane.b32.xlu0 %v462, 15
        %v694 = vpop.permute.xlu0 %693
        %695 = vrot.lane.b32.xlu0 %v463, 15
        %v696 = vpop.permute.xlu0 %695
        %697 = vrot.lane.b32.xlu0 %v464, 15
        %v698 = vpop.permute.xlu0 %697
        %699 = vrot.lane.b32.xlu0 %v465, 15
        %v700 = vpop.permute.xlu0 %699
        %701 = vrot.lane.b32.xlu0 %v466, 15
        %v702 = vpop.permute.xlu0 %701
        %703 = vrot.lane.b32.xlu0 %v467, 15
        %v704 = vpop.permute.xlu0 %703
        %705 = vrot.lane.b32.xlu0 %v468, 15
        %v706 = vpop.permute.xlu0 %705
        %707 = vrot.lane.b32.xlu0 %v469, 15
        %v708 = vpop.permute.xlu0 %707
        %709 = vrot.lane.b32.xlu0 %v470, 15
        %v710 = vpop.permute.xlu0 %709
        %711 = vrot.lane.b32.xlu0 %v471, 15
        %v712 = vpop.permute.xlu0 %711
        %713 = vrot.lane.b32.xlu0 %v472, 15
        %v714 = vpop.permute.xlu0 %713
        %vm715 = vcmask 121856
        %v716 = vsel %vm715, %v686, %v688
        %v717 = vsel %vm715, %v688, %v690
        %v718 = vsel %vm715, %v690, %v692
        %v719 = vsel %vm715, %v692, %v694
        %v720 = vsel %vm715, %v694, %v696
        %v721 = vsel %vm715, %v696, %v698
        %v722 = vsel %vm715, %v698, %v700
        %v723 = vsel %vm715, %v700, %v702
        %v724 = vsel %vm715, %v702, %v704
        %v725 = vsel %vm715, %v704, %v706
        %v726 = vsel %vm715, %v706, %v708
        %v727 = vsel %vm715, %v708, %v710
        %v728 = vsel %vm715, %v710, %v712
        %v729 = vsel %vm715, %v712, %v714
        %v730 = vsel %vm715, %v714, %v683
        %v747 = vsel %vm715, %v683, %v686
        %v748 = vrot.slane %v386, 2
        %v749 = vrot.slane %v387, 2
        %v750 = vrot.slane %v388, 2
        %v751 = vrot.slane %v389, 2
        %v752 = vrot.slane %v390, 2
        %v753 = vrot.slane %v391, 2
        %v754 = vrot.slane %v392, 2
        %v755 = vrot.slane %v393, 2
        %v756 = vrot.slane %v394, 2
        %v757 = vrot.slane %v395, 2
        %v758 = vrot.slane %v396, 2
        %v759 = vrot.slane %v397, 2
        %v760 = vrot.slane %v398, 2
        %v761 = vrot.slane %v399, 2
        %v762 = vrot.slane %v400, 2
        %v763 = vrot.slane %v401, 2
        %v780 = vmul.f32 %v747, %v748
        %v781 = vmul.f32 %v716, %v749
        %v782 = vmul.f32 %v717, %v750
        %v783 = vmul.f32 %v718, %v751
        %v784 = vmul.f32 %v719, %v752
        %v785 = vmul.f32 %v720, %v753
        %v786 = vmul.f32 %v721, %v754
        %v787 = vmul.f32 %v722, %v755
        %v788 = vmul.f32 %v723, %v756
        %v789 = vmul.f32 %v724, %v757
        %v790 = vmul.f32 %v725, %v758
        %v791 = vmul.f32 %v726, %v759
        %v792 = vmul.f32 %v727, %v760
        %v793 = vmul.f32 %v728, %v761
        %v794 = vmul.f32 %v729, %v762
        %v795 = vmul.f32 %v730, %v763
        %796 = vrot.lane.b32.xlu0 %v453, 1
        %v797 = vpop.permute.xlu0 %796
        %799 = vrot.lane.b32.xlu0 %v458, 1
        %v800 = vpop.permute.xlu0 %799
        %801 = vrot.lane.b32.xlu0 %v459, 1
        %v802 = vpop.permute.xlu0 %801
        %803 = vrot.lane.b32.xlu0 %v460, 1
        %v804 = vpop.permute.xlu0 %803
        %805 = vrot.lane.b32.xlu0 %v461, 1
        %v806 = vpop.permute.xlu0 %805
        %807 = vrot.lane.b32.xlu0 %v462, 1
        %v808 = vpop.permute.xlu0 %807
        %809 = vrot.lane.b32.xlu0 %v463, 1
        %v810 = vpop.permute.xlu0 %809
        %811 = vrot.lane.b32.xlu0 %v464, 1
        %v812 = vpop.permute.xlu0 %811
        %813 = vrot.lane.b32.xlu0 %v465, 1
        %v814 = vpop.permute.xlu0 %813
        %815 = vrot.lane.b32.xlu0 %v466, 1
        %v816 = vpop.permute.xlu0 %815
        %817 = vrot.lane.b32.xlu0 %v467, 1
        %v818 = vpop.permute.xlu0 %817
        %819 = vrot.lane.b32.xlu0 %v468, 1
        %v820 = vpop.permute.xlu0 %819
        %821 = vrot.lane.b32.xlu0 %v469, 1
        %v822 = vpop.permute.xlu0 %821
        %823 = vrot.lane.b32.xlu0 %v470, 1
        %v824 = vpop.permute.xlu0 %823
        %825 = vrot.lane.b32.xlu0 %v471, 1
        %v826 = vpop.permute.xlu0 %825
        %827 = vrot.lane.b32.xlu0 %v472, 1
        %v828 = vpop.permute.xlu0 %827
        %vm829 = vcmask 7168
        %v830 = vsel %vm829, %v800, %v802
        %v831 = vsel %vm829, %v802, %v804
        %v832 = vsel %vm829, %v804, %v806
        %v833 = vsel %vm829, %v806, %v808
        %v834 = vsel %vm829, %v808, %v810
        %v835 = vsel %vm829, %v810, %v812
        %v836 = vsel %vm829, %v812, %v814
        %v837 = vsel %vm829, %v814, %v816
        %v838 = vsel %vm829, %v816, %v818
        %v839 = vsel %vm829, %v818, %v820
        %v840 = vsel %vm829, %v820, %v822
        %v841 = vsel %vm829, %v822, %v824
        %v842 = vsel %vm829, %v824, %v826
        %v843 = vsel %vm829, %v826, %v828
        %v844 = vsel %vm829, %v828, %v797
        %v861 = vsel %vm829, %v797, %v800
        %v862 = vrot.slane %v386, 3
        %v863 = vrot.slane %v387, 3
        %v864 = vrot.slane %v388, 3
        %v865 = vrot.slane %v389, 3
        %v866 = vrot.slane %v390, 3
        %v867 = vrot.slane %v391, 3
        %v868 = vrot.slane %v392, 3
        %v869 = vrot.slane %v393, 3
        %v870 = vrot.slane %v394, 3
        %v871 = vrot.slane %v395, 3
        %v872 = vrot.slane %v396, 3
        %v873 = vrot.slane %v397, 3
        %v874 = vrot.slane %v398, 3
        %v875 = vrot.slane %v399, 3
        %v876 = vrot.slane %v400, 3
        %v877 = vrot.slane %v401, 3
        %v894 = vmul.f32 %v861, %v862
        %v895 = vmul.f32 %v830, %v863
        %v896 = vmul.f32 %v831, %v864
        %v897 = vmul.f32 %v832, %v865
        %v898 = vmul.f32 %v833, %v866
        %v899 = vmul.f32 %v834, %v867
        %v900 = vmul.f32 %v835, %v868
        %v901 = vmul.f32 %v836, %v869
        %v902 = vmul.f32 %v837, %v870
        %v903 = vmul.f32 %v838, %v871
        %v904 = vmul.f32 %v839, %v872
        %v905 = vmul.f32 %v840, %v873
        %v906 = vmul.f32 %v841, %v874
        %v907 = vmul.f32 %v842, %v875
        %v908 = vmul.f32 %v843, %v876
        %v909 = vmul.f32 %v844, %v877
        %910 = vrot.lane.b32.xlu0 %v458, 127
        %v911 = vpop.permute.xlu0 %910
        %912 = vrot.lane.b32.xlu0 %v459, 127
        %v913 = vpop.permute.xlu0 %912
        %914 = vrot.lane.b32.xlu0 %v460, 127
        %v915 = vpop.permute.xlu0 %914
        %916 = vrot.lane.b32.xlu0 %v461, 127
        %v917 = vpop.permute.xlu0 %916
        %918 = vrot.lane.b32.xlu0 %v462, 127
        %v919 = vpop.permute.xlu0 %918
        %920 = vrot.lane.b32.xlu0 %v463, 127
        %v921 = vpop.permute.xlu0 %920
        %922 = vrot.lane.b32.xlu0 %v464, 127
        %v923 = vpop.permute.xlu0 %922
        %924 = vrot.lane.b32.xlu0 %v465, 127
        %v925 = vpop.permute.xlu0 %924
        %926 = vrot.lane.b32.xlu0 %v466, 127
        %v927 = vpop.permute.xlu0 %926
        %928 = vrot.lane.b32.xlu0 %v467, 127
        %v929 = vpop.permute.xlu0 %928
        %930 = vrot.lane.b32.xlu0 %v468, 127
        %v931 = vpop.permute.xlu0 %930
        %932 = vrot.lane.b32.xlu0 %v469, 127
        %v933 = vpop.permute.xlu0 %932
        %934 = vrot.lane.b32.xlu0 %v470, 127
        %v935 = vpop.permute.xlu0 %934
        %936 = vrot.lane.b32.xlu0 %v471, 127
        %v937 = vpop.permute.xlu0 %936
        %938 = vrot.lane.b32.xlu0 %v472, 127
        %v939 = vpop.permute.xlu0 %938
        %940 = vrot.lane.b32.xlu0 %v453, 127
        %v941 = vpop.permute.xlu0 %940
        %vm942 = vcmask 1039360
        %v943 = vsel %vm942, %v911, %v913
        %v944 = vsel %vm942, %v913, %v915
        %v945 = vsel %vm942, %v915, %v917
        %v946 = vsel %vm942, %v917, %v919
        %v947 = vsel %vm942, %v919, %v921
        %v948 = vsel %vm942, %v921, %v923
        %v949 = vsel %vm942, %v923, %v925
        %v950 = vsel %vm942, %v925, %v927
        %v951 = vsel %vm942, %v927, %v929
        %v952 = vsel %vm942, %v929, %v931
        %v953 = vsel %vm942, %v931, %v933
        %v954 = vsel %vm942, %v933, %v935
        %v955 = vsel %vm942, %v935, %v937
        %v956 = vsel %vm942, %v937, %v939
        %v957 = vsel %vm942, %v939, %v941
        %v975 = vsel %vm942, %v941, %v911
        %v976 = vrot.slane %v386, 5
        %v977 = vrot.slane %v387, 5
        %v978 = vrot.slane %v388, 5
        %v979 = vrot.slane %v389, 5
        %v980 = vrot.slane %v390, 5
        %v981 = vrot.slane %v391, 5
        %v982 = vrot.slane %v392, 5
        %v983 = vrot.slane %v393, 5
        %v984 = vrot.slane %v394, 5
        %v985 = vrot.slane %v395, 5
        %v986 = vrot.slane %v396, 5
        %v987 = vrot.slane %v397, 5
        %v988 = vrot.slane %v398, 5
        %v989 = vrot.slane %v399, 5
        %v990 = vrot.slane %v400, 5
        %v991 = vrot.slane %v401, 5
        %v1008 = vmul.f32 %v943, %v976
        %v1009 = vmul.f32 %v944, %v977
        %v1010 = vmul.f32 %v945, %v978
        %v1011 = vmul.f32 %v946, %v979
        %v1012 = vmul.f32 %v947, %v980
        %v1013 = vmul.f32 %v948, %v981
        %v1014 = vmul.f32 %v949, %v982
        %v1015 = vmul.f32 %v950, %v983
        %v1016 = vmul.f32 %v951, %v984
        %v1017 = vmul.f32 %v952, %v985
        %v1018 = vmul.f32 %v953, %v986
        %v1019 = vmul.f32 %v954, %v987
        %v1020 = vmul.f32 %v955, %v988
        %v1021 = vmul.f32 %v956, %v989
        %v1022 = vmul.f32 %v957, %v990
        %v1023 = vmul.f32 %v975, %v991
        %1024 = vrot.lane.b32.xlu0 %v458, 113
        %v1025 = vpop.permute.xlu0 %1024
        %1026 = vrot.lane.b32.xlu0 %v459, 113
        %v1027 = vpop.permute.xlu0 %1026
        %1028 = vrot.lane.b32.xlu0 %v460, 113
        %v1029 = vpop.permute.xlu0 %1028
        %1030 = vrot.lane.b32.xlu0 %v461, 113
        %v1031 = vpop.permute.xlu0 %1030
        %1032 = vrot.lane.b32.xlu0 %v462, 113
        %v1033 = vpop.permute.xlu0 %1032
        %1034 = vrot.lane.b32.xlu0 %v463, 113
        %v1035 = vpop.permute.xlu0 %1034
        %1036 = vrot.lane.b32.xlu0 %v464, 113
        %v1037 = vpop.permute.xlu0 %1036
        %1038 = vrot.lane.b32.xlu0 %v465, 113
        %v1039 = vpop.permute.xlu0 %1038
        %1040 = vrot.lane.b32.xlu0 %v466, 113
        %v1041 = vpop.permute.xlu0 %1040
        %1042 = vrot.lane.b32.xlu0 %v467, 113
        %v1043 = vpop.permute.xlu0 %1042
        %1044 = vrot.lane.b32.xlu0 %v468, 113
        %v1045 = vpop.permute.xlu0 %1044
        %1046 = vrot.lane.b32.xlu0 %v469, 113
        %v1047 = vpop.permute.xlu0 %1046
        %1048 = vrot.lane.b32.xlu0 %v470, 113
        %v1049 = vpop.permute.xlu0 %1048
        %1050 = vrot.lane.b32.xlu0 %v471, 113
        %v1051 = vpop.permute.xlu0 %1050
        %1052 = vrot.lane.b32.xlu0 %v472, 113
        %v1053 = vpop.permute.xlu0 %1052
        %1054 = vrot.lane.b32.xlu0 %v453, 113
        %v1055 = vpop.permute.xlu0 %1054
        %vm1056 = vcmask 924672
        %v1057 = vsel %vm1056, %v1025, %v1027
        %v1058 = vsel %vm1056, %v1027, %v1029
        %v1059 = vsel %vm1056, %v1029, %v1031
        %v1060 = vsel %vm1056, %v1031, %v1033
        %v1061 = vsel %vm1056, %v1033, %v1035
        %v1062 = vsel %vm1056, %v1035, %v1037
        %v1063 = vsel %vm1056, %v1037, %v1039
        %v1064 = vsel %vm1056, %v1039, %v1041
        %v1065 = vsel %vm1056, %v1041, %v1043
        %v1066 = vsel %vm1056, %v1043, %v1045
        %v1067 = vsel %vm1056, %v1045, %v1047
        %v1068 = vsel %vm1056, %v1047, %v1049
        %v1069 = vsel %vm1056, %v1049, %v1051
        %v1070 = vsel %vm1056, %v1051, %v1053
        %v1071 = vsel %vm1056, %v1053, %v1055
        %v1089 = vsel %vm1056, %v1055, %v1025
        %v1090 = vrot.slane %v386, 6
        %v1091 = vrot.slane %v387, 6
        %v1092 = vrot.slane %v388, 6
        %v1093 = vrot.slane %v389, 6
        %v1094 = vrot.slane %v390, 6
        %v1095 = vrot.slane %v391, 6
        %v1096 = vrot.slane %v392, 6
        %v1097 = vrot.slane %v393, 6
        %v1098 = vrot.slane %v394, 6
        %v1099 = vrot.slane %v395, 6
        %v1100 = vrot.slane %v396, 6
        %v1101 = vrot.slane %v397, 6
        %v1102 = vrot.slane %v398, 6
        %v1103 = vrot.slane %v399, 6
        %v1104 = vrot.slane %v400, 6
        %v1105 = vrot.slane %v401, 6
        %v1122 = vmul.f32 %v1057, %v1090
        %v1123 = vmul.f32 %v1058, %v1091
        %v1124 = vmul.f32 %v1059, %v1092
        %v1125 = vmul.f32 %v1060, %v1093
        %v1126 = vmul.f32 %v1061, %v1094
        %v1127 = vmul.f32 %v1062, %v1095
        %v1128 = vmul.f32 %v1063, %v1096
        %v1129 = vmul.f32 %v1064, %v1097
        %v1130 = vmul.f32 %v1065, %v1098
        %v1131 = vmul.f32 %v1066, %v1099
        %v1132 = vmul.f32 %v1067, %v1100
        %v1133 = vmul.f32 %v1068, %v1101
        %v1134 = vmul.f32 %v1069, %v1102
        %v1135 = vmul.f32 %v1070, %v1103
        %v1136 = vmul.f32 %v1071, %v1104
        %v1137 = vmul.f32 %v1089, %v1105
        %1138 = vrot.lane.b32.xlu0 %v458, 112
        %v1139 = vpop.permute.xlu0 %1138
        %1140 = vrot.lane.b32.xlu0 %v459, 112
        %v1141 = vpop.permute.xlu0 %1140
        %1142 = vrot.lane.b32.xlu0 %v460, 112
        %v1143 = vpop.permute.xlu0 %1142
        %1144 = vrot.lane.b32.xlu0 %v461, 112
        %v1145 = vpop.permute.xlu0 %1144
        %1146 = vrot.lane.b32.xlu0 %v462, 112
        %v1147 = vpop.permute.xlu0 %1146
        %1148 = vrot.lane.b32.xlu0 %v463, 112
        %v1149 = vpop.permute.xlu0 %1148
        %1150 = vrot.lane.b32.xlu0 %v464, 112
        %v1151 = vpop.permute.xlu0 %1150
        %1152 = vrot.lane.b32.xlu0 %v465, 112
        %v1153 = vpop.permute.xlu0 %1152
        %1154 = vrot.lane.b32.xlu0 %v466, 112
        %v1155 = vpop.permute.xlu0 %1154
        %1156 = vrot.lane.b32.xlu0 %v467, 112
        %v1157 = vpop.permute.xlu0 %1156
        %1158 = vrot.lane.b32.xlu0 %v468, 112
        %v1159 = vpop.permute.xlu0 %1158
        %1160 = vrot.lane.b32.xlu0 %v469, 112
        %v1161 = vpop.permute.xlu0 %1160
        %1162 = vrot.lane.b32.xlu0 %v470, 112
        %v1163 = vpop.permute.xlu0 %1162
        %1164 = vrot.lane.b32.xlu0 %v471, 112
        %v1165 = vpop.permute.xlu0 %1164
        %1166 = vrot.lane.b32.xlu0 %v472, 112
        %v1167 = vpop.permute.xlu0 %1166
        %1168 = vrot.lane.b32.xlu0 %v453, 112
        %v1169 = vpop.permute.xlu0 %1168
        %vm1170 = vcmask 916480
        %v1171 = vsel %vm1170, %v1139, %v1141
        %v1172 = vsel %vm1170, %v1141, %v1143
        %v1173 = vsel %vm1170, %v1143, %v1145
        %v1174 = vsel %vm1170, %v1145, %v1147
        %v1175 = vsel %vm1170, %v1147, %v1149
        %v1176 = vsel %vm1170, %v1149, %v1151
        %v1177 = vsel %vm1170, %v1151, %v1153
        %v1178 = vsel %vm1170, %v1153, %v1155
        %v1179 = vsel %vm1170, %v1155, %v1157
        %v1180 = vsel %vm1170, %v1157, %v1159
        %v1181 = vsel %vm1170, %v1159, %v1161
        %v1182 = vsel %vm1170, %v1161, %v1163
        %v1183 = vsel %vm1170, %v1163, %v1165
        %v1184 = vsel %vm1170, %v1165, %v1167
        %v1185 = vsel %vm1170, %v1167, %v1169
        %v1203 = vsel %vm1170, %v1169, %v1139
        %v1204 = vrot.slane %v386, 7
        %v1205 = vrot.slane %v387, 7
        %v1206 = vrot.slane %v388, 7
        %v1207 = vrot.slane %v389, 7
        %v1208 = vrot.slane %v390, 7
        %v1209 = vrot.slane %v391, 7
        %v1210 = vrot.slane %v392, 7
        %v1211 = vrot.slane %v393, 7
        %v1212 = vrot.slane %v394, 7
        %v1213 = vrot.slane %v395, 7
        %v1214 = vrot.slane %v396, 7
        %v1215 = vrot.slane %v397, 7
        %v1216 = vrot.slane %v398, 7
        %v1217 = vrot.slane %v399, 7
        %v1218 = vrot.slane %v400, 7
        %v1219 = vrot.slane %v401, 7
        %v1236 = vmul.f32 %v1171, %v1204
        %v1237 = vmul.f32 %v1172, %v1205
        %v1238 = vmul.f32 %v1173, %v1206
        %v1239 = vmul.f32 %v1174, %v1207
        %v1240 = vmul.f32 %v1175, %v1208
        %v1241 = vmul.f32 %v1176, %v1209
        %v1242 = vmul.f32 %v1177, %v1210
        %v1243 = vmul.f32 %v1178, %v1211
        %v1244 = vmul.f32 %v1179, %v1212
        %v1245 = vmul.f32 %v1180, %v1213
        %v1246 = vmul.f32 %v1181, %v1214
        %v1247 = vmul.f32 %v1182, %v1215
        %v1248 = vmul.f32 %v1183, %v1216
        %v1249 = vmul.f32 %v1184, %v1217
        %v1250 = vmul.f32 %v1185, %v1218
        %v1251 = vmul.f32 %v1203, %v1219
        %1252 = vrot.lane.b32.xlu0 %v458, 111
        %v1253 = vpop.permute.xlu0 %1252
        %1254 = vrot.lane.b32.xlu0 %v459, 111
        %v1255 = vpop.permute.xlu0 %1254
        %1256 = vrot.lane.b32.xlu0 %v460, 111
        %v1257 = vpop.permute.xlu0 %1256
        %1258 = vrot.lane.b32.xlu0 %v461, 111
        %v1259 = vpop.permute.xlu0 %1258
        %1260 = vrot.lane.b32.xlu0 %v462, 111
        %v1261 = vpop.permute.xlu0 %1260
        %1262 = vrot.lane.b32.xlu0 %v463, 111
        %v1263 = vpop.permute.xlu0 %1262
        %1264 = vrot.lane.b32.xlu0 %v464, 111
        %v1265 = vpop.permute.xlu0 %1264
        %1266 = vrot.lane.b32.xlu0 %v465, 111
        %v1267 = vpop.permute.xlu0 %1266
        %1268 = vrot.lane.b32.xlu0 %v466, 111
        %v1269 = vpop.permute.xlu0 %1268
        %1270 = vrot.lane.b32.xlu0 %v467, 111
        %v1271 = vpop.permute.xlu0 %1270
        %1272 = vrot.lane.b32.xlu0 %v468, 111
        %v1273 = vpop.permute.xlu0 %1272
        %1274 = vrot.lane.b32.xlu0 %v469, 111
        %v1275 = vpop.permute.xlu0 %1274
        %1276 = vrot.lane.b32.xlu0 %v470, 111
        %v1277 = vpop.permute.xlu0 %1276
        %1278 = vrot.lane.b32.xlu0 %v471, 111
        %v1279 = vpop.permute.xlu0 %1278
        %1280 = vrot.lane.b32.xlu0 %v472, 111
        %v1281 = vpop.permute.xlu0 %1280
        %1282 = vrot.lane.b32.xlu0 %v453, 111
        %v1283 = vpop.permute.xlu0 %1282
        %vm1284 = vcmask 908288
        %v1285 = vsel %vm1284, %v1253, %v1255
        %v1286 = vsel %vm1284, %v1255, %v1257
        %v1287 = vsel %vm1284, %v1257, %v1259
        %v1288 = vsel %vm1284, %v1259, %v1261
        %v1289 = vsel %vm1284, %v1261, %v1263
        %v1290 = vsel %vm1284, %v1263, %v1265
        %v1291 = vsel %vm1284, %v1265, %v1267
        %v1292 = vsel %vm1284, %v1267, %v1269
        %v1293 = vsel %vm1284, %v1269, %v1271
        %v1294 = vsel %vm1284, %v1271, %v1273
        %v1295 = vsel %vm1284, %v1273, %v1275
        %v1296 = vsel %vm1284, %v1275, %v1277
        %v1297 = vsel %vm1284, %v1277, %v1279
        %v1298 = vsel %vm1284, %v1279, %v1281
        %v1299 = vsel %vm1284, %v1281, %v1283
        %v1317 = vsel %vm1284, %v1283, %v1253
        %v1318 = vmul.f32 %v1285, %v402
        %v1319 = vmul.f32 %v1286, %v403
        %v1320 = vmul.f32 %v1287, %v404
        %v1321 = vmul.f32 %v1288, %v405
        %v1322 = vmul.f32 %v1289, %v406
        %v1323 = vmul.f32 %v1290, %v407
        %v1324 = vmul.f32 %v1291, %v408
        %v1325 = vmul.f32 %v1292, %v409
        %v1326 = vmul.f32 %v1293, %v410
        %v1327 = vmul.f32 %v1294, %v411
        %v1328 = vmul.f32 %v1295, %v412
        %v1329 = vmul.f32 %v1296, %v413
        %v1330 = vmul.f32 %v1297, %v414
        %v1331 = vmul.f32 %v1298, %v415
        %v1332 = vmul.f32 %v1299, %v416
        %v1333 = vmul.f32 %v1317, %v417
        %v1350 = vrot.slane %v666, 7
        %v1351 = vrot.slane %v667, 7
        %v1352 = vrot.slane %v668, 7
        %v1353 = vrot.slane %v669, 7
        %v1354 = vrot.slane %v670, 7
        %v1355 = vrot.slane %v671, 7
        %v1356 = vrot.slane %v672, 7
        %v1357 = vrot.slane %v673, 7
        %v1358 = vrot.slane %v674, 7
        %v1359 = vrot.slane %v675, 7
        %v1360 = vrot.slane %v676, 7
        %v1361 = vrot.slane %v677, 7
        %v1362 = vrot.slane %v678, 7
        %v1363 = vrot.slane %v679, 7
        %v1364 = vrot.slane %v680, 7
        %v1365 = vrot.slane %v681, 7
        %v1398 = vrot.slane %v780, 6
        %v1399 = vrot.slane %v781, 6
        %v1400 = vrot.slane %v782, 6
        %v1401 = vrot.slane %v783, 6
        %v1402 = vrot.slane %v784, 6
        %v1403 = vrot.slane %v785, 6
        %v1404 = vrot.slane %v786, 6
        %v1405 = vrot.slane %v787, 6
        %v1406 = vrot.slane %v788, 6
        %v1407 = vrot.slane %v789, 6
        %v1408 = vrot.slane %v790, 6
        %v1409 = vrot.slane %v791, 6
        %v1410 = vrot.slane %v792, 6
        %v1411 = vrot.slane %v793, 6
        %v1412 = vrot.slane %v794, 6
        %v1413 = vrot.slane %v795, 6
        %v1446 = vrot.slane %v894, 5
        %v1447 = vrot.slane %v895, 5
        %v1448 = vrot.slane %v896, 5
        %v1449 = vrot.slane %v897, 5
        %v1450 = vrot.slane %v898, 5
        %v1451 = vrot.slane %v899, 5
        %v1452 = vrot.slane %v900, 5
        %v1453 = vrot.slane %v901, 5
        %v1454 = vrot.slane %v902, 5
        %v1455 = vrot.slane %v903, 5
        %v1456 = vrot.slane %v904, 5
        %v1457 = vrot.slane %v905, 5
        %v1458 = vrot.slane %v906, 5
        %v1459 = vrot.slane %v907, 5
        %v1460 = vrot.slane %v908, 5
        %v1461 = vrot.slane %v909, 5
        %v1510 = vrot.slane %v1008, 3
        %v1511 = vrot.slane %v1009, 3
        %v1512 = vrot.slane %v1010, 3
        %v1513 = vrot.slane %v1011, 3
        %v1514 = vrot.slane %v1012, 3
        %v1515 = vrot.slane %v1013, 3
        %v1516 = vrot.slane %v1014, 3
        %v1517 = vrot.slane %v1015, 3
        %v1518 = vrot.slane %v1016, 3
        %v1519 = vrot.slane %v1017, 3
        %v1520 = vrot.slane %v1018, 3
        %v1521 = vrot.slane %v1019, 3
        %v1522 = vrot.slane %v1020, 3
        %v1523 = vrot.slane %v1021, 3
        %v1524 = vrot.slane %v1022, 3
        %v1525 = vrot.slane %v1023, 3
        %v1558 = vrot.slane %v1122, 2
        %v1559 = vrot.slane %v1123, 2
        %v1560 = vrot.slane %v1124, 2
        %v1561 = vrot.slane %v1125, 2
        %v1562 = vrot.slane %v1126, 2
        %v1563 = vrot.slane %v1127, 2
        %v1564 = vrot.slane %v1128, 2
        %v1565 = vrot.slane %v1129, 2
        %v1566 = vrot.slane %v1130, 2
        %v1567 = vrot.slane %v1131, 2
        %v1568 = vrot.slane %v1132, 2
        %v1569 = vrot.slane %v1133, 2
        %v1570 = vrot.slane %v1134, 2
        %v1571 = vrot.slane %v1135, 2
        %v1572 = vrot.slane %v1136, 2
        %v1573 = vrot.slane %v1137, 2
        %v1606 = vrot.slane %v1236, 1
        %v1607 = vrot.slane %v1237, 1
        %v1608 = vrot.slane %v1238, 1
        %v1609 = vrot.slane %v1239, 1
        %v1610 = vrot.slane %v1240, 1
        %v1611 = vrot.slane %v1241, 1
        %v1612 = vrot.slane %v1242, 1
        %v1613 = vrot.slane %v1243, 1
        %v1614 = vrot.slane %v1244, 1
        %v1615 = vrot.slane %v1245, 1
        %v1616 = vrot.slane %v1246, 1
        %v1617 = vrot.slane %v1247, 1
        %v1618 = vrot.slane %v1248, 1
        %v1619 = vrot.slane %v1249, 1
        %v1620 = vrot.slane %v1250, 1
        %v1621 = vrot.slane %v1251, 1
        %vm1638 = vcmask 1040384
        %v1639 = vsel %vm1638, %v536, %v1350
        %v1640 = vsel %vm1638, %v537, %v1351
        %v1641 = vsel %vm1638, %v538, %v1352
        %v1642 = vsel %vm1638, %v539, %v1353
        %v1643 = vsel %vm1638, %v540, %v1354
        %v1644 = vsel %vm1638, %v541, %v1355
        %v1645 = vsel %vm1638, %v542, %v1356
        %v1646 = vsel %vm1638, %v543, %v1357
        %v1647 = vsel %vm1638, %v544, %v1358
        %v1648 = vsel %vm1638, %v545, %v1359
        %v1649 = vsel %vm1638, %v546, %v1360
        %v1650 = vsel %vm1638, %v547, %v1361
        %v1651 = vsel %vm1638, %v548, %v1362
        %v1652 = vsel %vm1638, %v549, %v1363
        %v1653 = vsel %vm1638, %v550, %v1364
        %v1654 = vsel %vm1638, %v551, %v1365
        %vm1655 = vcmask 1041408
        %v1656 = vsel %vm1655, %v1639, %v1398
        %v1657 = vsel %vm1655, %v1640, %v1399
        %v1658 = vsel %vm1655, %v1641, %v1400
        %v1659 = vsel %vm1655, %v1642, %v1401
        %v1660 = vsel %vm1655, %v1643, %v1402
        %v1661 = vsel %vm1655, %v1644, %v1403
        %v1662 = vsel %vm1655, %v1645, %v1404
        %v1663 = vsel %vm1655, %v1646, %v1405
        %v1664 = vsel %vm1655, %v1647, %v1406
        %v1665 = vsel %vm1655, %v1648, %v1407
        %v1666 = vsel %vm1655, %v1649, %v1408
        %v1667 = vsel %vm1655, %v1650, %v1409
        %v1668 = vsel %vm1655, %v1651, %v1410
        %v1669 = vsel %vm1655, %v1652, %v1411
        %v1670 = vsel %vm1655, %v1653, %v1412
        %v1671 = vsel %vm1655, %v1654, %v1413
        %vm1672 = vcmask 1042432
        %v1673 = vsel %vm1672, %v1656, %v1446
        %v1674 = vsel %vm1672, %v1657, %v1447
        %v1675 = vsel %vm1672, %v1658, %v1448
        %v1676 = vsel %vm1672, %v1659, %v1449
        %v1677 = vsel %vm1672, %v1660, %v1450
        %v1678 = vsel %vm1672, %v1661, %v1451
        %v1679 = vsel %vm1672, %v1662, %v1452
        %v1680 = vsel %vm1672, %v1663, %v1453
        %v1681 = vsel %vm1672, %v1664, %v1454
        %v1682 = vsel %vm1672, %v1665, %v1455
        %v1683 = vsel %vm1672, %v1666, %v1456
        %v1684 = vsel %vm1672, %v1667, %v1457
        %v1685 = vsel %vm1672, %v1668, %v1458
        %v1686 = vsel %vm1672, %v1669, %v1459
        %v1687 = vsel %vm1672, %v1670, %v1460
        %v1688 = vsel %vm1672, %v1671, %v1461
        %vm1689 = vcmask 1043456
        %v1690 = vsel %vm1689, %v1673, %v458
        %v1691 = vsel %vm1689, %v1674, %v459
        %v1692 = vsel %vm1689, %v1675, %v460
        %v1693 = vsel %vm1689, %v1676, %v461
        %v1694 = vsel %vm1689, %v1677, %v462
        %v1695 = vsel %vm1689, %v1678, %v463
        %v1696 = vsel %vm1689, %v1679, %v464
        %v1697 = vsel %vm1689, %v1680, %v465
        %v1698 = vsel %vm1689, %v1681, %v466
        %v1699 = vsel %vm1689, %v1682, %v467
        %v1700 = vsel %vm1689, %v1683, %v468
        %v1701 = vsel %vm1689, %v1684, %v469
        %v1702 = vsel %vm1689, %v1685, %v470
        %v1703 = vsel %vm1689, %v1686, %v471
        %v1704 = vsel %vm1689, %v1687, %v472
        %v1705 = vsel %vm1689, %v1688, %v453
        %vm1706 = vcmask 1044480
        %v1707 = vsel %vm1706, %v1690, %v1510
        %v1708 = vsel %vm1706, %v1691, %v1511
        %v1709 = vsel %vm1706, %v1692, %v1512
        %v1710 = vsel %vm1706, %v1693, %v1513
        %v1711 = vsel %vm1706, %v1694, %v1514
        %v1712 = vsel %vm1706, %v1695, %v1515
        %v1713 = vsel %vm1706, %v1696, %v1516
        %v1714 = vsel %vm1706, %v1697, %v1517
        %v1715 = vsel %vm1706, %v1698, %v1518
        %v1716 = vsel %vm1706, %v1699, %v1519
        %v1717 = vsel %vm1706, %v1700, %v1520
        %v1718 = vsel %vm1706, %v1701, %v1521
        %v1719 = vsel %vm1706, %v1702, %v1522
        %v1720 = vsel %vm1706, %v1703, %v1523
        %v1721 = vsel %vm1706, %v1704, %v1524
        %v1722 = vsel %vm1706, %v1705, %v1525
        %vm1723 = vcmask 1045504
        %v1724 = vsel %vm1723, %v1707, %v1558
        %v1725 = vsel %vm1723, %v1708, %v1559
        %v1726 = vsel %vm1723, %v1709, %v1560
        %v1727 = vsel %vm1723, %v1710, %v1561
        %v1728 = vsel %vm1723, %v1711, %v1562
        %v1729 = vsel %vm1723, %v1712, %v1563
        %v1730 = vsel %vm1723, %v1713, %v1564
        %v1731 = vsel %vm1723, %v1714, %v1565
        %v1732 = vsel %vm1723, %v1715, %v1566
        %v1733 = vsel %vm1723, %v1716, %v1567
        %v1734 = vsel %vm1723, %v1717, %v1568
        %v1735 = vsel %vm1723, %v1718, %v1569
        %v1736 = vsel %vm1723, %v1719, %v1570
        %v1737 = vsel %vm1723, %v1720, %v1571
        %v1738 = vsel %vm1723, %v1721, %v1572
        %v1739 = vsel %vm1723, %v1722, %v1573
        %vm1740 = vcmask 1046528
        %v1741 = vsel %vm1740, %v1724, %v1606
        %v1742 = vsel %vm1740, %v1725, %v1607
        %v1743 = vsel %vm1740, %v1726, %v1608
        %v1744 = vsel %vm1740, %v1727, %v1609
        %v1745 = vsel %vm1740, %v1728, %v1610
        %v1746 = vsel %vm1740, %v1729, %v1611
        %v1747 = vsel %vm1740, %v1730, %v1612
        %v1748 = vsel %vm1740, %v1731, %v1613
        %v1749 = vsel %vm1740, %v1732, %v1614
        %v1750 = vsel %vm1740, %v1733, %v1615
        %v1751 = vsel %vm1740, %v1734, %v1616
        %v1752 = vsel %vm1740, %v1735, %v1617
        %v1753 = vsel %vm1740, %v1736, %v1618
        %v1754 = vsel %vm1740, %v1737, %v1619
        %v1755 = vsel %vm1740, %v1738, %v1620
        %v1756 = vsel %vm1740, %v1739, %v1621
        %1758 = vset.pattern.permute.xlu0 0
        %1759 = vperm.xlu0 %1758, %v451
        %v1760 = vpop.permute.xlu0 %1759
        %vm1762 = vcmask 72704
        %v1764 = vsel %vm1762, %v450, 0
        %v1767 = vsel %vm1638, %v1318, 0
        %v1770 = vsel %vm1638, %v1319, 0
        %v1773 = vsel %vm1638, %v1320, 0
        %v1776 = vsel %vm1638, %v1321, 0
        %v1779 = vsel %vm1638, %v1322, 0
        %v1782 = vsel %vm1638, %v1323, 0
        %v1785 = vsel %vm1638, %v1324, 0
        %v1788 = vsel %vm1638, %v1325, 0
        %v1791 = vsel %vm1638, %v1326, 0
        %v1794 = vsel %vm1638, %v1327, 0
        %v1797 = vsel %vm1638, %v1328, 0
        %v1800 = vsel %vm1638, %v1329, 0
        %v1803 = vsel %vm1638, %v1330, 0
        %v1806 = vsel %vm1638, %v1331, 0
        %v1809 = vsel %vm1638, %v1332, 0
        %v1812 = vsel %vm1638, %v1333, 0
        %1814 = vmatpush.msra.mxu0 0.0
        %1815 = vmatpush.msra.mxu0 0.0
        %1816 = vmatpush.msra.mxu0 0.0
        %1817 = vmatpush.msra.mxu0 0.0
        %1818 = vmatpush.msra.mxu0 0.0
        %1819 = vmatpush.msra.mxu0 0.0
        %1820 = vmatpush.msra.mxu0 0.0
        %1821 = vmatpush.msra.mxu0 0.0
        %1822 = vmatpush.msra.mxu0 0.0
        %1823 = vmatpush.msra.mxu0 0.0
        %1824 = vmatpush.msra.mxu0 0.0
        %1825 = vmatpush.msra.mxu0 0.0
        %1826 = vmatpush.msra.mxu0 0.0
        %1827 = vmatpush.msra.mxu0 0.0
        %1828 = vmatpush.msra.mxu0 %v1767
        %1829 = vmatpush.msra.mxu0 %v1741
        %1830 = vmatmul.f32.gmra.mxu0 %v1764
        %v1831 = vpop.f32.mrf.mxu0
        %v1832 = vadd.f32 %v1760, %v1831
        %1833 = vdwg.mxu0
        %1834 = vmatpush.msra.mxu0 0.0
        %1835 = vmatpush.msra.mxu0 0.0
        %1836 = vmatpush.msra.mxu0 0.0
        %1837 = vmatpush.msra.mxu0 0.0
        %1838 = vmatpush.msra.mxu0 0.0
        %1839 = vmatpush.msra.mxu0 0.0
        %1840 = vmatpush.msra.mxu0 0.0
        %1841 = vmatpush.msra.mxu0 0.0
        %1842 = vmatpush.msra.mxu0 0.0
        %1843 = vmatpush.msra.mxu0 0.0
        %1844 = vmatpush.msra.mxu0 0.0
        %1845 = vmatpush.msra.mxu0 0.0
        %1846 = vmatpush.msra.mxu0 0.0
        %1847 = vmatpush.msra.mxu0 0.0
        %1848 = vmatpush.msra.mxu0 %v1770
        %1849 = vmatpush.msra.mxu0 %v1742
        %1850 = vmatmul.f32.gmra.mxu0 %v1764
        %v1851 = vpop.f32.mrf.mxu0
        %v1852 = vadd.f32 %v1760, %v1851
        %1853 = vdwg.mxu0
        %1854 = vmatpush.msra.mxu0 0.0
        %1855 = vmatpush.msra.mxu0 0.0
        %1856 = vmatpush.msra.mxu0 0.0
        %1857 = vmatpush.msra.mxu0 0.0
        %1858 = vmatpush.msra.mxu0 0.0
        %1859 = vmatpush.msra.mxu0 0.0
        %1860 = vmatpush.msra.mxu0 0.0
        %1861 = vmatpush.msra.mxu0 0.0
        %1862 = vmatpush.msra.mxu0 0.0
        %1863 = vmatpush.msra.mxu0 0.0
        %1864 = vmatpush.msra.mxu0 0.0
        %1865 = vmatpush.msra.mxu0 0.0
        %1866 = vmatpush.msra.mxu0 0.0
        %1867 = vmatpush.msra.mxu0 0.0
        %1868 = vmatpush.msra.mxu0 %v1773
        %1869 = vmatpush.msra.mxu0 %v1743
        %1870 = vmatmul.f32.gmra.mxu0 %v1764
        %v1871 = vpop.f32.mrf.mxu0
        %v1872 = vadd.f32 %v1760, %v1871
        %1873 = vdwg.mxu0
        %1874 = vmatpush.msra.mxu0 0.0
        %1875 = vmatpush.msra.mxu0 0.0
        %1876 = vmatpush.msra.mxu0 0.0
        %1877 = vmatpush.msra.mxu0 0.0
        %1878 = vmatpush.msra.mxu0 0.0
        %1879 = vmatpush.msra.mxu0 0.0
        %1880 = vmatpush.msra.mxu0 0.0
        %1881 = vmatpush.msra.mxu0 0.0
        %1882 = vmatpush.msra.mxu0 0.0
        %1883 = vmatpush.msra.mxu0 0.0
        %1884 = vmatpush.msra.mxu0 0.0
        %1885 = vmatpush.msra.mxu0 0.0
        %1886 = vmatpush.msra.mxu0 0.0
        %1887 = vmatpush.msra.mxu0 0.0
        %1888 = vmatpush.msra.mxu0 %v1776
        %1889 = vmatpush.msra.mxu0 %v1744
        %1890 = vmatmul.f32.gmra.mxu0 %v1764
        %v1891 = vpop.f32.mrf.mxu0
        %v1892 = vadd.f32 %v1760, %v1891
        %1893 = vdwg.mxu0
        %1894 = vmatpush.msra.mxu0 0.0
        %1895 = vmatpush.msra.mxu0 0.0
        %1896 = vmatpush.msra.mxu0 0.0
        %1897 = vmatpush.msra.mxu0 0.0
        %1898 = vmatpush.msra.mxu0 0.0
        %1899 = vmatpush.msra.mxu0 0.0
        %1900 = vmatpush.msra.mxu0 0.0
        %1901 = vmatpush.msra.mxu0 0.0
        %1902 = vmatpush.msra.mxu0 0.0
        %1903 = vmatpush.msra.mxu0 0.0
        %1904 = vmatpush.msra.mxu0 0.0
        %1905 = vmatpush.msra.mxu0 0.0
        %1906 = vmatpush.msra.mxu0 0.0
        %1907 = vmatpush.msra.mxu0 0.0
        %1908 = vmatpush.msra.mxu0 %v1779
        %1909 = vmatpush.msra.mxu0 %v1745
        %1910 = vmatmul.f32.gmra.mxu0 %v1764
        %v1911 = vpop.f32.mrf.mxu0
        %v1912 = vadd.f32 %v1760, %v1911
        %1913 = vdwg.mxu0
        %1914 = vmatpush.msra.mxu0 0.0
        %1915 = vmatpush.msra.mxu0 0.0
        %1916 = vmatpush.msra.mxu0 0.0
        %1917 = vmatpush.msra.mxu0 0.0
        %1918 = vmatpush.msra.mxu0 0.0
        %1919 = vmatpush.msra.mxu0 0.0
        %1920 = vmatpush.msra.mxu0 0.0
        %1921 = vmatpush.msra.mxu0 0.0
        %1922 = vmatpush.msra.mxu0 0.0
        %1923 = vmatpush.msra.mxu0 0.0
        %1924 = vmatpush.msra.mxu0 0.0
        %1925 = vmatpush.msra.mxu0 0.0
        %1926 = vmatpush.msra.mxu0 0.0
        %1927 = vmatpush.msra.mxu0 0.0
        %1928 = vmatpush.msra.mxu0 %v1782
        %1929 = vmatpush.msra.mxu0 %v1746
        %1930 = vmatmul.f32.gmra.mxu0 %v1764
        %v1931 = vpop.f32.mrf.mxu0
        %v1932 = vadd.f32 %v1760, %v1931
        %1933 = vdwg.mxu0
        %1934 = vmatpush.msra.mxu0 0.0
        %1935 = vmatpush.msra.mxu0 0.0
        %1936 = vmatpush.msra.mxu0 0.0
        %1937 = vmatpush.msra.mxu0 0.0
        %1938 = vmatpush.msra.mxu0 0.0
        %1939 = vmatpush.msra.mxu0 0.0
        %1940 = vmatpush.msra.mxu0 0.0
        %1941 = vmatpush.msra.mxu0 0.0
        %1942 = vmatpush.msra.mxu0 0.0
        %1943 = vmatpush.msra.mxu0 0.0
        %1944 = vmatpush.msra.mxu0 0.0
        %1945 = vmatpush.msra.mxu0 0.0
        %1946 = vmatpush.msra.mxu0 0.0
        %1947 = vmatpush.msra.mxu0 0.0
        %1948 = vmatpush.msra.mxu0 %v1785
        %1949 = vmatpush.msra.mxu0 %v1747
        %1950 = vmatmul.f32.gmra.mxu0 %v1764
        %v1951 = vpop.f32.mrf.mxu0
        %v1952 = vadd.f32 %v1760, %v1951
        %1953 = vdwg.mxu0
        %1954 = vmatpush.msra.mxu0 0.0
        %1955 = vmatpush.msra.mxu0 0.0
        %1956 = vmatpush.msra.mxu0 0.0
        %1957 = vmatpush.msra.mxu0 0.0
        %1958 = vmatpush.msra.mxu0 0.0
        %1959 = vmatpush.msra.mxu0 0.0
        %1960 = vmatpush.msra.mxu0 0.0
        %1961 = vmatpush.msra.mxu0 0.0
        %1962 = vmatpush.msra.mxu0 0.0
        %1963 = vmatpush.msra.mxu0 0.0
        %1964 = vmatpush.msra.mxu0 0.0
        %1965 = vmatpush.msra.mxu0 0.0
        %1966 = vmatpush.msra.mxu0 0.0
        %1967 = vmatpush.msra.mxu0 0.0
        %1968 = vmatpush.msra.mxu0 %v1788
        %1969 = vmatpush.msra.mxu0 %v1748
        %1970 = vmatmul.f32.gmra.mxu0 %v1764
        %v1971 = vpop.f32.mrf.mxu0
        %v1972 = vadd.f32 %v1760, %v1971
        %1973 = vdwg.mxu0
        %1974 = vmatpush.msra.mxu0 0.0
        %1975 = vmatpush.msra.mxu0 0.0
        %1976 = vmatpush.msra.mxu0 0.0
        %1977 = vmatpush.msra.mxu0 0.0
        %1978 = vmatpush.msra.mxu0 0.0
        %1979 = vmatpush.msra.mxu0 0.0
        %1980 = vmatpush.msra.mxu0 0.0
        %1981 = vmatpush.msra.mxu0 0.0
        %1982 = vmatpush.msra.mxu0 0.0
        %1983 = vmatpush.msra.mxu0 0.0
        %1984 = vmatpush.msra.mxu0 0.0
        %1985 = vmatpush.msra.mxu0 0.0
        %1986 = vmatpush.msra.mxu0 0.0
        %1987 = vmatpush.msra.mxu0 0.0
        %1988 = vmatpush.msra.mxu0 %v1791
        %1989 = vmatpush.msra.mxu0 %v1749
        %1990 = vmatmul.f32.gmra.mxu0 %v1764
        %v1991 = vpop.f32.mrf.mxu0
        %v1992 = vadd.f32 %v1760, %v1991
        %1993 = vdwg.mxu0
        %1994 = vmatpush.msra.mxu0 0.0
        %1995 = vmatpush.msra.mxu0 0.0
        %1996 = vmatpush.msra.mxu0 0.0
        %1997 = vmatpush.msra.mxu0 0.0
        %1998 = vmatpush.msra.mxu0 0.0
        %1999 = vmatpush.msra.mxu0 0.0
        %2000 = vmatpush.msra.mxu0 0.0
        %2001 = vmatpush.msra.mxu0 0.0
        %2002 = vmatpush.msra.mxu0 0.0
        %2003 = vmatpush.msra.mxu0 0.0
        %2004 = vmatpush.msra.mxu0 0.0
        %2005 = vmatpush.msra.mxu0 0.0
        %2006 = vmatpush.msra.mxu0 0.0
        %2007 = vmatpush.msra.mxu0 0.0
        %2008 = vmatpush.msra.mxu0 %v1794
        %2009 = vmatpush.msra.mxu0 %v1750
        %2010 = vmatmul.f32.gmra.mxu0 %v1764
        %v2011 = vpop.f32.mrf.mxu0
        %v2012 = vadd.f32 %v1760, %v2011
        %2013 = vdwg.mxu0
        %2014 = vmatpush.msra.mxu0 0.0
        %2015 = vmatpush.msra.mxu0 0.0
        %2016 = vmatpush.msra.mxu0 0.0
        %2017 = vmatpush.msra.mxu0 0.0
        %2018 = vmatpush.msra.mxu0 0.0
        %2019 = vmatpush.msra.mxu0 0.0
        %2020 = vmatpush.msra.mxu0 0.0
        %2021 = vmatpush.msra.mxu0 0.0
        %2022 = vmatpush.msra.mxu0 0.0
        %2023 = vmatpush.msra.mxu0 0.0
        %2024 = vmatpush.msra.mxu0 0.0
        %2025 = vmatpush.msra.mxu0 0.0
        %2026 = vmatpush.msra.mxu0 0.0
        %2027 = vmatpush.msra.mxu0 0.0
        %2028 = vmatpush.msra.mxu0 %v1797
        %2029 = vmatpush.msra.mxu0 %v1751
        %2030 = vmatmul.f32.gmra.mxu0 %v1764
        %v2031 = vpop.f32.mrf.mxu0
        %v2032 = vadd.f32 %v1760, %v2031
        %2033 = vdwg.mxu0
        %2034 = vmatpush.msra.mxu0 0.0
        %2035 = vmatpush.msra.mxu0 0.0
        %2036 = vmatpush.msra.mxu0 0.0
        %2037 = vmatpush.msra.mxu0 0.0
        %2038 = vmatpush.msra.mxu0 0.0
        %2039 = vmatpush.msra.mxu0 0.0
        %2040 = vmatpush.msra.mxu0 0.0
        %2041 = vmatpush.msra.mxu0 0.0
        %2042 = vmatpush.msra.mxu0 0.0
        %2043 = vmatpush.msra.mxu0 0.0
        %2044 = vmatpush.msra.mxu0 0.0
        %2045 = vmatpush.msra.mxu0 0.0
        %2046 = vmatpush.msra.mxu0 0.0
        %2047 = vmatpush.msra.mxu0 0.0
        %2048 = vmatpush.msra.mxu0 %v1800
        %2049 = vmatpush.msra.mxu0 %v1752
        %2050 = vmatmul.f32.gmra.mxu0 %v1764
        %v2051 = vpop.f32.mrf.mxu0
        %v2052 = vadd.f32 %v1760, %v2051
        %2053 = vdwg.mxu0
        %2054 = vmatpush.msra.mxu0 0.0
        %2055 = vmatpush.msra.mxu0 0.0
        %2056 = vmatpush.msra.mxu0 0.0
        %2057 = vmatpush.msra.mxu0 0.0
        %2058 = vmatpush.msra.mxu0 0.0
        %2059 = vmatpush.msra.mxu0 0.0
        %2060 = vmatpush.msra.mxu0 0.0
        %2061 = vmatpush.msra.mxu0 0.0
        %2062 = vmatpush.msra.mxu0 0.0
        %2063 = vmatpush.msra.mxu0 0.0
        %2064 = vmatpush.msra.mxu0 0.0
        %2065 = vmatpush.msra.mxu0 0.0
        %2066 = vmatpush.msra.mxu0 0.0
        %2067 = vmatpush.msra.mxu0 0.0
        %2068 = vmatpush.msra.mxu0 %v1803
        %2069 = vmatpush.msra.mxu0 %v1753
        %2070 = vmatmul.f32.gmra.mxu0 %v1764
        %v2071 = vpop.f32.mrf.mxu0
        %v2072 = vadd.f32 %v1760, %v2071
        %2073 = vdwg.mxu0
        %2074 = vmatpush.msra.mxu0 0.0
        %2075 = vmatpush.msra.mxu0 0.0
        %2076 = vmatpush.msra.mxu0 0.0
        %2077 = vmatpush.msra.mxu0 0.0
        %2078 = vmatpush.msra.mxu0 0.0
        %2079 = vmatpush.msra.mxu0 0.0
        %2080 = vmatpush.msra.mxu0 0.0
        %2081 = vmatpush.msra.mxu0 0.0
        %2082 = vmatpush.msra.mxu0 0.0
        %2083 = vmatpush.msra.mxu0 0.0
        %2084 = vmatpush.msra.mxu0 0.0
        %2085 = vmatpush.msra.mxu0 0.0
        %2086 = vmatpush.msra.mxu0 0.0
        %2087 = vmatpush.msra.mxu0 0.0
        %2088 = vmatpush.msra.mxu0 %v1806
        %2089 = vmatpush.msra.mxu0 %v1754
        %2090 = vmatmul.f32.gmra.mxu0 %v1764
        %v2091 = vpop.f32.mrf.mxu0
        %v2092 = vadd.f32 %v1760, %v2091
        %2093 = vdwg.mxu0
        %2094 = vmatpush.msra.mxu0 0.0
        %2095 = vmatpush.msra.mxu0 0.0
        %2096 = vmatpush.msra.mxu0 0.0
        %2097 = vmatpush.msra.mxu0 0.0
        %2098 = vmatpush.msra.mxu0 0.0
        %2099 = vmatpush.msra.mxu0 0.0
        %2100 = vmatpush.msra.mxu0 0.0
        %2101 = vmatpush.msra.mxu0 0.0
        %2102 = vmatpush.msra.mxu0 0.0
        %2103 = vmatpush.msra.mxu0 0.0
        %2104 = vmatpush.msra.mxu0 0.0
        %2105 = vmatpush.msra.mxu0 0.0
        %2106 = vmatpush.msra.mxu0 0.0
        %2107 = vmatpush.msra.mxu0 0.0
        %2108 = vmatpush.msra.mxu0 %v1809
        %2109 = vmatpush.msra.mxu0 %v1755
        %2110 = vmatmul.f32.gmra.mxu0 %v1764
        %v2111 = vpop.f32.mrf.mxu0
        %v2112 = vadd.f32 %v1760, %v2111
        %2113 = vdwg.mxu0
        %2114 = vmatpush.msra.mxu0 0.0
        %2115 = vmatpush.msra.mxu0 0.0
        %2116 = vmatpush.msra.mxu0 0.0
        %2117 = vmatpush.msra.mxu0 0.0
        %2118 = vmatpush.msra.mxu0 0.0
        %2119 = vmatpush.msra.mxu0 0.0
        %2120 = vmatpush.msra.mxu0 0.0
        %2121 = vmatpush.msra.mxu0 0.0
        %2122 = vmatpush.msra.mxu0 0.0
        %2123 = vmatpush.msra.mxu0 0.0
        %2124 = vmatpush.msra.mxu0 0.0
        %2125 = vmatpush.msra.mxu0 0.0
        %2126 = vmatpush.msra.mxu0 0.0
        %2127 = vmatpush.msra.mxu0 0.0
        %2128 = vmatpush.msra.mxu0 %v1812
        %2129 = vmatpush.msra.mxu0 %v1756
        %2130 = vmatmul.f32.gmra.mxu0 %v1764
        %v2131 = vpop.f32.mrf.mxu0
        %v2132 = vadd.f32 %v1760, %v2131
        %2133 = vdwg.mxu0
        %v2134 = vmax.f32 %v1832, 0.0
        %v2135 = vmax.f32 %v1852, 0.0
        %v2136 = vmax.f32 %v1872, 0.0
        %v2137 = vmax.f32 %v1892, 0.0
        %v2138 = vmax.f32 %v1912, 0.0
        %v2139 = vmax.f32 %v1932, 0.0
        %v2140 = vmax.f32 %v1952, 0.0
        %v2141 = vmax.f32 %v1972, 0.0
        %v2142 = vmax.f32 %v1992, 0.0
        %v2143 = vmax.f32 %v2012, 0.0
        %v2144 = vmax.f32 %v2032, 0.0
        %v2145 = vmax.f32 %v2052, 0.0
        %v2146 = vmax.f32 %v2072, 0.0
        %v2147 = vmax.f32 %v2092, 0.0
        %v2148 = vmax.f32 %v2112, 0.0
        %v2149 = vmax.f32 %v2132, 0.0
        %2166 = vrot.lane.b32.xlu0 %v2134, 127
        %v2167 = vpop.permute.xlu0 %2166
        %2168 = vrot.lane.b32.xlu0 %v2135, 127
        %v2169 = vpop.permute.xlu0 %2168
        %2170 = vrot.lane.b32.xlu0 %v2136, 127
        %v2171 = vpop.permute.xlu0 %2170
        %2172 = vrot.lane.b32.xlu0 %v2137, 127
        %v2173 = vpop.permute.xlu0 %2172
        %2174 = vrot.lane.b32.xlu0 %v2138, 127
        %v2175 = vpop.permute.xlu0 %2174
        %2176 = vrot.lane.b32.xlu0 %v2139, 127
        %v2177 = vpop.permute.xlu0 %2176
        %2178 = vrot.lane.b32.xlu0 %v2140, 127
        %v2179 = vpop.permute.xlu0 %2178
        %2180 = vrot.lane.b32.xlu0 %v2141, 127
        %v2181 = vpop.permute.xlu0 %2180
        %2182 = vrot.lane.b32.xlu0 %v2142, 127
        %v2183 = vpop.permute.xlu0 %2182
        %2184 = vrot.lane.b32.xlu0 %v2143, 127
        %v2185 = vpop.permute.xlu0 %2184
        %2186 = vrot.lane.b32.xlu0 %v2144, 127
        %v2187 = vpop.permute.xlu0 %2186
        %2188 = vrot.lane.b32.xlu0 %v2145, 127
        %v2189 = vpop.permute.xlu0 %2188
        %2190 = vrot.lane.b32.xlu0 %v2146, 127
        %v2191 = vpop.permute.xlu0 %2190
        %2192 = vrot.lane.b32.xlu0 %v2147, 127
        %v2193 = vpop.permute.xlu0 %2192
        %2194 = vrot.lane.b32.xlu0 %v2148, 127
        %v2195 = vpop.permute.xlu0 %2194
        %2196 = vrot.lane.b32.xlu0 %v2149, 127
        %v2197 = vpop.permute.xlu0 %2196
        %v2198 = vsel %vm942, %v2167, %v2169
        %v2199 = vsel %vm942, %v2169, %v2171
        %v2200 = vsel %vm942, %v2171, %v2173
        %v2201 = vsel %vm942, %v2173, %v2175
        %v2202 = vsel %vm942, %v2175, %v2177
        %v2203 = vsel %vm942, %v2177, %v2179
        %v2204 = vsel %vm942, %v2179, %v2181
        %v2205 = vsel %vm942, %v2181, %v2183
        %v2206 = vsel %vm942, %v2183, %v2185
        %v2207 = vsel %vm942, %v2185, %v2187
        %v2208 = vsel %vm942, %v2187, %v2189
        %v2209 = vsel %vm942, %v2189, %v2191
        %v2210 = vsel %vm942, %v2191, %v2193
        %v2211 = vsel %vm942, %v2193, %v2195
        %v2212 = vsel %vm942, %v2195, %v2197
        %v2230 = vsel %vm942, %v2197, %v2167
        %v2231 = vmax.f32 %v2134, %v2198
        %v2232 = vmax.f32 %v2135, %v2199
        %v2233 = vmax.f32 %v2136, %v2200
        %v2234 = vmax.f32 %v2137, %v2201
        %v2235 = vmax.f32 %v2138, %v2202
        %v2236 = vmax.f32 %v2139, %v2203
        %v2237 = vmax.f32 %v2140, %v2204
        %v2238 = vmax.f32 %v2141, %v2205
        %v2239 = vmax.f32 %v2142, %v2206
        %v2240 = vmax.f32 %v2143, %v2207
        %v2241 = vmax.f32 %v2144, %v2208
        %v2242 = vmax.f32 %v2145, %v2209
        %v2243 = vmax.f32 %v2146, %v2210
        %v2244 = vmax.f32 %v2147, %v2211
        %v2245 = vmax.f32 %v2148, %v2212
        %v2246 = vmax.f32 %v2149, %v2230
        %2263 = vrot.lane.b32.xlu0 %v2231, 112
        %v2264 = vpop.permute.xlu0 %2263
        %2265 = vrot.lane.b32.xlu0 %v2232, 112
        %v2266 = vpop.permute.xlu0 %2265
        %2267 = vrot.lane.b32.xlu0 %v2233, 112
        %v2268 = vpop.permute.xlu0 %2267
        %2269 = vrot.lane.b32.xlu0 %v2234, 112
        %v2270 = vpop.permute.xlu0 %2269
        %2271 = vrot.lane.b32.xlu0 %v2235, 112
        %v2272 = vpop.permute.xlu0 %2271
        %2273 = vrot.lane.b32.xlu0 %v2236, 112
        %v2274 = vpop.permute.xlu0 %2273
        %2275 = vrot.lane.b32.xlu0 %v2237, 112
        %v2276 = vpop.permute.xlu0 %2275
        %2277 = vrot.lane.b32.xlu0 %v2238, 112
        %v2278 = vpop.permute.xlu0 %2277
        %2279 = vrot.lane.b32.xlu0 %v2239, 112
        %v2280 = vpop.permute.xlu0 %2279
        %2281 = vrot.lane.b32.xlu0 %v2240, 112
        %v2282 = vpop.permute.xlu0 %2281
        %2283 = vrot.lane.b32.xlu0 %v2241, 112
        %v2284 = vpop.permute.xlu0 %2283
        %2285 = vrot.lane.b32.xlu0 %v2242, 112
        %v2286 = vpop.permute.xlu0 %2285
        %2287 = vrot.lane.b32.xlu0 %v2243, 112
        %v2288 = vpop.permute.xlu0 %2287
        %2289 = vrot.lane.b32.xlu0 %v2244, 112
        %v2290 = vpop.permute.xlu0 %2289
        %2291 = vrot.lane.b32.xlu0 %v2245, 112
        %v2292 = vpop.permute.xlu0 %2291
        %2293 = vrot.lane.b32.xlu0 %v2246, 112
        %v2294 = vpop.permute.xlu0 %2293
        %v2295 = vsel %vm1170, %v2264, %v2266
        %v2296 = vsel %vm1170, %v2266, %v2268
        %v2297 = vsel %vm1170, %v2268, %v2270
        %v2298 = vsel %vm1170, %v2270, %v2272
        %v2299 = vsel %vm1170, %v2272, %v2274
        %v2300 = vsel %vm1170, %v2274, %v2276
        %v2301 = vsel %vm1170, %v2276, %v2278
        %v2302 = vsel %vm1170, %v2278, %v2280
        %v2303 = vsel %vm1170, %v2280, %v2282
        %v2304 = vsel %vm1170, %v2282, %v2284
        %v2305 = vsel %vm1170, %v2284, %v2286
        %v2306 = vsel %vm1170, %v2286, %v2288
        %v2307 = vsel %vm1170, %v2288, %v2290
        %v2308 = vsel %vm1170, %v2290, %v2292
        %v2309 = vsel %vm1170, %v2292, %v2294
        %v2327 = vsel %vm1170, %v2294, %v2264
        %v2328 = vmax.f32 %v2231, %v2295
        %v2329 = vmax.f32 %v2232, %v2296
        %v2330 = vmax.f32 %v2233, %v2297
        %v2331 = vmax.f32 %v2234, %v2298
        %v2332 = vmax.f32 %v2235, %v2299
        %v2333 = vmax.f32 %v2236, %v2300
        %v2334 = vmax.f32 %v2237, %v2301
        %v2335 = vmax.f32 %v2238, %v2302
        %v2336 = vmax.f32 %v2239, %v2303
        %v2337 = vmax.f32 %v2240, %v2304
        %v2338 = vmax.f32 %v2241, %v2305
        %v2339 = vmax.f32 %v2242, %v2306
        %v2340 = vmax.f32 %v2243, %v2307
        %v2341 = vmax.f32 %v2244, %v2308
        %v2342 = vmax.f32 %v2245, %v2309
        %v2343 = vmax.f32 %v2246, %v2327
        %v2344 = vld [vmem:[%s5] sm:$0xff]
        %v2345 = vld [vmem:[%s5 + $0x8] sm:$0xff]
        %v2346 = vld [vmem:[%s6] sm:$0xff]
        %v2347 = vld [vmem:[%s6 + $0x8] sm:$0xff]
        %2349 = vrot.lane.b32.xlu0 %v2343, 34
        %v2350 = vpop.permute.xlu0 %2349
        %2367 = vrot.lane.b32.xlu0 %v2328, 34
        %v2368 = vpop.permute.xlu0 %2367
        %2369 = vrot.lane.b32.xlu0 %v2329, 34
        %v2370 = vpop.permute.xlu0 %2369
        %2371 = vrot.lane.b32.xlu0 %v2330, 34
        %v2372 = vpop.permute.xlu0 %2371
        %2373 = vrot.lane.b32.xlu0 %v2331, 34
        %v2374 = vpop.permute.xlu0 %2373
        %2375 = vrot.lane.b32.xlu0 %v2332, 34
        %v2376 = vpop.permute.xlu0 %2375
        %2377 = vrot.lane.b32.xlu0 %v2333, 34
        %v2378 = vpop.permute.xlu0 %2377
        %2379 = vrot.lane.b32.xlu0 %v2334, 34
        %v2380 = vpop.permute.xlu0 %2379
        %2381 = vrot.lane.b32.xlu0 %v2335, 34
        %v2382 = vpop.permute.xlu0 %2381
        %2383 = vrot.lane.b32.xlu0 %v2336, 34
        %v2384 = vpop.permute.xlu0 %2383
        %2385 = vrot.lane.b32.xlu0 %v2337, 34
        %v2386 = vpop.permute.xlu0 %2385
        %2387 = vrot.lane.b32.xlu0 %v2338, 34
        %v2388 = vpop.permute.xlu0 %2387
        %2389 = vrot.lane.b32.xlu0 %v2339, 34
        %v2390 = vpop.permute.xlu0 %2389
        %2391 = vrot.lane.b32.xlu0 %v2340, 34
        %v2392 = vpop.permute.xlu0 %2391
        %2393 = vrot.lane.b32.xlu0 %v2341, 34
        %v2394 = vpop.permute.xlu0 %2393
        %2395 = vrot.lane.b32.xlu0 %v2342, 34
        %v2396 = vpop.permute.xlu0 %2395
        %vm2397 = vcmask 277504
        %v2398 = vsel %vm2397, %v2368, %v2370
        %v2399 = vsel %vm2397, %v2370, %v2372
        %v2400 = vsel %vm2397, %v2372, %v2374
        %v2401 = vsel %vm2397, %v2374, %v2376
        %v2402 = vsel %vm2397, %v2376, %v2378
        %v2403 = vsel %vm2397, %v2378, %v2380
        %v2404 = vsel %vm2397, %v2380, %v2382
        %v2405 = vsel %vm2397, %v2382, %v2384
        %v2406 = vsel %vm2397, %v2384, %v2386
        %v2407 = vsel %vm2397, %v2386, %v2388
        %v2408 = vsel %vm2397, %v2388, %v2390
        %v2409 = vsel %vm2397, %v2390, %v2392
        %v2410 = vsel %vm2397, %v2392, %v2394
        %v2411 = vsel %vm2397, %v2394, %v2396
        %v2412 = vsel %vm2397, %v2396, %v2350
        %v2429 = vsel %vm2397, %v2350, %v2368
        %v2430 = vperm.slane %v418, 0
        %v2431 = vperm.slane %v419, 0
        %v2432 = vperm.slane %v420, 0
        %v2433 = vperm.slane %v421, 0
        %v2434 = vperm.slane %v422, 0
        %v2435 = vperm.slane %v423, 0
        %v2436 = vperm.slane %v424, 0
        %v2437 = vperm.slane %v425, 0
        %v2438 = vperm.slane %v426, 0
        %v2439 = vperm.slane %v427, 0
        %v2440 = vperm.slane %v428, 0
        %v2441 = vperm.slane %v429, 0
        %v2442 = vperm.slane %v430, 0
        %v2443 = vperm.slane %v431, 0
        %v2444 = vperm.slane %v432, 0
        %v2445 = vperm.slane %v433, 0
        %v2446 = vmul.f32 %v2429, %v2430
        %v2447 = vmul.f32 %v2398, %v2431
        %v2448 = vmul.f32 %v2399, %v2432
        %v2449 = vmul.f32 %v2400, %v2433
        %v2450 = vmul.f32 %v2401, %v2434
        %v2451 = vmul.f32 %v2402, %v2435
        %v2452 = vmul.f32 %v2403, %v2436
        %v2453 = vmul.f32 %v2404, %v2437
        %v2454 = vmul.f32 %v2405, %v2438
        %v2455 = vmul.f32 %v2406, %v2439
        %v2456 = vmul.f32 %v2407, %v2440
        %v2457 = vmul.f32 %v2408, %v2441
        %v2458 = vmul.f32 %v2409, %v2442
        %v2459 = vmul.f32 %v2410, %v2443
        %v2460 = vmul.f32 %v2411, %v2444
        %v2461 = vmul.f32 %v2412, %v2445
        %2462 = vrot.lane.b32.xlu0 %v2343, 32
        %v2463 = vpop.permute.xlu0 %2462
        %2465 = vrot.lane.b32.xlu0 %v2328, 32
        %v2466 = vpop.permute.xlu0 %2465
        %2467 = vrot.lane.b32.xlu0 %v2329, 32
        %v2468 = vpop.permute.xlu0 %2467
        %2469 = vrot.lane.b32.xlu0 %v2330, 32
        %v2470 = vpop.permute.xlu0 %2469
        %2471 = vrot.lane.b32.xlu0 %v2331, 32
        %v2472 = vpop.permute.xlu0 %2471
        %2473 = vrot.lane.b32.xlu0 %v2332, 32
        %v2474 = vpop.permute.xlu0 %2473
        %2475 = vrot.lane.b32.xlu0 %v2333, 32
        %v2476 = vpop.permute.xlu0 %2475
        %2477 = vrot.lane.b32.xlu0 %v2334, 32
        %v2478 = vpop.permute.xlu0 %2477
        %2479 = vrot.lane.b32.xlu0 %v2335, 32
        %v2480 = vpop.permute.xlu0 %2479
        %2481 = vrot.lane.b32.xlu0 %v2336, 32
        %v2482 = vpop.permute.xlu0 %2481
        %2483 = vrot.lane.b32.xlu0 %v2337, 32
        %v2484 = vpop.permute.xlu0 %2483
        %2485 = vrot.lane.b32.xlu0 %v2338, 32
        %v2486 = vpop.permute.xlu0 %2485
        %2487 = vrot.lane.b32.xlu0 %v2339, 32
        %v2488 = vpop.permute.xlu0 %2487
        %2489 = vrot.lane.b32.xlu0 %v2340, 32
        %v2490 = vpop.permute.xlu0 %2489
        %2491 = vrot.lane.b32.xlu0 %v2341, 32
        %v2492 = vpop.permute.xlu0 %2491
        %2493 = vrot.lane.b32.xlu0 %v2342, 32
        %v2494 = vpop.permute.xlu0 %2493
        %vm2495 = vcmask 261120
        %v2496 = vsel %vm2495, %v2466, %v2468
        %v2497 = vsel %vm2495, %v2468, %v2470
        %v2498 = vsel %vm2495, %v2470, %v2472
        %v2499 = vsel %vm2495, %v2472, %v2474
        %v2500 = vsel %vm2495, %v2474, %v2476
        %v2501 = vsel %vm2495, %v2476, %v2478
        %v2502 = vsel %vm2495, %v2478, %v2480
        %v2503 = vsel %vm2495, %v2480, %v2482
        %v2504 = vsel %vm2495, %v2482, %v2484
        %v2505 = vsel %vm2495, %v2484, %v2486
        %v2506 = vsel %vm2495, %v2486, %v2488
        %v2507 = vsel %vm2495, %v2488, %v2490
        %v2508 = vsel %vm2495, %v2490, %v2492
        %v2509 = vsel %vm2495, %v2492, %v2494
        %v2510 = vsel %vm2495, %v2494, %v2463
        %v2527 = vsel %vm2495, %v2463, %v2466
        %v2528 = vperm.slane %v418, 1
        %v2529 = vperm.slane %v419, 1
        %v2530 = vperm.slane %v420, 1
        %v2531 = vperm.slane %v421, 1
        %v2532 = vperm.slane %v422, 1
        %v2533 = vperm.slane %v423, 1
        %v2534 = vperm.slane %v424, 1
        %v2535 = vperm.slane %v425, 1
        %v2536 = vperm.slane %v426, 1
        %v2537 = vperm.slane %v427, 1
        %v2538 = vperm.slane %v428, 1
        %v2539 = vperm.slane %v429, 1
        %v2540 = vperm.slane %v430, 1
        %v2541 = vperm.slane %v431, 1
        %v2542 = vperm.slane %v432, 1
        %v2543 = vperm.slane %v433, 1
        %v2544 = vmul.f32 %v2527, %v2528
        %v2545 = vmul.f32 %v2496, %v2529
        %v2546 = vmul.f32 %v2497, %v2530
        %v2547 = vmul.f32 %v2498, %v2531
        %v2548 = vmul.f32 %v2499, %v2532
        %v2549 = vmul.f32 %v2500, %v2533
        %v2550 = vmul.f32 %v2501, %v2534
        %v2551 = vmul.f32 %v2502, %v2535
        %v2552 = vmul.f32 %v2503, %v2536
        %v2553 = vmul.f32 %v2504, %v2537
        %v2554 = vmul.f32 %v2505, %v2538
        %v2555 = vmul.f32 %v2506, %v2539
        %v2556 = vmul.f32 %v2507, %v2540
        %v2557 = vmul.f32 %v2508, %v2541
        %v2558 = vmul.f32 %v2509, %v2542
        %v2559 = vmul.f32 %v2510, %v2543
        %2560 = vrot.lane.b32.xlu0 %v2343, 30
        %v2561 = vpop.permute.xlu0 %2560
        %2563 = vrot.lane.b32.xlu0 %v2328, 30
        %v2564 = vpop.permute.xlu0 %2563
        %2565 = vrot.lane.b32.xlu0 %v2329, 30
        %v2566 = vpop.permute.xlu0 %2565
        %2567 = vrot.lane.b32.xlu0 %v2330, 30
        %v2568 = vpop.permute.xlu0 %2567
        %2569 = vrot.lane.b32.xlu0 %v2331, 30
        %v2570 = vpop.permute.xlu0 %2569
        %2571 = vrot.lane.b32.xlu0 %v2332, 30
        %v2572 = vpop.permute.xlu0 %2571
        %2573 = vrot.lane.b32.xlu0 %v2333, 30
        %v2574 = vpop.permute.xlu0 %2573
        %2575 = vrot.lane.b32.xlu0 %v2334, 30
        %v2576 = vpop.permute.xlu0 %2575
        %2577 = vrot.lane.b32.xlu0 %v2335, 30
        %v2578 = vpop.permute.xlu0 %2577
        %2579 = vrot.lane.b32.xlu0 %v2336, 30
        %v2580 = vpop.permute.xlu0 %2579
        %2581 = vrot.lane.b32.xlu0 %v2337, 30
        %v2582 = vpop.permute.xlu0 %2581
        %2583 = vrot.lane.b32.xlu0 %v2338, 30
        %v2584 = vpop.permute.xlu0 %2583
        %2585 = vrot.lane.b32.xlu0 %v2339, 30
        %v2586 = vpop.permute.xlu0 %2585
        %2587 = vrot.lane.b32.xlu0 %v2340, 30
        %v2588 = vpop.permute.xlu0 %2587
        %2589 = vrot.lane.b32.xlu0 %v2341, 30
        %v2590 = vpop.permute.xlu0 %2589
        %2591 = vrot.lane.b32.xlu0 %v2342, 30
        %v2592 = vpop.permute.xlu0 %2591
        %vm2593 = vcmask 244736
        %v2594 = vsel %vm2593, %v2564, %v2566
        %v2595 = vsel %vm2593, %v2566, %v2568
        %v2596 = vsel %vm2593, %v2568, %v2570
        %v2597 = vsel %vm2593, %v2570, %v2572
        %v2598 = vsel %vm2593, %v2572, %v2574
        %v2599 = vsel %vm2593, %v2574, %v2576
        %v2600 = vsel %vm2593, %v2576, %v2578
        %v2601 = vsel %vm2593, %v2578, %v2580
        %v2602 = vsel %vm2593, %v2580, %v2582
        %v2603 = vsel %vm2593, %v2582, %v2584
        %v2604 = vsel %vm2593, %v2584, %v2586
        %v2605 = vsel %vm2593, %v2586, %v2588
        %v2606 = vsel %vm2593, %v2588, %v2590
        %v2607 = vsel %vm2593, %v2590, %v2592
        %v2608 = vsel %vm2593, %v2592, %v2561
        %v2625 = vsel %vm2593, %v2561, %v2564
        %v2626 = vperm.slane %v418, 2
        %v2627 = vperm.slane %v419, 2
        %v2628 = vperm.slane %v420, 2
        %v2629 = vperm.slane %v421, 2
        %v2630 = vperm.slane %v422, 2
        %v2631 = vperm.slane %v423, 2
        %v2632 = vperm.slane %v424, 2
        %v2633 = vperm.slane %v425, 2
        %v2634 = vperm.slane %v426, 2
        %v2635 = vperm.slane %v427, 2
        %v2636 = vperm.slane %v428, 2
        %v2637 = vperm.slane %v429, 2
        %v2638 = vperm.slane %v430, 2
        %v2639 = vperm.slane %v431, 2
        %v2640 = vperm.slane %v432, 2
        %v2641 = vperm.slane %v433, 2
        %v2642 = vmul.f32 %v2625, %v2626
        %v2643 = vmul.f32 %v2594, %v2627
        %v2644 = vmul.f32 %v2595, %v2628
        %v2645 = vmul.f32 %v2596, %v2629
        %v2646 = vmul.f32 %v2597, %v2630
        %v2647 = vmul.f32 %v2598, %v2631
        %v2648 = vmul.f32 %v2599, %v2632
        %v2649 = vmul.f32 %v2600, %v2633
        %v2650 = vmul.f32 %v2601, %v2634
        %v2651 = vmul.f32 %v2602, %v2635
        %v2652 = vmul.f32 %v2603, %v2636
        %v2653 = vmul.f32 %v2604, %v2637
        %v2654 = vmul.f32 %v2605, %v2638
        %v2655 = vmul.f32 %v2606, %v2639
        %v2656 = vmul.f32 %v2607, %v2640
        %v2657 = vmul.f32 %v2608, %v2641
        %2658 = vrot.lane.b32.xlu0 %v2343, 2
        %v2659 = vpop.permute.xlu0 %2658
        %2661 = vrot.lane.b32.xlu0 %v2328, 2
        %v2662 = vpop.permute.xlu0 %2661
        %2663 = vrot.lane.b32.xlu0 %v2329, 2
        %v2664 = vpop.permute.xlu0 %2663
        %2665 = vrot.lane.b32.xlu0 %v2330, 2
        %v2666 = vpop.permute.xlu0 %2665
        %2667 = vrot.lane.b32.xlu0 %v2331, 2
        %v2668 = vpop.permute.xlu0 %2667
        %2669 = vrot.lane.b32.xlu0 %v2332, 2
        %v2670 = vpop.permute.xlu0 %2669
        %2671 = vrot.lane.b32.xlu0 %v2333, 2
        %v2672 = vpop.permute.xlu0 %2671
        %2673 = vrot.lane.b32.xlu0 %v2334, 2
        %v2674 = vpop.permute.xlu0 %2673
        %2675 = vrot.lane.b32.xlu0 %v2335, 2
        %v2676 = vpop.permute.xlu0 %2675
        %2677 = vrot.lane.b32.xlu0 %v2336, 2
        %v2678 = vpop.permute.xlu0 %2677
        %2679 = vrot.lane.b32.xlu0 %v2337, 2
        %v2680 = vpop.permute.xlu0 %2679
        %2681 = vrot.lane.b32.xlu0 %v2338, 2
        %v2682 = vpop.permute.xlu0 %2681
        %2683 = vrot.lane.b32.xlu0 %v2339, 2
        %v2684 = vpop.permute.xlu0 %2683
        %2685 = vrot.lane.b32.xlu0 %v2340, 2
        %v2686 = vpop.permute.xlu0 %2685
        %2687 = vrot.lane.b32.xlu0 %v2341, 2
        %v2688 = vpop.permute.xlu0 %2687
        %2689 = vrot.lane.b32.xlu0 %v2342, 2
        %v2690 = vpop.permute.xlu0 %2689
        %vm2691 = vcmask 15360
        %v2692 = vsel %vm2691, %v2662, %v2664
        %v2693 = vsel %vm2691, %v2664, %v2666
        %v2694 = vsel %vm2691, %v2666, %v2668
        %v2695 = vsel %vm2691, %v2668, %v2670
        %v2696 = vsel %vm2691, %v2670, %v2672
        %v2697 = vsel %vm2691, %v2672, %v2674
        %v2698 = vsel %vm2691, %v2674, %v2676
        %v2699 = vsel %vm2691, %v2676, %v2678
        %v2700 = vsel %vm2691, %v2678, %v2680
        %v2701 = vsel %vm2691, %v2680, %v2682
        %v2702 = vsel %vm2691, %v2682, %v2684
        %v2703 = vsel %vm2691, %v2684, %v2686
        %v2704 = vsel %vm2691, %v2686, %v2688
        %v2705 = vsel %vm2691, %v2688, %v2690
        %v2706 = vsel %vm2691, %v2690, %v2659
        %v2723 = vsel %vm2691, %v2659, %v2662
        %v2724 = vperm.slane %v418, 3
        %v2725 = vperm.slane %v419, 3
        %v2726 = vperm.slane %v420, 3
        %v2727 = vperm.slane %v421, 3
        %v2728 = vperm.slane %v422, 3
        %v2729 = vperm.slane %v423, 3
        %v2730 = vperm.slane %v424, 3
        %v2731 = vperm.slane %v425, 3
        %v2732 = vperm.slane %v426, 3
        %v2733 = vperm.slane %v427, 3
        %v2734 = vperm.slane %v428, 3
        %v2735 = vperm.slane %v429, 3
        %v2736 = vperm.slane %v430, 3
        %v2737 = vperm.slane %v431, 3
        %v2738 = vperm.slane %v432, 3
        %v2739 = vperm.slane %v433, 3
        %v2740 = vmul.f32 %v2723, %v2724
        %v2741 = vmul.f32 %v2692, %v2725
        %v2742 = vmul.f32 %v2693, %v2726
        %v2743 = vmul.f32 %v2694, %v2727
        %v2744 = vmul.f32 %v2695, %v2728
        %v2745 = vmul.f32 %v2696, %v2729
        %v2746 = vmul.f32 %v2697, %v2730
        %v2747 = vmul.f32 %v2698, %v2731
        %v2748 = vmul.f32 %v2699, %v2732
        %v2749 = vmul.f32 %v2700, %v2733
        %v2750 = vmul.f32 %v2701, %v2734
        %v2751 = vmul.f32 %v2702, %v2735
        %v2752 = vmul.f32 %v2703, %v2736
        %v2753 = vmul.f32 %v2704, %v2737
        %v2754 = vmul.f32 %v2705, %v2738
        %v2755 = vmul.f32 %v2706, %v2739
        %2756 = vrot.lane.b32.xlu0 %v2328, 126
        %v2757 = vpop.permute.xlu0 %2756
        %2758 = vrot.lane.b32.xlu0 %v2329, 126
        %v2759 = vpop.permute.xlu0 %2758
        %2760 = vrot.lane.b32.xlu0 %v2330, 126
        %v2761 = vpop.permute.xlu0 %2760
        %2762 = vrot.lane.b32.xlu0 %v2331, 126
        %v2763 = vpop.permute.xlu0 %2762
        %2764 = vrot.lane.b32.xlu0 %v2332, 126
        %v2765 = vpop.permute.xlu0 %2764
        %2766 = vrot.lane.b32.xlu0 %v2333, 126
        %v2767 = vpop.permute.xlu0 %2766
        %2768 = vrot.lane.b32.xlu0 %v2334, 126
        %v2769 = vpop.permute.xlu0 %2768
        %2770 = vrot.lane.b32.xlu0 %v2335, 126
        %v2771 = vpop.permute.xlu0 %2770
        %2772 = vrot.lane.b32.xlu0 %v2336, 126
        %v2773 = vpop.permute.xlu0 %2772
        %2774 = vrot.lane.b32.xlu0 %v2337, 126
        %v2775 = vpop.permute.xlu0 %2774
        %2776 = vrot.lane.b32.xlu0 %v2338, 126
        %v2777 = vpop.permute.xlu0 %2776
        %2778 = vrot.lane.b32.xlu0 %v2339, 126
        %v2779 = vpop.permute.xlu0 %2778
        %2780 = vrot.lane.b32.xlu0 %v2340, 126
        %v2781 = vpop.permute.xlu0 %2780
        %2782 = vrot.lane.b32.xlu0 %v2341, 126
        %v2783 = vpop.permute.xlu0 %2782
        %2784 = vrot.lane.b32.xlu0 %v2342, 126
        %v2785 = vpop.permute.xlu0 %2784
        %2786 = vrot.lane.b32.xlu0 %v2343, 126
        %v2787 = vpop.permute.xlu0 %2786
        %vm2788 = vcmask 1031168
        %v2789 = vsel %vm2788, %v2757, %v2759
        %v2790 = vsel %vm2788, %v2759, %v2761
        %v2791 = vsel %vm2788, %v2761, %v2763
        %v2792 = vsel %vm2788, %v2763, %v2765
        %v2793 = vsel %vm2788, %v2765, %v2767
        %v2794 = vsel %vm2788, %v2767, %v2769
        %v2795 = vsel %vm2788, %v2769, %v2771
        %v2796 = vsel %vm2788, %v2771, %v2773
        %v2797 = vsel %vm2788, %v2773, %v2775
        %v2798 = vsel %vm2788, %v2775, %v2777
        %v2799 = vsel %vm2788, %v2777, %v2779
        %v2800 = vsel %vm2788, %v2779, %v2781
        %v2801 = vsel %vm2788, %v2781, %v2783
        %v2802 = vsel %vm2788, %v2783, %v2785
        %v2803 = vsel %vm2788, %v2785, %v2787
        %v2821 = vsel %vm2788, %v2787, %v2757
        %v2822 = vperm.slane %v418, 5
        %v2823 = vperm.slane %v419, 5
        %v2824 = vperm.slane %v420, 5
        %v2825 = vperm.slane %v421, 5
        %v2826 = vperm.slane %v422, 5
        %v2827 = vperm.slane %v423, 5
        %v2828 = vperm.slane %v424, 5
        %v2829 = vperm.slane %v425, 5
        %v2830 = vperm.slane %v426, 5
        %v2831 = vperm.slane %v427, 5
        %v2832 = vperm.slane %v428, 5
        %v2833 = vperm.slane %v429, 5
        %v2834 = vperm.slane %v430, 5
        %v2835 = vperm.slane %v431, 5
        %v2836 = vperm.slane %v432, 5
        %v2837 = vperm.slane %v433, 5
        %v2838 = vmul.f32 %v2789, %v2822
        %v2839 = vmul.f32 %v2790, %v2823
        %v2840 = vmul.f32 %v2791, %v2824
        %v2841 = vmul.f32 %v2792, %v2825
        %v2842 = vmul.f32 %v2793, %v2826
        %v2843 = vmul.f32 %v2794, %v2827
        %v2844 = vmul.f32 %v2795, %v2828
        %v2845 = vmul.f32 %v2796, %v2829
        %v2846 = vmul.f32 %v2797, %v2830
        %v2847 = vmul.f32 %v2798, %v2831
        %v2848 = vmul.f32 %v2799, %v2832
        %v2849 = vmul.f32 %v2800, %v2833
        %v2850 = vmul.f32 %v2801, %v2834
        %v2851 = vmul.f32 %v2802, %v2835
        %v2852 = vmul.f32 %v2803, %v2836
        %v2853 = vmul.f32 %v2821, %v2837
        %2854 = vrot.lane.b32.xlu0 %v2328, 98
        %v2855 = vpop.permute.xlu0 %2854
        %2856 = vrot.lane.b32.xlu0 %v2329, 98
        %v2857 = vpop.permute.xlu0 %2856
        %2858 = vrot.lane.b32.xlu0 %v2330, 98
        %v2859 = vpop.permute.xlu0 %2858
        %2860 = vrot.lane.b32.xlu0 %v2331, 98
        %v2861 = vpop.permute.xlu0 %2860
        %2862 = vrot.lane.b32.xlu0 %v2332, 98
        %v2863 = vpop.permute.xlu0 %2862
        %2864 = vrot.lane.b32.xlu0 %v2333, 98
        %v2865 = vpop.permute.xlu0 %2864
        %2866 = vrot.lane.b32.xlu0 %v2334, 98
        %v2867 = vpop.permute.xlu0 %2866
        %2868 = vrot.lane.b32.xlu0 %v2335, 98
        %v2869 = vpop.permute.xlu0 %2868
        %2870 = vrot.lane.b32.xlu0 %v2336, 98
        %v2871 = vpop.permute.xlu0 %2870
        %2872 = vrot.lane.b32.xlu0 %v2337, 98
        %v2873 = vpop.permute.xlu0 %2872
        %2874 = vrot.lane.b32.xlu0 %v2338, 98
        %v2875 = vpop.permute.xlu0 %2874
        %2876 = vrot.lane.b32.xlu0 %v2339, 98
        %v2877 = vpop.permute.xlu0 %2876
        %2878 = vrot.lane.b32.xlu0 %v2340, 98
        %v2879 = vpop.permute.xlu0 %2878
        %2880 = vrot.lane.b32.xlu0 %v2341, 98
        %v2881 = vpop.permute.xlu0 %2880
        %2882 = vrot.lane.b32.xlu0 %v2342, 98
        %v2883 = vpop.permute.xlu0 %2882
        %2884 = vrot.lane.b32.xlu0 %v2343, 98
        %v2885 = vpop.permute.xlu0 %2884
        %vm2886 = vcmask 801792
        %v2887 = vsel %vm2886, %v2855, %v2857
        %v2888 = vsel %vm2886, %v2857, %v2859
        %v2889 = vsel %vm2886, %v2859, %v2861
        %v2890 = vsel %vm2886, %v2861, %v2863
        %v2891 = vsel %vm2886, %v2863, %v2865
        %v2892 = vsel %vm2886, %v2865, %v2867
        %v2893 = vsel %vm2886, %v2867, %v2869
        %v2894 = vsel %vm2886, %v2869, %v2871
        %v2895 = vsel %vm2886, %v2871, %v2873
        %v2896 = vsel %vm2886, %v2873, %v2875
        %v2897 = vsel %vm2886, %v2875, %v2877
        %v2898 = vsel %vm2886, %v2877, %v2879
        %v2899 = vsel %vm2886, %v2879, %v2881
        %v2900 = vsel %vm2886, %v2881, %v2883
        %v2901 = vsel %vm2886, %v2883, %v2885
        %v2919 = vsel %vm2886, %v2885, %v2855
        %v2920 = vperm.slane %v418, 6
        %v2921 = vperm.slane %v419, 6
        %v2922 = vperm.slane %v420, 6
        %v2923 = vperm.slane %v421, 6
        %v2924 = vperm.slane %v422, 6
        %v2925 = vperm.slane %v423, 6
        %v2926 = vperm.slane %v424, 6
        %v2927 = vperm.slane %v425, 6
        %v2928 = vperm.slane %v426, 6
        %v2929 = vperm.slane %v427, 6
        %v2930 = vperm.slane %v428, 6
        %v2931 = vperm.slane %v429, 6
        %v2932 = vperm.slane %v430, 6
        %v2933 = vperm.slane %v431, 6
        %v2934 = vperm.slane %v432, 6
        %v2935 = vperm.slane %v433, 6
        %v2936 = vmul.f32 %v2887, %v2920
        %v2937 = vmul.f32 %v2888, %v2921
        %v2938 = vmul.f32 %v2889, %v2922
        %v2939 = vmul.f32 %v2890, %v2923
        %v2940 = vmul.f32 %v2891, %v2924
        %v2941 = vmul.f32 %v2892, %v2925
        %v2942 = vmul.f32 %v2893, %v2926
        %v2943 = vmul.f32 %v2894, %v2927
        %v2944 = vmul.f32 %v2895, %v2928
        %v2945 = vmul.f32 %v2896, %v2929
        %v2946 = vmul.f32 %v2897, %v2930
        %v2947 = vmul.f32 %v2898, %v2931
        %v2948 = vmul.f32 %v2899, %v2932
        %v2949 = vmul.f32 %v2900, %v2933
        %v2950 = vmul.f32 %v2901, %v2934
        %v2951 = vmul.f32 %v2919, %v2935
        %2952 = vrot.lane.b32.xlu0 %v2328, 96
        %v2953 = vpop.permute.xlu0 %2952
        %2954 = vrot.lane.b32.xlu0 %v2329, 96
        %v2955 = vpop.permute.xlu0 %2954
        %2956 = vrot.lane.b32.xlu0 %v2330, 96
        %v2957 = vpop.permute.xlu0 %2956
        %2958 = vrot.lane.b32.xlu0 %v2331, 96
        %v2959 = vpop.permute.xlu0 %2958
        %2960 = vrot.lane.b32.xlu0 %v2332, 96
        %v2961 = vpop.permute.xlu0 %2960
        %2962 = vrot.lane.b32.xlu0 %v2333, 96
        %v2963 = vpop.permute.xlu0 %2962
        %2964 = vrot.lane.b32.xlu0 %v2334, 96
        %v2965 = vpop.permute.xlu0 %2964
        %2966 = vrot.lane.b32.xlu0 %v2335, 96
        %v2967 = vpop.permute.xlu0 %2966
        %2968 = vrot.lane.b32.xlu0 %v2336, 96
        %v2969 = vpop.permute.xlu0 %2968
        %2970 = vrot.lane.b32.xlu0 %v2337, 96
        %v2971 = vpop.permute.xlu0 %2970
        %2972 = vrot.lane.b32.xlu0 %v2338, 96
        %v2973 = vpop.permute.xlu0 %2972
        %2974 = vrot.lane.b32.xlu0 %v2339, 96
        %v2975 = vpop.permute.xlu0 %2974
        %2976 = vrot.lane.b32.xlu0 %v2340, 96
        %v2977 = vpop.permute.xlu0 %2976
        %2978 = vrot.lane.b32.xlu0 %v2341, 96
        %v2979 = vpop.permute.xlu0 %2978
        %2980 = vrot.lane.b32.xlu0 %v2342, 96
        %v2981 = vpop.permute.xlu0 %2980
        %2982 = vrot.lane.b32.xlu0 %v2343, 96
        %v2983 = vpop.permute.xlu0 %2982
        %vm2984 = vcmask 785408
        %v2985 = vsel %vm2984, %v2953, %v2955
        %v2986 = vsel %vm2984, %v2955, %v2957
        %v2987 = vsel %vm2984, %v2957, %v2959
        %v2988 = vsel %vm2984, %v2959, %v2961
        %v2989 = vsel %vm2984, %v2961, %v2963
        %v2990 = vsel %vm2984, %v2963, %v2965
        %v2991 = vsel %vm2984, %v2965, %v2967
        %v2992 = vsel %vm2984, %v2967, %v2969
        %v2993 = vsel %vm2984, %v2969, %v2971
        %v2994 = vsel %vm2984, %v2971, %v2973
        %v2995 = vsel %vm2984, %v2973, %v2975
        %v2996 = vsel %vm2984, %v2975, %v2977
        %v2997 = vsel %vm2984, %v2977, %v2979
        %v2998 = vsel %vm2984, %v2979, %v2981
        %v2999 = vsel %vm2984, %v2981, %v2983
        %v3017 = vsel %vm2984, %v2983, %v2953
        %v3018 = vperm.slane %v418, 7
        %v3019 = vperm.slane %v419, 7
        %v3020 = vperm.slane %v420, 7
        %v3021 = vperm.slane %v421, 7
        %v3022 = vperm.slane %v422, 7
        %v3023 = vperm.slane %v423, 7
        %v3024 = vperm.slane %v424, 7
        %v3025 = vperm.slane %v425, 7
        %v3026 = vperm.slane %v426, 7
        %v3027 = vperm.slane %v427, 7
        %v3028 = vperm.slane %v428, 7
        %v3029 = vperm.slane %v429, 7
        %v3030 = vperm.slane %v430, 7
        %v3031 = vperm.slane %v431, 7
        %v3032 = vperm.slane %v432, 7
        %v3033 = vperm.slane %v433, 7
        %v3034 = vmul.f32 %v2985, %v3018
        %v3035 = vmul.f32 %v2986, %v3019
        %v3036 = vmul.f32 %v2987, %v3020
        %v3037 = vmul.f32 %v2988, %v3021
        %v3038 = vmul.f32 %v2989, %v3022
        %v3039 = vmul.f32 %v2990, %v3023
        %v3040 = vmul.f32 %v2991, %v3024
        %v3041 = vmul.f32 %v2992, %v3025
        %v3042 = vmul.f32 %v2993, %v3026
        %v3043 = vmul.f32 %v2994, %v3027
        %v3044 = vmul.f32 %v2995, %v3028
        %v3045 = vmul.f32 %v2996, %v3029
        %v3046 = vmul.f32 %v2997, %v3030
        %v3047 = vmul.f32 %v2998, %v3031
        %v3048 = vmul.f32 %v2999, %v3032
        %v3049 = vmul.f32 %v3017, %v3033
        %3050 = vrot.lane.b32.xlu0 %v2328, 94
        %v3051 = vpop.permute.xlu0 %3050
        %3052 = vrot.lane.b32.xlu0 %v2329, 94
        %v3053 = vpop.permute.xlu0 %3052
        %3054 = vrot.lane.b32.xlu0 %v2330, 94
        %v3055 = vpop.permute.xlu0 %3054
        %3056 = vrot.lane.b32.xlu0 %v2331, 94
        %v3057 = vpop.permute.xlu0 %3056
        %3058 = vrot.lane.b32.xlu0 %v2332, 94
        %v3059 = vpop.permute.xlu0 %3058
        %3060 = vrot.lane.b32.xlu0 %v2333, 94
        %v3061 = vpop.permute.xlu0 %3060
        %3062 = vrot.lane.b32.xlu0 %v2334, 94
        %v3063 = vpop.permute.xlu0 %3062
        %3064 = vrot.lane.b32.xlu0 %v2335, 94
        %v3065 = vpop.permute.xlu0 %3064
        %3066 = vrot.lane.b32.xlu0 %v2336, 94
        %v3067 = vpop.permute.xlu0 %3066
        %3068 = vrot.lane.b32.xlu0 %v2337, 94
        %v3069 = vpop.permute.xlu0 %3068
        %3070 = vrot.lane.b32.xlu0 %v2338, 94
        %v3071 = vpop.permute.xlu0 %3070
        %3072 = vrot.lane.b32.xlu0 %v2339, 94
        %v3073 = vpop.permute.xlu0 %3072
        %3074 = vrot.lane.b32.xlu0 %v2340, 94
        %v3075 = vpop.permute.xlu0 %3074
        %3076 = vrot.lane.b32.xlu0 %v2341, 94
        %v3077 = vpop.permute.xlu0 %3076
        %3078 = vrot.lane.b32.xlu0 %v2342, 94
        %v3079 = vpop.permute.xlu0 %3078
        %3080 = vrot.lane.b32.xlu0 %v2343, 94
        %v3081 = vpop.permute.xlu0 %3080
        %vm3082 = vcmask 769024
        %v3083 = vsel %vm3082, %v3051, %v3053
        %v3084 = vsel %vm3082, %v3053, %v3055
        %v3085 = vsel %vm3082, %v3055, %v3057
        %v3086 = vsel %vm3082, %v3057, %v3059
        %v3087 = vsel %vm3082, %v3059, %v3061
        %v3088 = vsel %vm3082, %v3061, %v3063
        %v3089 = vsel %vm3082, %v3063, %v3065
        %v3090 = vsel %vm3082, %v3065, %v3067
        %v3091 = vsel %vm3082, %v3067, %v3069
        %v3092 = vsel %vm3082, %v3069, %v3071
        %v3093 = vsel %vm3082, %v3071, %v3073
        %v3094 = vsel %vm3082, %v3073, %v3075
        %v3095 = vsel %vm3082, %v3075, %v3077
        %v3096 = vsel %vm3082, %v3077, %v3079
        %v3097 = vsel %vm3082, %v3079, %v3081
        %v3115 = vsel %vm3082, %v3081, %v3051
        %v3116 = vperm.slane %v434, 0
        %v3117 = vperm.slane %v435, 0
        %v3118 = vperm.slane %v436, 0
        %v3119 = vperm.slane %v437, 0
        %v3120 = vperm.slane %v438, 0
        %v3121 = vperm.slane %v439, 0
        %v3122 = vperm.slane %v440, 0
        %v3123 = vperm.slane %v441, 0
        %v3124 = vperm.slane %v442, 0
        %v3125 = vperm.slane %v443, 0
        %v3126 = vperm.slane %v444, 0
        %v3127 = vperm.slane %v445, 0
        %v3128 = vperm.slane %v446, 0
        %v3129 = vperm.slane %v447, 0
        %v3130 = vperm.slane %v448, 0
        %v3131 = vperm.slane %v449, 0
        %v3132 = vmul.f32 %v3083, %v3116
        %v3133 = vmul.f32 %v3084, %v3117
        %v3134 = vmul.f32 %v3085, %v3118
        %v3135 = vmul.f32 %v3086, %v3119
        %v3136 = vmul.f32 %v3087, %v3120
        %v3137 = vmul.f32 %v3088, %v3121
        %v3138 = vmul.f32 %v3089, %v3122
        %v3139 = vmul.f32 %v3090, %v3123
        %v3140 = vmul.f32 %v3091, %v3124
        %v3141 = vmul.f32 %v3092, %v3125
        %v3142 = vmul.f32 %v3093, %v3126
        %v3143 = vmul.f32 %v3094, %v3127
        %v3144 = vmul.f32 %v3095, %v3128
        %v3145 = vmul.f32 %v3096, %v3129
        %v3146 = vmul.f32 %v3097, %v3130
        %v3147 = vmul.f32 %v3115, %v3131
        %3149 = vset.pattern.permute.xlu0 0
        %3150 = vperm.xlu0 %3149, %v2346
        %v3151 = vpop.permute.xlu0 %3150
        %3154 = vset.pattern.permute.xlu0 0
        %3155 = vperm.xlu0 %3154, %v2347
        %v3156 = vpop.permute.xlu0 %3155
        %vm3158 = vcmask 588800
        %v3160 = vsel %vm3158, %v2344, 0
        %v3163 = vsel %vm3158, %v2345, 0
        %3165 = vmatpush.msra.mxu0 0.0
        %3166 = vmatpush.msra.mxu0 0.0
        %3167 = vmatpush.msra.mxu0 0.0
        %3168 = vmatpush.msra.mxu0 0.0
        %3169 = vmatpush.msra.mxu0 0.0
        %3170 = vmatpush.msra.mxu0 0.0
        %3171 = vmatpush.msra.mxu0 0.0
        %3172 = vmatpush.msra.mxu0 %v3132
        %3173 = vmatpush.msra.mxu0 %v3034
        %3174 = vmatpush.msra.mxu0 %v2936
        %3175 = vmatpush.msra.mxu0 %v2838
        %3176 = vmatpush.msra.mxu0 %v2328
        %3177 = vmatpush.msra.mxu0 %v2740
        %3178 = vmatpush.msra.mxu0 %v2642
        %3179 = vmatpush.msra.mxu0 %v2544
        %3180 = vmatpush.msra.mxu0 %v2446
        %3181 = vmatmul.f32.gmra.mxu0 %v3160
        %v3182 = vpop.f32.mrf.mxu0
        %v3183 = vadd.f32 %v3151, %v3182
        %3184 = vmatmul.f32.gmra.mxu0 %v3163
        %v3185 = vpop.f32.mrf.mxu0
        %v3186 = vadd.f32 %v3156, %v3185
        %3187 = vdwg.mxu0
        %3188 = vmatpush.msra.mxu0 0.0
        %3189 = vmatpush.msra.mxu0 0.0
        %3190 = vmatpush.msra.mxu0 0.0
        %3191 = vmatpush.msra.mxu0 0.0
        %3192 = vmatpush.msra.mxu0 0.0
        %3193 = vmatpush.msra.mxu0 0.0
        %3194 = vmatpush.msra.mxu0 0.0
        %3195 = vmatpush.msra.mxu0 %v3133
        %3196 = vmatpush.msra.mxu0 %v3035
        %3197 = vmatpush.msra.mxu0 %v2937
        %3198 = vmatpush.msra.mxu0 %v2839
        %3199 = vmatpush.msra.mxu0 %v2329
        %3200 = vmatpush.msra.mxu0 %v2741
        %3201 = vmatpush.msra.mxu0 %v2643
        %3202 = vmatpush.msra.mxu0 %v2545
        %3203 = vmatpush.msra.mxu0 %v2447
        %3204 = vmatmul.f32.gmra.mxu0 %v3160
        %v3205 = vpop.f32.mrf.mxu0
        %v3206 = vadd.f32 %v3151, %v3205
        %3207 = vmatmul.f32.gmra.mxu0 %v3163
        %v3208 = vpop.f32.mrf.mxu0
        %v3209 = vadd.f32 %v3156, %v3208
        %3210 = vdwg.mxu0
        %3211 = vmatpush.msra.mxu0 0.0
        %3212 = vmatpush.msra.mxu0 0.0
        %3213 = vmatpush.msra.mxu0 0.0
        %3214 = vmatpush.msra.mxu0 0.0
        %3215 = vmatpush.msra.mxu0 0.0
        %3216 = vmatpush.msra.mxu0 0.0
        %3217 = vmatpush.msra.mxu0 0.0
        %3218 = vmatpush.msra.mxu0 %v3134
        %3219 = vmatpush.msra.mxu0 %v3036
        %3220 = vmatpush.msra.mxu0 %v2938
        %3221 = vmatpush.msra.mxu0 %v2840
        %3222 = vmatpush.msra.mxu0 %v2330
        %3223 = vmatpush.msra.mxu0 %v2742
        %3224 = vmatpush.msra.mxu0 %v2644
        %3225 = vmatpush.msra.mxu0 %v2546
        %3226 = vmatpush.msra.mxu0 %v2448
        %3227 = vmatmul.f32.gmra.mxu0 %v3160
        %v3228 = vpop.f32.mrf.mxu0
        %v3229 = vadd.f32 %v3151, %v3228
        %3230 = vmatmul.f32.gmra.mxu0 %v3163
        %v3231 = vpop.f32.mrf.mxu0
        %v3232 = vadd.f32 %v3156, %v3231
        %3233 = vdwg.mxu0
        %3234 = vmatpush.msra.mxu0 0.0
        %3235 = vmatpush.msra.mxu0 0.0
        %3236 = vmatpush.msra.mxu0 0.0
        %3237 = vmatpush.msra.mxu0 0.0
        %3238 = vmatpush.msra.mxu0 0.0
        %3239 = vmatpush.msra.mxu0 0.0
        %3240 = vmatpush.msra.mxu0 0.0
        %3241 = vmatpush.msra.mxu0 %v3135
        %3242 = vmatpush.msra.mxu0 %v3037
        %3243 = vmatpush.msra.mxu0 %v2939
        %3244 = vmatpush.msra.mxu0 %v2841
        %3245 = vmatpush.msra.mxu0 %v2331
        %3246 = vmatpush.msra.mxu0 %v2743
        %3247 = vmatpush.msra.mxu0 %v2645
        %3248 = vmatpush.msra.mxu0 %v2547
        %3249 = vmatpush.msra.mxu0 %v2449
        %3250 = vmatmul.f32.gmra.mxu0 %v3160
        %v3251 = vpop.f32.mrf.mxu0
        %v3252 = vadd.f32 %v3151, %v3251
        %3253 = vmatmul.f32.gmra.mxu0 %v3163
        %v3254 = vpop.f32.mrf.mxu0
        %v3255 = vadd.f32 %v3156, %v3254
        %3256 = vdwg.mxu0
        %3257 = vmatpush.msra.mxu0 0.0
        %3258 = vmatpush.msra.mxu0 0.0
        %3259 = vmatpush.msra.mxu0 0.0
        %3260 = vmatpush.msra.mxu0 0.0
        %3261 = vmatpush.msra.mxu0 0.0
        %3262 = vmatpush.msra.mxu0 0.0
        %3263 = vmatpush.msra.mxu0 0.0
        %3264 = vmatpush.msra.mxu0 %v3136
        %3265 = vmatpush.msra.mxu0 %v3038
        %3266 = vmatpush.msra.mxu0 %v2940
        %3267 = vmatpush.msra.mxu0 %v2842
        %3268 = vmatpush.msra.mxu0 %v2332
        %3269 = vmatpush.msra.mxu0 %v2744
        %3270 = vmatpush.msra.mxu0 %v2646
        %3271 = vmatpush.msra.mxu0 %v2548
        %3272 = vmatpush.msra.mxu0 %v2450
        %3273 = vmatmul.f32.gmra.mxu0 %v3160
        %v3274 = vpop.f32.mrf.mxu0
        %v3275 = vadd.f32 %v3151, %v3274
        %3276 = vmatmul.f32.gmra.mxu0 %v3163
        %v3277 = vpop.f32.mrf.mxu0
        %v3278 = vadd.f32 %v3156, %v3277
        %3279 = vdwg.mxu0
        %3280 = vmatpush.msra.mxu0 0.0
        %3281 = vmatpush.msra.mxu0 0.0
        %3282 = vmatpush.msra.mxu0 0.0
        %3283 = vmatpush.msra.mxu0 0.0
        %3284 = vmatpush.msra.mxu0 0.0
        %3285 = vmatpush.msra.mxu0 0.0
        %3286 = vmatpush.msra.mxu0 0.0
        %3287 = vmatpush.msra.mxu0 %v3137
        %3288 = vmatpush.msra.mxu0 %v3039
        %3289 = vmatpush.msra.mxu0 %v2941
        %3290 = vmatpush.msra.mxu0 %v2843
        %3291 = vmatpush.msra.mxu0 %v2333
        %3292 = vmatpush.msra.mxu0 %v2745
        %3293 = vmatpush.msra.mxu0 %v2647
        %3294 = vmatpush.msra.mxu0 %v2549
        %3295 = vmatpush.msra.mxu0 %v2451
        %3296 = vmatmul.f32.gmra.mxu0 %v3160
        %v3297 = vpop.f32.mrf.mxu0
        %v3298 = vadd.f32 %v3151, %v3297
        %3299 = vmatmul.f32.gmra.mxu0 %v3163
        %v3300 = vpop.f32.mrf.mxu0
        %v3301 = vadd.f32 %v3156, %v3300
        %3302 = vdwg.mxu0
        %3303 = vmatpush.msra.mxu0 0.0
        %3304 = vmatpush.msra.mxu0 0.0
        %3305 = vmatpush.msra.mxu0 0.0
        %3306 = vmatpush.msra.mxu0 0.0
        %3307 = vmatpush.msra.mxu0 0.0
        %3308 = vmatpush.msra.mxu0 0.0
        %3309 = vmatpush.msra.mxu0 0.0
        %3310 = vmatpush.msra.mxu0 %v3138
        %3311 = vmatpush.msra.mxu0 %v3040
        %3312 = vmatpush.msra.mxu0 %v2942
        %3313 = vmatpush.msra.mxu0 %v2844
        %3314 = vmatpush.msra.mxu0 %v2334
        %3315 = vmatpush.msra.mxu0 %v2746
        %3316 = vmatpush.msra.mxu0 %v2648
        %3317 = vmatpush.msra.mxu0 %v2550
        %3318 = vmatpush.msra.mxu0 %v2452
        %3319 = vmatmul.f32.gmra.mxu0 %v3160
        %v3320 = vpop.f32.mrf.mxu0
        %v3321 = vadd.f32 %v3151, %v3320
        %3322 = vmatmul.f32.gmra.mxu0 %v3163
        %v3323 = vpop.f32.mrf.mxu0
        %v3324 = vadd.f32 %v3156, %v3323
        %3325 = vdwg.mxu0
        %3326 = vmatpush.msra.mxu0 0.0
        %3327 = vmatpush.msra.mxu0 0.0
        %3328 = vmatpush.msra.mxu0 0.0
        %3329 = vmatpush.msra.mxu0 0.0
        %3330 = vmatpush.msra.mxu0 0.0
        %3331 = vmatpush.msra.mxu0 0.0
        %3332 = vmatpush.msra.mxu0 0.0
        %3333 = vmatpush.msra.mxu0 %v3139
        %3334 = vmatpush.msra.mxu0 %v3041
        %3335 = vmatpush.msra.mxu0 %v2943
        %3336 = vmatpush.msra.mxu0 %v2845
        %3337 = vmatpush.msra.mxu0 %v2335
        %3338 = vmatpush.msra.mxu0 %v2747
        %3339 = vmatpush.msra.mxu0 %v2649
        %3340 = vmatpush.msra.mxu0 %v2551
        %3341 = vmatpush.msra.mxu0 %v2453
        %3342 = vmatmul.f32.gmra.mxu0 %v3160
        %v3343 = vpop.f32.mrf.mxu0
        %v3344 = vadd.f32 %v3151, %v3343
        %3345 = vmatmul.f32.gmra.mxu0 %v3163
        %v3346 = vpop.f32.mrf.mxu0
        %v3347 = vadd.f32 %v3156, %v3346
        %3348 = vdwg.mxu0
        %3349 = vmatpush.msra.mxu0 0.0
        %3350 = vmatpush.msra.mxu0 0.0
        %3351 = vmatpush.msra.mxu0 0.0
        %3352 = vmatpush.msra.mxu0 0.0
        %3353 = vmatpush.msra.mxu0 0.0
        %3354 = vmatpush.msra.mxu0 0.0
        %3355 = vmatpush.msra.mxu0 0.0
        %3356 = vmatpush.msra.mxu0 %v3140
        %3357 = vmatpush.msra.mxu0 %v3042
        %3358 = vmatpush.msra.mxu0 %v2944
        %3359 = vmatpush.msra.mxu0 %v2846
        %3360 = vmatpush.msra.mxu0 %v2336
        %3361 = vmatpush.msra.mxu0 %v2748
        %3362 = vmatpush.msra.mxu0 %v2650
        %3363 = vmatpush.msra.mxu0 %v2552
        %3364 = vmatpush.msra.mxu0 %v2454
        %3365 = vmatmul.f32.gmra.mxu0 %v3160
        %v3366 = vpop.f32.mrf.mxu0
        %v3367 = vadd.f32 %v3151, %v3366
        %3368 = vmatmul.f32.gmra.mxu0 %v3163
        %v3369 = vpop.f32.mrf.mxu0
        %v3370 = vadd.f32 %v3156, %v3369
        %3371 = vdwg.mxu0
        %3372 = vmatpush.msra.mxu0 0.0
        %3373 = vmatpush.msra.mxu0 0.0
        %3374 = vmatpush.msra.mxu0 0.0
        %3375 = vmatpush.msra.mxu0 0.0
        %3376 = vmatpush.msra.mxu0 0.0
        %3377 = vmatpush.msra.mxu0 0.0
        %3378 = vmatpush.msra.mxu0 0.0
        %3379 = vmatpush.msra.mxu0 %v3141
        %3380 = vmatpush.msra.mxu0 %v3043
        %3381 = vmatpush.msra.mxu0 %v2945
        %3382 = vmatpush.msra.mxu0 %v2847
        %3383 = vmatpush.msra.mxu0 %v2337
        %3384 = vmatpush.msra.mxu0 %v2749
        %3385 = vmatpush.msra.mxu0 %v2651
        %3386 = vmatpush.msra.mxu0 %v2553
        %3387 = vmatpush.msra.mxu0 %v2455
        %3388 = vmatmul.f32.gmra.mxu0 %v3160
        %v3389 = vpop.f32.mrf.mxu0
        %v3390 = vadd.f32 %v3151, %v3389
        %3391 = vmatmul.f32.gmra.mxu0 %v3163
        %v3392 = vpop.f32.mrf.mxu0
        %v3393 = vadd.f32 %v3156, %v3392
        %3394 = vdwg.mxu0
        %3395 = vmatpush.msra.mxu0 0.0
        %3396 = vmatpush.msra.mxu0 0.0
        %3397 = vmatpush.msra.mxu0 0.0
        %3398 = vmatpush.msra.mxu0 0.0
        %3399 = vmatpush.msra.mxu0 0.0
        %3400 = vmatpush.msra.mxu0 0.0
        %3401 = vmatpush.msra.mxu0 0.0
        %3402 = vmatpush.msra.mxu0 %v3142
        %3403 = vmatpush.msra.mxu0 %v3044
        %3404 = vmatpush.msra.mxu0 %v2946
        %3405 = vmatpush.msra.mxu0 %v2848
        %3406 = vmatpush.msra.mxu0 %v2338
        %3407 = vmatpush.msra.mxu0 %v2750
        %3408 = vmatpush.msra.mxu0 %v2652
        %3409 = vmatpush.msra.mxu0 %v2554
        %3410 = vmatpush.msra.mxu0 %v2456
        %3411 = vmatmul.f32.gmra.mxu0 %v3160
        %v3412 = vpop.f32.mrf.mxu0
        %v3413 = vadd.f32 %v3151, %v3412
        %3414 = vmatmul.f32.gmra.mxu0 %v3163
        %v3415 = vpop.f32.mrf.mxu0
        %v3416 = vadd.f32 %v3156, %v3415
        %3417 = vdwg.mxu0
        %3418 = vmatpush.msra.mxu0 0.0
        %3419 = vmatpush.msra.mxu0 0.0
        %3420 = vmatpush.msra.mxu0 0.0
        %3421 = vmatpush.msra.mxu0 0.0
        %3422 = vmatpush.msra.mxu0 0.0
        %3423 = vmatpush.msra.mxu0 0.0
        %3424 = vmatpush.msra.mxu0 0.0
        %3425 = vmatpush.msra.mxu0 %v3143
        %3426 = vmatpush.msra.mxu0 %v3045
        %3427 = vmatpush.msra.mxu0 %v2947
        %3428 = vmatpush.msra.mxu0 %v2849
        %3429 = vmatpush.msra.mxu0 %v2339
        %3430 = vmatpush.msra.mxu0 %v2751
        %3431 = vmatpush.msra.mxu0 %v2653
        %3432 = vmatpush.msra.mxu0 %v2555
        %3433 = vmatpush.msra.mxu0 %v2457
        %3434 = vmatmul.f32.gmra.mxu0 %v3160
        %v3435 = vpop.f32.mrf.mxu0
        %v3436 = vadd.f32 %v3151, %v3435
        %3437 = vmatmul.f32.gmra.mxu0 %v3163
        %v3438 = vpop.f32.mrf.mxu0
        %v3439 = vadd.f32 %v3156, %v3438
        %3440 = vdwg.mxu0
        %3441 = vmatpush.msra.mxu0 0.0
        %3442 = vmatpush.msra.mxu0 0.0
        %3443 = vmatpush.msra.mxu0 0.0
        %3444 = vmatpush.msra.mxu0 0.0
        %3445 = vmatpush.msra.mxu0 0.0
        %3446 = vmatpush.msra.mxu0 0.0
        %3447 = vmatpush.msra.mxu0 0.0
        %3448 = vmatpush.msra.mxu0 %v3144
        %3449 = vmatpush.msra.mxu0 %v3046
        %3450 = vmatpush.msra.mxu0 %v2948
        %3451 = vmatpush.msra.mxu0 %v2850
        %3452 = vmatpush.msra.mxu0 %v2340
        %3453 = vmatpush.msra.mxu0 %v2752
        %3454 = vmatpush.msra.mxu0 %v2654
        %3455 = vmatpush.msra.mxu0 %v2556
        %3456 = vmatpush.msra.mxu0 %v2458
        %3457 = vmatmul.f32.gmra.mxu0 %v3160
        %v3458 = vpop.f32.mrf.mxu0
        %v3459 = vadd.f32 %v3151, %v3458
        %3460 = vmatmul.f32.gmra.mxu0 %v3163
        %v3461 = vpop.f32.mrf.mxu0
        %v3462 = vadd.f32 %v3156, %v3461
        %3463 = vdwg.mxu0
        %3464 = vmatpush.msra.mxu0 0.0
        %3465 = vmatpush.msra.mxu0 0.0
        %3466 = vmatpush.msra.mxu0 0.0
        %3467 = vmatpush.msra.mxu0 0.0
        %3468 = vmatpush.msra.mxu0 0.0
        %3469 = vmatpush.msra.mxu0 0.0
        %3470 = vmatpush.msra.mxu0 0.0
        %3471 = vmatpush.msra.mxu0 %v3145
        %3472 = vmatpush.msra.mxu0 %v3047
        %3473 = vmatpush.msra.mxu0 %v2949
        %3474 = vmatpush.msra.mxu0 %v2851
        %3475 = vmatpush.msra.mxu0 %v2341
        %3476 = vmatpush.msra.mxu0 %v2753
        %3477 = vmatpush.msra.mxu0 %v2655
        %3478 = vmatpush.msra.mxu0 %v2557
        %3479 = vmatpush.msra.mxu0 %v2459
        %3480 = vmatmul.f32.gmra.mxu0 %v3160
        %v3481 = vpop.f32.mrf.mxu0
        %v3482 = vadd.f32 %v3151, %v3481
        %3483 = vmatmul.f32.gmra.mxu0 %v3163
        %v3484 = vpop.f32.mrf.mxu0
        %v3485 = vadd.f32 %v3156, %v3484
        %3486 = vdwg.mxu0
        %3487 = vmatpush.msra.mxu0 0.0
        %3488 = vmatpush.msra.mxu0 0.0
        %3489 = vmatpush.msra.mxu0 0.0
        %3490 = vmatpush.msra.mxu0 0.0
        %3491 = vmatpush.msra.mxu0 0.0
        %3492 = vmatpush.msra.mxu0 0.0
        %3493 = vmatpush.msra.mxu0 0.0
        %3494 = vmatpush.msra.mxu0 %v3146
        %3495 = vmatpush.msra.mxu0 %v3048
        %3496 = vmatpush.msra.mxu0 %v2950
        %3497 = vmatpush.msra.mxu0 %v2852
        %3498 = vmatpush.msra.mxu0 %v2342
        %3499 = vmatpush.msra.mxu0 %v2754
        %3500 = vmatpush.msra.mxu0 %v2656
        %3501 = vmatpush.msra.mxu0 %v2558
        %3502 = vmatpush.msra.mxu0 %v2460
        %3503 = vmatmul.f32.gmra.mxu0 %v3160
        %v3504 = vpop.f32.mrf.mxu0
        %v3505 = vadd.f32 %v3151, %v3504
        %3506 = vmatmul.f32.gmra.mxu0 %v3163
        %v3507 = vpop.f32.mrf.mxu0
        %v3508 = vadd.f32 %v3156, %v3507
        %3509 = vdwg.mxu0
        %3510 = vmatpush.msra.mxu0 0.0
        %3511 = vmatpush.msra.mxu0 0.0
        %3512 = vmatpush.msra.mxu0 0.0
        %3513 = vmatpush.msra.mxu0 0.0
        %3514 = vmatpush.msra.mxu0 0.0
        %3515 = vmatpush.msra.mxu0 0.0
        %3516 = vmatpush.msra.mxu0 0.0
        %3517 = vmatpush.msra.mxu0 %v3147
        %3518 = vmatpush.msra.mxu0 %v3049
        %3519 = vmatpush.msra.mxu0 %v2951
        %3520 = vmatpush.msra.mxu0 %v2853
        %3521 = vmatpush.msra.mxu0 %v2343
        %3522 = vmatpush.msra.mxu0 %v2755
        %3523 = vmatpush.msra.mxu0 %v2657
        %3524 = vmatpush.msra.mxu0 %v2559
        %3525 = vmatpush.msra.mxu0 %v2461
        %3526 = vmatmul.f32.gmra.mxu0 %v3160
        %v3527 = vpop.f32.mrf.mxu0
        %v3528 = vadd.f32 %v3151, %v3527
        %3529 = vmatmul.f32.gmra.mxu0 %v3163
        %v3530 = vpop.f32.mrf.mxu0
        %v3531 = vadd.f32 %v3156, %v3530
        %3532 = vdwg.mxu0
        %v3533 = vmax.f32 %v3183, 0.0
        %v3534 = vmax.f32 %v3206, 0.0
        %v3535 = vmax.f32 %v3229, 0.0
        %v3536 = vmax.f32 %v3252, 0.0
        %v3537 = vmax.f32 %v3275, 0.0
        %v3538 = vmax.f32 %v3298, 0.0
        %v3539 = vmax.f32 %v3321, 0.0
        %v3540 = vmax.f32 %v3344, 0.0
        %v3541 = vmax.f32 %v3367, 0.0
        %v3542 = vmax.f32 %v3390, 0.0
        %v3543 = vmax.f32 %v3413, 0.0
        %v3544 = vmax.f32 %v3436, 0.0
        %v3545 = vmax.f32 %v3459, 0.0
        %v3546 = vmax.f32 %v3482, 0.0
        %v3547 = vmax.f32 %v3505, 0.0
        %v3548 = vmax.f32 %v3528, 0.0
        %v3549 = vmax.f32 %v3186, 0.0
        %v3550 = vmax.f32 %v3209, 0.0
        %v3551 = vmax.f32 %v3232, 0.0
        %v3552 = vmax.f32 %v3255, 0.0
        %v3553 = vmax.f32 %v3278, 0.0
        %v3554 = vmax.f32 %v3301, 0.0
        %v3555 = vmax.f32 %v3324, 0.0
        %v3556 = vmax.f32 %v3347, 0.0
        %v3557 = vmax.f32 %v3370, 0.0
        %v3558 = vmax.f32 %v3393, 0.0
        %v3559 = vmax.f32 %v3416, 0.0
        %v3560 = vmax.f32 %v3439, 0.0
        %v3561 = vmax.f32 %v3462, 0.0
        %v3562 = vmax.f32 %v3485, 0.0
        %v3563 = vmax.f32 %v3508, 0.0
        %v3564 = vmax.f32 %v3531, 0.0
        %3597 = vrot.lane.b32.xlu0 %v3533, 126
        %v3598 = vpop.permute.xlu0 %3597
        %3599 = vrot.lane.b32.xlu0 %v3534, 126
        %v3600 = vpop.permute.xlu0 %3599
        %3601 = vrot.lane.b32.xlu0 %v3535, 126
        %v3602 = vpop.permute.xlu0 %3601
        %3603 = vrot.lane.b32.xlu0 %v3536, 126
        %v3604 = vpop.permute.xlu0 %3603
        %3605 = vrot.lane.b32.xlu0 %v3537, 126
        %v3606 = vpop.permute.xlu0 %3605
        %3607 = vrot.lane.b32.xlu0 %v3538, 126
        %v3608 = vpop.permute.xlu0 %3607
        %3609 = vrot.lane.b32.xlu0 %v3539, 126
        %v3610 = vpop.permute.xlu0 %3609
        %3611 = vrot.lane.b32.xlu0 %v3540, 126
        %v3612 = vpop.permute.xlu0 %3611
        %3613 = vrot.lane.b32.xlu0 %v3541, 126
        %v3614 = vpop.permute.xlu0 %3613
        %3615 = vrot.lane.b32.xlu0 %v3542, 126
        %v3616 = vpop.permute.xlu0 %3615
        %3617 = vrot.lane.b32.xlu0 %v3543, 126
        %v3618 = vpop.permute.xlu0 %3617
        %3619 = vrot.lane.b32.xlu0 %v3544, 126
        %v3620 = vpop.permute.xlu0 %3619
        %3621 = vrot.lane.b32.xlu0 %v3545, 126
        %v3622 = vpop.permute.xlu0 %3621
        %3623 = vrot.lane.b32.xlu0 %v3546, 126
        %v3624 = vpop.permute.xlu0 %3623
        %3625 = vrot.lane.b32.xlu0 %v3547, 126
        %v3626 = vpop.permute.xlu0 %3625
        %3627 = vrot.lane.b32.xlu0 %v3548, 126
        %v3628 = vpop.permute.xlu0 %3627
        %3629 = vrot.lane.b32.xlu0 %v3549, 126
        %v3630 = vpop.permute.xlu0 %3629
        %3631 = vrot.lane.b32.xlu0 %v3550, 126
        %v3632 = vpop.permute.xlu0 %3631
        %3633 = vrot.lane.b32.xlu0 %v3551, 126
        %v3634 = vpop.permute.xlu0 %3633
        %3635 = vrot.lane.b32.xlu0 %v3552, 126
        %v3636 = vpop.permute.xlu0 %3635
        %3637 = vrot.lane.b32.xlu0 %v3553, 126
        %v3638 = vpop.permute.xlu0 %3637
        %3639 = vrot.lane.b32.xlu0 %v3554, 126
        %v3640 = vpop.permute.xlu0 %3639
        %3641 = vrot.lane.b32.xlu0 %v3555, 126
        %v3642 = vpop.permute.xlu0 %3641
        %3643 = vrot.lane.b32.xlu0 %v3556, 126
        %v3644 = vpop.permute.xlu0 %3643
        %3645 = vrot.lane.b32.xlu0 %v3557, 126
        %v3646 = vpop.permute.xlu0 %3645
        %3647 = vrot.lane.b32.xlu0 %v3558, 126
        %v3648 = vpop.permute.xlu0 %3647
        %3649 = vrot.lane.b32.xlu0 %v3559, 126
        %v3650 = vpop.permute.xlu0 %3649
        %3651 = vrot.lane.b32.xlu0 %v3560, 126
        %v3652 = vpop.permute.xlu0 %3651
        %3653 = vrot.lane.b32.xlu0 %v3561, 126
        %v3654 = vpop.permute.xlu0 %3653
        %3655 = vrot.lane.b32.xlu0 %v3562, 126
        %v3656 = vpop.permute.xlu0 %3655
        %3657 = vrot.lane.b32.xlu0 %v3563, 126
        %v3658 = vpop.permute.xlu0 %3657
        %3659 = vrot.lane.b32.xlu0 %v3564, 126
        %v3660 = vpop.permute.xlu0 %3659
        %v3661 = vsel %vm2788, %v3598, %v3600
        %v3662 = vsel %vm2788, %v3600, %v3602
        %v3663 = vsel %vm2788, %v3602, %v3604
        %v3664 = vsel %vm2788, %v3604, %v3606
        %v3665 = vsel %vm2788, %v3606, %v3608
        %v3666 = vsel %vm2788, %v3608, %v3610
        %v3667 = vsel %vm2788, %v3610, %v3612
        %v3668 = vsel %vm2788, %v3612, %v3614
        %v3669 = vsel %vm2788, %v3614, %v3616
        %v3670 = vsel %vm2788, %v3616, %v3618
        %v3671 = vsel %vm2788, %v3618, %v3620
        %v3672 = vsel %vm2788, %v3620, %v3622
        %v3673 = vsel %vm2788, %v3622, %v3624
        %v3674 = vsel %vm2788, %v3624, %v3626
        %v3675 = vsel %vm2788, %v3626, %v3628
        %v3676 = vsel %vm2788, %v3630, %v3632
        %v3677 = vsel %vm2788, %v3632, %v3634
        %v3678 = vsel %vm2788, %v3634, %v3636
        %v3679 = vsel %vm2788, %v3636, %v3638
        %v3680 = vsel %vm2788, %v3638, %v3640
        %v3681 = vsel %vm2788, %v3640, %v3642
        %v3682 = vsel %vm2788, %v3642, %v3644
        %v3683 = vsel %vm2788, %v3644, %v3646
        %v3684 = vsel %vm2788, %v3646, %v3648
        %v3685 = vsel %vm2788, %v3648, %v3650
        %v3686 = vsel %vm2788, %v3650, %v3652
        %v3687 = vsel %vm2788, %v3652, %v3654
        %v3688 = vsel %vm2788, %v3654, %v3656
        %v3689 = vsel %vm2788, %v3656, %v3658
        %v3690 = vsel %vm2788, %v3658, %v3660
        %v3725 = vsel %vm2788, %v3628, %v3598
        %v3726 = vsel %vm2788, %v3660, %v3630
        %v3727 = vmax.f32 %v3533, %v3661
        %v3728 = vmax.f32 %v3534, %v3662
        %v3729 = vmax.f32 %v3535, %v3663
        %v3730 = vmax.f32 %v3536, %v3664
        %v3731 = vmax.f32 %v3537, %v3665
        %v3732 = vmax.f32 %v3538, %v3666
        %v3733 = vmax.f32 %v3539, %v3667
        %v3734 = vmax.f32 %v3540, %v3668
        %v3735 = vmax.f32 %v3541, %v3669
        %v3736 = vmax.f32 %v3542, %v3670
        %v3737 = vmax.f32 %v3543, %v3671
        %v3738 = vmax.f32 %v3544, %v3672
        %v3739 = vmax.f32 %v3545, %v3673
        %v3740 = vmax.f32 %v3546, %v3674
        %v3741 = vmax.f32 %v3547, %v3675
        %v3742 = vmax.f32 %v3548, %v3725
        %v3743 = vmax.f32 %v3549, %v3676
        %v3744 = vmax.f32 %v3550, %v3677
        %v3745 = vmax.f32 %v3551, %v3678
        %v3746 = vmax.f32 %v3552, %v3679
        %v3747 = vmax.f32 %v3553, %v3680
        %v3748 = vmax.f32 %v3554, %v3681
        %v3749 = vmax.f32 %v3555, %v3682
        %v3750 = vmax.f32 %v3556, %v3683
        %v3751 = vmax.f32 %v3557, %v3684
        %v3752 = vmax.f32 %v3558, %v3685
        %v3753 = vmax.f32 %v3559, %v3686
        %v3754 = vmax.f32 %v3560, %v3687
        %v3755 = vmax.f32 %v3561, %v3688
        %v3756 = vmax.f32 %v3562, %v3689
        %v3757 = vmax.f32 %v3563, %v3690
        %v3758 = vmax.f32 %v3564, %v3726
        %3791 = vrot.lane.b32.xlu0 %v3727, 96
        %v3792 = vpop.permute.xlu0 %3791
        %3793 = vrot.lane.b32.xlu0 %v3728, 96
        %v3794 = vpop.permute.xlu0 %3793
        %3795 = vrot.lane.b32.xlu0 %v3729, 96
        %v3796 = vpop.permute.xlu0 %3795
        %3797 = vrot.lane.b32.xlu0 %v3730, 96
        %v3798 = vpop.permute.xlu0 %3797
        %3799 = vrot.lane.b32.xlu0 %v3731, 96
        %v3800 = vpop.permute.xlu0 %3799
        %3801 = vrot.lane.b32.xlu0 %v3732, 96
        %v3802 = vpop.permute.xlu0 %3801
        %3803 = vrot.lane.b32.xlu0 %v3733, 96
        %v3804 = vpop.permute.xlu0 %3803
        %3805 = vrot.lane.b32.xlu0 %v3734, 96
        %v3806 = vpop.permute.xlu0 %3805
        %3807 = vrot.lane.b32.xlu0 %v3735, 96
        %v3808 = vpop.permute.xlu0 %3807
        %3809 = vrot.lane.b32.xlu0 %v3736, 96
        %v3810 = vpop.permute.xlu0 %3809
        %3811 = vrot.lane.b32.xlu0 %v3737, 96
        %v3812 = vpop.permute.xlu0 %3811
        %3813 = vrot.lane.b32.xlu0 %v3738, 96
        %v3814 = vpop.permute.xlu0 %3813
        %3815 = vrot.lane.b32.xlu0 %v3739, 96
        %v3816 = vpop.permute.xlu0 %3815
        %3817 = vrot.lane.b32.xlu0 %v3740, 96
        %v3818 = vpop.permute.xlu0 %3817
        %3819 = vrot.lane.b32.xlu0 %v3741, 96
        %v3820 = vpop.permute.xlu0 %3819
        %3821 = vrot.lane.b32.xlu0 %v3742, 96
        %v3822 = vpop.permute.xlu0 %3821
        %3823 = vrot.lane.b32.xlu0 %v3743, 96
        %v3824 = vpop.permute.xlu0 %3823
        %3825 = vrot.lane.b32.xlu0 %v3744, 96
        %v3826 = vpop.permute.xlu0 %3825
        %3827 = vrot.lane.b32.xlu0 %v3745, 96
        %v3828 = vpop.permute.xlu0 %3827
        %3829 = vrot.lane.b32.xlu0 %v3746, 96
        %v3830 = vpop.permute.xlu0 %3829
        %3831 = vrot.lane.b32.xlu0 %v3747, 96
        %v3832 = vpop.permute.xlu0 %3831
        %3833 = vrot.lane.b32.xlu0 %v3748, 96
        %v3834 = vpop.permute.xlu0 %3833
        %3835 = vrot.lane.b32.xlu0 %v3749, 96
        %v3836 = vpop.permute.xlu0 %3835
        %3837 = vrot.lane.b32.xlu0 %v3750, 96
        %v3838 = vpop.permute.xlu0 %3837
        %3839 = vrot.lane.b32.xlu0 %v3751, 96
        %v3840 = vpop.permute.xlu0 %3839
        %3841 = vrot.lane.b32.xlu0 %v3752, 96
        %v3842 = vpop.permute.xlu0 %3841
        %3843 = vrot.lane.b32.xlu0 %v3753, 96
        %v3844 = vpop.permute.xlu0 %3843
        %3845 = vrot.lane.b32.xlu0 %v3754, 96
        %v3846 = vpop.permute.xlu0 %3845
        %3847 = vrot.lane.b32.xlu0 %v3755, 96
        %v3848 = vpop.permute.xlu0 %3847
        %3849 = vrot.lane.b32.xlu0 %v3756, 96
        %v3850 = vpop.permute.xlu0 %3849
        %3851 = vrot.lane.b32.xlu0 %v3757, 96
        %v3852 = vpop.permute.xlu0 %3851
        %3853 = vrot.lane.b32.xlu0 %v3758, 96
        %v3854 = vpop.permute.xlu0 %3853
        %v3855 = vsel %vm2984, %v3792, %v3794
        %v3856 = vsel %vm2984, %v3794, %v3796
        %v3857 = vsel %vm2984, %v3796, %v3798
        %v3858 = vsel %vm2984, %v3798, %v3800
        %v3859 = vsel %vm2984, %v3800, %v3802
        %v3860 = vsel %vm2984, %v3802, %v3804
        %v3861 = vsel %vm2984, %v3804, %v3806
        %v3862 = vsel %vm2984, %v3806, %v3808
        %v3863 = vsel %vm2984, %v3808, %v3810
        %v3864 = vsel %vm2984, %v3810, %v3812
        %v3865 = vsel %vm2984, %v3812, %v3814
        %v3866 = vsel %vm2984, %v3814, %v3816
        %v3867 = vsel %vm2984, %v3816, %v3818
        %v3868 = vsel %vm2984, %v3818, %v3820
        %v3869 = vsel %vm2984, %v3820, %v3822
        %v3870 = vsel %vm2984, %v3824, %v3826
        %v3871 = vsel %vm2984, %v3826, %v3828
        %v3872 = vsel %vm2984, %v3828, %v3830
        %v3873 = vsel %vm2984, %v3830, %v3832
        %v3874 = vsel %vm2984, %v3832, %v3834
        %v3875 = vsel %vm2984, %v3834, %v3836
        %v3876 = vsel %vm2984, %v3836, %v3838
        %v3877 = vsel %vm2984, %v3838, %v3840
        %v3878 = vsel %vm2984, %v3840, %v3842
        %v3879 = vsel %vm2984, %v3842, %v3844
        %v3880 = vsel %vm2984, %v3844, %v3846
        %v3881 = vsel %vm2984, %v3846, %v3848
        %v3882 = vsel %vm2984, %v3848, %v3850
        %v3883 = vsel %vm2984, %v3850, %v3852
        %v3884 = vsel %vm2984, %v3852, %v3854
        %v3919 = vsel %vm2984, %v3822, %v3792
        %v3920 = vsel %vm2984, %v3854, %v3824
        %v3921 = vmax.f32 %v3727, %v3855
        %v3922 = vmax.f32 %v3728, %v3856
        %v3923 = vmax.f32 %v3729, %v3857
        %v3924 = vmax.f32 %v3730, %v3858
        %v3925 = vmax.f32 %v3731, %v3859
        %v3926 = vmax.f32 %v3732, %v3860
        %v3927 = vmax.f32 %v3733, %v3861
        %v3928 = vmax.f32 %v3734, %v3862
        %v3929 = vmax.f32 %v3735, %v3863
        %v3930 = vmax.f32 %v3736, %v3864
        %v3931 = vmax.f32 %v3737, %v3865
        %v3932 = vmax.f32 %v3738, %v3866
        %v3933 = vmax.f32 %v3739, %v3867
        %v3934 = vmax.f32 %v3740, %v3868
        %v3935 = vmax.f32 %v3741, %v3869
        %v3936 = vmax.f32 %v3742, %v3919
        %v3937 = vmax.f32 %v3743, %v3870
        %v3938 = vmax.f32 %v3744, %v3871
        %v3939 = vmax.f32 %v3745, %v3872
        %v3940 = vmax.f32 %v3746, %v3873
        %v3941 = vmax.f32 %v3747, %v3874
        %v3942 = vmax.f32 %v3748, %v3875
        %v3943 = vmax.f32 %v3749, %v3876
        %v3944 = vmax.f32 %v3750, %v3877
        %v3945 = vmax.f32 %v3751, %v3878
        %v3946 = vmax.f32 %v3752, %v3879
        %v3947 = vmax.f32 %v3753, %v3880
        %v3948 = vmax.f32 %v3754, %v3881
        %v3949 = vmax.f32 %v3755, %v3882
        %v3950 = vmax.f32 %v3756, %v3883
        %v3951 = vmax.f32 %v3757, %v3884
        %v3952 = vmax.f32 %v3758, %v3920
        %v3969 = vrot.slane %v3922, 7
        %v3970 = vrot.slane %v3923, 6
        %v3971 = vrot.slane %v3924, 5
        %v3972 = vrot.slane %v3925, 4
        %v3973 = vrot.slane %v3926, 3
        %v3974 = vrot.slane %v3927, 2
        %v3975 = vrot.slane %v3928, 1
        %v3976 = vrot.slane %v3930, 7
        %v3977 = vrot.slane %v3931, 6
        %v3978 = vrot.slane %v3932, 5
        %v3979 = vrot.slane %v3933, 4
        %v3980 = vrot.slane %v3934, 3
        %v3981 = vrot.slane %v3935, 2
        %v3982 = vrot.slane %v3936, 1
        %v3983 = vsel %vm1638, %v3921, %v3969
        %vm3984 = vcmask 1042434
        %v3985 = vsel %vm3984, %v3970, %v3971
        %v3986 = vsel %vm1655, %v3983, %v3985
        %vm3987 = vcmask 1044484
        %v3988 = vsel %vm3987, %v3972, %v3973
        %vm3989 = vcmask 1046534
        %v3990 = vsel %vm3989, %v3974, %v3975
        %vm3991 = vcmask 1045508
        %v3992 = vsel %vm3991, %v3988, %v3990
        %v3993 = vsel %vm1689, %v3986, %v3992
        %v3994 = vsel %vm1638, %v3929, %v3976
        %v3995 = vsel %vm3984, %v3977, %v3978
        %v3996 = vsel %vm1655, %v3994, %v3995
        %v3997 = vsel %vm3987, %v3979, %v3980
        %v3998 = vsel %vm3989, %v3981, %v3982
        %v3999 = vsel %vm3991, %v3997, %v3998
        %v4000 = vsel %vm1689, %v3996, %v3999
        %v4004 = vunpack.c.l.s4 1966171168
        %v4005 = vunpack.c.0.s8 %v4004
        %v4006 = vperm.slane %v3993, %v4005
        %v4008 = vunpack.c.l.s4 1966171168
        %v4009 = vunpack.c.0.s8 %v4008
        %v4010 = vperm.slane %v4000, %v4009
        %v4011 = vld [vmem:[%s7] sm:$0xff]
        %v4012 = vld [vmem:[%s7 + $0x8] sm:$0xff]
        %v4013 = vld [vmem:[%s7 + $0x10] sm:$0xff]
        %v4014 = vld [vmem:[%s7 + $0x18] sm:$0xff]
        %v4015 = vld [vmem:[%s7 + $0x20] sm:$0xff]
        %v4016 = vld [vmem:[%s7 + $0x28] sm:$0xff]
        %v4017 = vld [vmem:[%s7 + $0x30] sm:$0xff]
        %v4018 = vld [vmem:[%s7 + $0x38] sm:$0xff]
        %v4019 = vld [vmem:[%s7 + $0x40] sm:$0xff]
        %v4020 = vld [vmem:[%s7 + $0x48] sm:$0xff]
        %v4021 = vld [vmem:[%s7 + $0x50] sm:$0xff]
        %v4022 = vld [vmem:[%s7 + $0x58] sm:$0xff]
        %v4023 = vld [vmem:[%s7 + $0x60] sm:$0xff]
        %v4024 = vld [vmem:[%s7 + $0x68] sm:$0xff]
        %v4025 = vld [vmem:[%s7 + $0x70] sm:$0xff]
        %v4026 = vld [vmem:[%s7 + $0x78] sm:$0xff]
        %v4027 = vld [vmem:[%s7 + $0x80] sm:$0xff]
        %v4028 = vld [vmem:[%s7 + $0x88] sm:$0xff]
        %v4029 = vld [vmem:[%s7 + $0x90] sm:$0xff]
        %v4030 = vld [vmem:[%s7 + $0x98] sm:$0xff]
        %v4031 = vld [vmem:[%s7 + $0xa0] sm:$0xff]
        %v4032 = vld [vmem:[%s7 + $0xa8] sm:$0xff]
        %v4033 = vld [vmem:[%s7 + $0xb0] sm:$0xff]
        %v4034 = vld [vmem:[%s7 + $0xb8] sm:$0xff]
        %v4035 = vld [vmem:[%s7 + $0xc0] sm:$0xff]
        %v4036 = vld [vmem:[%s7 + $0xc8] sm:$0xff]
        %v4037 = vld [vmem:[%s7 + $0xd0] sm:$0xff]
        %v4038 = vld [vmem:[%s7 + $0xd8] sm:$0xff]
        %v4039 = vld [vmem:[%s7 + $0xe0] sm:$0xff]
        %v4040 = vld [vmem:[%s7 + $0xe8] sm:$0xff]
        %v4041 = vld [vmem:[%s7 + $0xf0] sm:$0xff]
        %v4042 = vld [vmem:[%s7 + $0xf8] sm:$0xff]
        %4043 = vst [vmem:[#allocation1] sm:$0xff] %v3921
        %4044 = vst [vmem:[#allocation1 + $0x9] sm:$0xff] %v3922
        %4045 = vst [vmem:[#allocation1 + $0x12] sm:$0xff] %v3923
        %4046 = vst [vmem:[#allocation1 + $0x1b] sm:$0xff] %v3924
        %4047 = vst [vmem:[#allocation1 + $0x24] sm:$0xff] %v3925
        %4048 = vst [vmem:[#allocation1 + $0x2d] sm:$0xff] %v3926
        %4049 = vst [vmem:[#allocation1 + $0x36] sm:$0xff] %v3927
        %4050 = vst [vmem:[#allocation1 + $0x3f] sm:$0xff] %v3928
        %s4051 = scalar_lea.vmem [#allocation1], 1
        %v4052 = vld [vmem:[%s4051] ss:$9 sm:$0xff]
        %4053 = vst [vmem:[#allocation1] sm:$0xff] %v3929
        %4054 = vst [vmem:[#allocation1 + $0x9] sm:$0xff] %v3930
        %4055 = vst [vmem:[#allocation1 + $0x12] sm:$0xff] %v3931
        %4056 = vst [vmem:[#allocation1 + $0x1b] sm:$0xff] %v3932
        %4057 = vst [vmem:[#allocation1 + $0x24] sm:$0xff] %v3933
        %4058 = vst [vmem:[#allocation1 + $0x2d] sm:$0xff] %v3934
        %4059 = vst [vmem:[#allocation1 + $0x36] sm:$0xff] %v3935
        %4060 = vst [vmem:[#allocation1 + $0x3f] sm:$0xff] %v3936
        %v4061 = vld [vmem:[%s4051] ss:$9 sm:$0xff]
        %v4065 = vunpack.c.l.s4 1966171168
        %v4066 = vunpack.c.0.s8 %v4065
        %v4067 = vperm.slane %v4052, %v4066
        %v4069 = vunpack.c.l.s4 1966171168
        %v4070 = vunpack.c.0.s8 %v4069
        %v4071 = vperm.slane %v4061, %v4070
        %s4072 = scalar_lea.vmem %s7, 256
        %v4073 = vld [vmem:[%s4072] sm:$0xff]
        %v4074 = vld [vmem:[%s4072 + $0x8] sm:$0xff]
        %v4075 = vld [vmem:[%s4072 + $0x10] sm:$0xff]
        %v4076 = vld [vmem:[%s4072 + $0x18] sm:$0xff]
        %v4077 = vld [vmem:[%s4072 + $0x20] sm:$0xff]
        %v4078 = vld [vmem:[%s4072 + $0x28] sm:$0xff]
        %v4079 = vld [vmem:[%s4072 + $0x30] sm:$0xff]
        %v4080 = vld [vmem:[%s4072 + $0x38] sm:$0xff]
        %v4081 = vld [vmem:[%s4072 + $0x40] sm:$0xff]
        %v4082 = vld [vmem:[%s4072 + $0x48] sm:$0xff]
        %v4083 = vld [vmem:[%s4072 + $0x50] sm:$0xff]
        %v4084 = vld [vmem:[%s4072 + $0x58] sm:$0xff]
        %v4085 = vld [vmem:[%s4072 + $0x60] sm:$0xff]
        %v4086 = vld [vmem:[%s4072 + $0x68] sm:$0xff]
        %v4087 = vld [vmem:[%s4072 + $0x70] sm:$0xff]
        %v4088 = vld [vmem:[%s4072 + $0x78] sm:$0xff]
        %v4089 = vld [vmem:[%s4072 + $0x80] sm:$0xff]
        %v4090 = vld [vmem:[%s4072 + $0x88] sm:$0xff]
        %v4091 = vld [vmem:[%s4072 + $0x90] sm:$0xff]
        %v4092 = vld [vmem:[%s4072 + $0x98] sm:$0xff]
        %v4093 = vld [vmem:[%s4072 + $0xa0] sm:$0xff]
        %v4094 = vld [vmem:[%s4072 + $0xa8] sm:$0xff]
        %v4095 = vld [vmem:[%s4072 + $0xb0] sm:$0xff]
        %v4096 = vld [vmem:[%s4072 + $0xb8] sm:$0xff]
        %v4097 = vld [vmem:[%s4072 + $0xc0] sm:$0xff]
        %v4098 = vld [vmem:[%s4072 + $0xc8] sm:$0xff]
        %v4099 = vld [vmem:[%s4072 + $0xd0] sm:$0xff]
        %v4100 = vld [vmem:[%s4072 + $0xd8] sm:$0xff]
        %v4101 = vld [vmem:[%s4072 + $0xe0] sm:$0xff]
        %v4102 = vld [vmem:[%s4072 + $0xe8] sm:$0xff]
        %v4103 = vld [vmem:[%s4072 + $0xf0] sm:$0xff]
        %v4104 = vld [vmem:[%s4072 + $0xf8] sm:$0xff]
        %4107 = vst [vmem:[#allocation1] ss:$2 sm:$0xff] %v4067
        %s4108 = scalar_lea.vmem [#allocation1], 1
        %4109 = vst [vmem:[%s4108] ss:$2 sm:$0xff] %v4071
        %v4110 = vld.sshfl [vmem:[#allocation1] sm:$0xff pattern:$0x75316420]
        %v4111 = vld.sshfl [vmem:[#allocation1 + $0x8] sm:$0xff pattern:$0x75316420]
        %4114 = vmatpush.msra.mxu0 %v4088
        %4115 = vmatpush.msra.mxu0 %v4087
        %4116 = vmatpush.msra.mxu0 %v4086
        %4117 = vmatpush.msra.mxu0 %v4085
        %4118 = vmatpush.msra.mxu0 %v4084
        %4119 = vmatpush.msra.mxu0 %v4083
        %4120 = vmatpush.msra.mxu0 %v4082
        %4121 = vmatpush.msra.mxu0 %v4081
        %4122 = vmatpush.msra.mxu0 %v4080
        %4123 = vmatpush.msra.mxu0 %v4079
        %4124 = vmatpush.msra.mxu0 %v4078
        %4125 = vmatpush.msra.mxu0 %v4077
        %4126 = vmatpush.msra.mxu0 %v4076
        %4127 = vmatpush.msra.mxu0 %v4075
        %4128 = vmatpush.msra.mxu0 %v4074
        %4129 = vmatpush.msra.mxu0 %v4073
        %4130 = vmatmul.f32.gmra.mxu0 %v4110
        %v4131 = vpop.f32.mrf.mxu0
        %v4132 = vadd.f32 0.0, %v4131
        %4133 = vdwg.mxu0
        %4134 = vmatpush.msra.mxu0 %v4104
        %4135 = vmatpush.msra.mxu0 %v4103
        %4136 = vmatpush.msra.mxu0 %v4102
        %4137 = vmatpush.msra.mxu0 %v4101
        %4138 = vmatpush.msra.mxu0 %v4100
        %4139 = vmatpush.msra.mxu0 %v4099
        %4140 = vmatpush.msra.mxu0 %v4098
        %4141 = vmatpush.msra.mxu0 %v4097
        %4142 = vmatpush.msra.mxu0 %v4096
        %4143 = vmatpush.msra.mxu0 %v4095
        %4144 = vmatpush.msra.mxu0 %v4094
        %4145 = vmatpush.msra.mxu0 %v4093
        %4146 = vmatpush.msra.mxu0 %v4092
        %4147 = vmatpush.msra.mxu0 %v4091
        %4148 = vmatpush.msra.mxu0 %v4090
        %4149 = vmatpush.msra.mxu0 %v4089
        %4150 = vmatmul.f32.gmra.mxu0 %v4111
        %v4151 = vpop.f32.mrf.mxu0
        %v4152 = vadd.f32 %v4132, %v4151
        %4153 = vdwg.mxu0
        %4156 = vst [vmem:[#allocation1] ss:$2 sm:$0xff] %v4006
        %s4157 = scalar_lea.vmem [#allocation1], 1
        %4158 = vst [vmem:[%s4157] ss:$2 sm:$0xff] %v4010
        %v4159 = vld.sshfl [vmem:[#allocation1] sm:$0xff pattern:$0x75316420]
        %v4160 = vld.sshfl [vmem:[#allocation1 + $0x8] sm:$0xff pattern:$0x75316420]
        %4163 = vmatpush.msra.mxu0 %v4026
        %4164 = vmatpush.msra.mxu0 %v4025
        %4165 = vmatpush.msra.mxu0 %v4024
        %4166 = vmatpush.msra.mxu0 %v4023
        %4167 = vmatpush.msra.mxu0 %v4022
        %4168 = vmatpush.msra.mxu0 %v4021
        %4169 = vmatpush.msra.mxu0 %v4020
        %4170 = vmatpush.msra.mxu0 %v4019
        %4171 = vmatpush.msra.mxu0 %v4018
        %4172 = vmatpush.msra.mxu0 %v4017
        %4173 = vmatpush.msra.mxu0 %v4016
        %4174 = vmatpush.msra.mxu0 %v4015
        %4175 = vmatpush.msra.mxu0 %v4014
        %4176 = vmatpush.msra.mxu0 %v4013
        %4177 = vmatpush.msra.mxu0 %v4012
        %4178 = vmatpush.msra.mxu0 %v4011
        %4179 = vmatmul.f32.gmra.mxu0 %v4159
        %v4180 = vpop.f32.mrf.mxu0
        %v4181 = vadd.f32 %v4152, %v4180
        %4182 = vdwg.mxu0
        %4183 = vmatpush.msra.mxu0 %v4042
        %4184 = vmatpush.msra.mxu0 %v4041
        %4185 = vmatpush.msra.mxu0 %v4040
        %4186 = vmatpush.msra.mxu0 %v4039
        %4187 = vmatpush.msra.mxu0 %v4038
        %4188 = vmatpush.msra.mxu0 %v4037
        %4189 = vmatpush.msra.mxu0 %v4036
        %4190 = vmatpush.msra.mxu0 %v4035
        %4191 = vmatpush.msra.mxu0 %v4034
        %4192 = vmatpush.msra.mxu0 %v4033
        %4193 = vmatpush.msra.mxu0 %v4032
        %4194 = vmatpush.msra.mxu0 %v4031
        %4195 = vmatpush.msra.mxu0 %v4030
        %4196 = vmatpush.msra.mxu0 %v4029
        %4197 = vmatpush.msra.mxu0 %v4028
        %4198 = vmatpush.msra.mxu0 %v4027
        %4199 = vmatmul.f32.gmra.mxu0 %v4160
        %v4200 = vpop.f32.mrf.mxu0
        %v4201 = vadd.f32 %v4181, %v4200
        %4202 = vdwg.mxu0
        %4203 = vst [vmem:[#allocation1] sm:$0xff] %v3921
        %4204 = vst [vmem:[#allocation1 + $0x9] sm:$0xff] %v3922
        %4205 = vst [vmem:[#allocation1 + $0x12] sm:$0xff] %v3923
        %4206 = vst [vmem:[#allocation1 + $0x1b] sm:$0xff] %v3924
        %4207 = vst [vmem:[#allocation1 + $0x24] sm:$0xff] %v3925
        %4208 = vst [vmem:[#allocation1 + $0x2d] sm:$0xff] %v3926
        %4209 = vst [vmem:[#allocation1 + $0x36] sm:$0xff] %v3927
        %4210 = vst [vmem:[#allocation1 + $0x3f] sm:$0xff] %v3928
        %s4211 = scalar_lea.vmem [#allocation1], 2
        %v4212 = vld [vmem:[%s4211] ss:$9 sm:$0xff]
        %4213 = vst [vmem:[#allocation1] sm:$0xff] %v3929
        %4214 = vst [vmem:[#allocation1 + $0x9] sm:$0xff] %v3930
        %4215 = vst [vmem:[#allocation1 + $0x12] sm:$0xff] %v3931
        %4216 = vst [vmem:[#allocation1 + $0x1b] sm:$0xff] %v3932
        %4217 = vst [vmem:[#allocation1 + $0x24] sm:$0xff] %v3933
        %4218 = vst [vmem:[#allocation1 + $0x2d] sm:$0xff] %v3934
        %4219 = vst [vmem:[#allocation1 + $0x36] sm:$0xff] %v3935
        %4220 = vst [vmem:[#allocation1 + $0x3f] sm:$0xff] %v3936
        %v4221 = vld [vmem:[%s4211] ss:$9 sm:$0xff]
        %v4225 = vunpack.c.l.s4 1966171168
        %v4226 = vunpack.c.0.s8 %v4225
        %v4227 = vperm.slane %v4212, %v4226
        %v4229 = vunpack.c.l.s4 1966171168
        %v4230 = vunpack.c.0.s8 %v4229
        %v4231 = vperm.slane %v4221, %v4230
        %s4232 = scalar_lea.vmem %s7, 512
        %v4233 = vld [vmem:[%s4232] sm:$0xff]
        %v4234 = vld [vmem:[%s4232 + $0x8] sm:$0xff]
        %v4235 = vld [vmem:[%s4232 + $0x10] sm:$0xff]
        %v4236 = vld [vmem:[%s4232 + $0x18] sm:$0xff]
        %v4237 = vld [vmem:[%s4232 + $0x20] sm:$0xff]
        %v4238 = vld [vmem:[%s4232 + $0x28] sm:$0xff]
        %v4239 = vld [vmem:[%s4232 + $0x30] sm:$0xff]
        %v4240 = vld [vmem:[%s4232 + $0x38] sm:$0xff]
        %v4241 = vld [vmem:[%s4232 + $0x40] sm:$0xff]
        %v4242 = vld [vmem:[%s4232 + $0x48] sm:$0xff]
        %v4243 = vld [vmem:[%s4232 + $0x50] sm:$0xff]
        %v4244 = vld [vmem:[%s4232 + $0x58] sm:$0xff]
        %v4245 = vld [vmem:[%s4232 + $0x60] sm:$0xff]
        %v4246 = vld [vmem:[%s4232 + $0x68] sm:$0xff]
        %v4247 = vld [vmem:[%s4232 + $0x70] sm:$0xff]
        %v4248 = vld [vmem:[%s4232 + $0x78] sm:$0xff]
        %v4249 = vld [vmem:[%s4232 + $0x80] sm:$0xff]
        %v4250 = vld [vmem:[%s4232 + $0x88] sm:$0xff]
        %v4251 = vld [vmem:[%s4232 + $0x90] sm:$0xff]
        %v4252 = vld [vmem:[%s4232 + $0x98] sm:$0xff]
        %v4253 = vld [vmem:[%s4232 + $0xa0] sm:$0xff]
        %v4254 = vld [vmem:[%s4232 + $0xa8] sm:$0xff]
        %v4255 = vld [vmem:[%s4232 + $0xb0] sm:$0xff]
        %v4256 = vld [vmem:[%s4232 + $0xb8] sm:$0xff]
        %v4257 = vld [vmem:[%s4232 + $0xc0] sm:$0xff]
        %v4258 = vld [vmem:[%s4232 + $0xc8] sm:$0xff]
        %v4259 = vld [vmem:[%s4232 + $0xd0] sm:$0xff]
        %v4260 = vld [vmem:[%s4232 + $0xd8] sm:$0xff]
        %v4261 = vld [vmem:[%s4232 + $0xe0] sm:$0xff]
        %v4262 = vld [vmem:[%s4232 + $0xe8] sm:$0xff]
        %v4263 = vld [vmem:[%s4232 + $0xf0] sm:$0xff]
        %v4264 = vld [vmem:[%s4232 + $0xf8] sm:$0xff]
        %4267 = vst [vmem:[#allocation1] ss:$2 sm:$0xff] %v4227
        %s4268 = scalar_lea.vmem [#allocation1], 1
        %4269 = vst [vmem:[%s4268] ss:$2 sm:$0xff] %v4231
        %v4270 = vld.sshfl [vmem:[#allocation1] sm:$0xff pattern:$0x75316420]
        %v4271 = vld.sshfl [vmem:[#allocation1 + $0x8] sm:$0xff pattern:$0x75316420]
        %4274 = vmatpush.msra.mxu0 %v4248
        %4275 = vmatpush.msra.mxu0 %v4247
        %4276 = vmatpush.msra.mxu0 %v4246
        %4277 = vmatpush.msra.mxu0 %v4245
        %4278 = vmatpush.msra.mxu0 %v4244
        %4279 = vmatpush.msra.mxu0 %v4243
        %4280 = vmatpush.msra.mxu0 %v4242
        %4281 = vmatpush.msra.mxu0 %v4241
        %4282 = vmatpush.msra.mxu0 %v4240
        %4283 = vmatpush.msra.mxu0 %v4239
        %4284 = vmatpush.msra.mxu0 %v4238
        %4285 = vmatpush.msra.mxu0 %v4237
        %4286 = vmatpush.msra.mxu0 %v4236
        %4287 = vmatpush.msra.mxu0 %v4235
        %4288 = vmatpush.msra.mxu0 %v4234
        %4289 = vmatpush.msra.mxu0 %v4233
        %4290 = vmatmul.f32.gmra.mxu0 %v4270
        %v4291 = vpop.f32.mrf.mxu0
        %v4292 = vadd.f32 0.0, %v4291
        %4293 = vdwg.mxu0
        %4294 = vmatpush.msra.mxu0 %v4264
        %4295 = vmatpush.msra.mxu0 %v4263
        %4296 = vmatpush.msra.mxu0 %v4262
        %4297 = vmatpush.msra.mxu0 %v4261
        %4298 = vmatpush.msra.mxu0 %v4260
        %4299 = vmatpush.msra.mxu0 %v4259
        %4300 = vmatpush.msra.mxu0 %v4258
        %4301 = vmatpush.msra.mxu0 %v4257
        %4302 = vmatpush.msra.mxu0 %v4256
        %4303 = vmatpush.msra.mxu0 %v4255
        %4304 = vmatpush.msra.mxu0 %v4254
        %4305 = vmatpush.msra.mxu0 %v4253
        %4306 = vmatpush.msra.mxu0 %v4252
        %4307 = vmatpush.msra.mxu0 %v4251
        %4308 = vmatpush.msra.mxu0 %v4250
        %4309 = vmatpush.msra.mxu0 %v4249
        %4310 = vmatmul.f32.gmra.mxu0 %v4271
        %v4311 = vpop.f32.mrf.mxu0
        %v4312 = vadd.f32 %v4292, %v4311
        %4313 = vdwg.mxu0
        %v4314 = vadd.f32 %v4201, %v4312
        %4315 = vst [vmem:[#allocation1] sm:$0xff] %v3921
        %4316 = vst [vmem:[#allocation1 + $0x9] sm:$0xff] %v3922
        %4317 = vst [vmem:[#allocation1 + $0x12] sm:$0xff] %v3923
        %4318 = vst [vmem:[#allocation1 + $0x1b] sm:$0xff] %v3924
        %4319 = vst [vmem:[#allocation1 + $0x24] sm:$0xff] %v3925
        %4320 = vst [vmem:[#allocation1 + $0x2d] sm:$0xff] %v3926
        %4321 = vst [vmem:[#allocation1 + $0x36] sm:$0xff] %v3927
        %4322 = vst [vmem:[#allocation1 + $0x3f] sm:$0xff] %v3928
        %s4323 = scalar_lea.vmem [#allocation1], 3
        %v4324 = vld [vmem:[%s4323] ss:$9 sm:$0xff]
        %4325 = vst [vmem:[#allocation1] sm:$0xff] %v3929
        %4326 = vst [vmem:[#allocation1 + $0x9] sm:$0xff] %v3930
        %4327 = vst [vmem:[#allocation1 + $0x12] sm:$0xff] %v3931
        %4328 = vst [vmem:[#allocation1 + $0x1b] sm:$0xff] %v3932
        %4329 = vst [vmem:[#allocation1 + $0x24] sm:$0xff] %v3933
        %4330 = vst [vmem:[#allocation1 + $0x2d] sm:$0xff] %v3934
        %4331 = vst [vmem:[#allocation1 + $0x36] sm:$0xff] %v3935
        %4332 = vst [vmem:[#allocation1 + $0x3f] sm:$0xff] %v3936
        %v4333 = vld [vmem:[%s4323] ss:$9 sm:$0xff]
        %v4337 = vunpack.c.l.s4 1966171168
        %v4338 = vunpack.c.0.s8 %v4337
        %v4339 = vperm.slane %v4324, %v4338
        %v4341 = vunpack.c.l.s4 1966171168
        %v4342 = vunpack.c.0.s8 %v4341
        %v4343 = vperm.slane %v4333, %v4342
        %s4344 = scalar_lea.vmem %s7, 768
        %v4345 = vld [vmem:[%s4344] sm:$0xff]
        %v4346 = vld [vmem:[%s4344 + $0x8] sm:$0xff]
        %v4347 = vld [vmem:[%s4344 + $0x10] sm:$0xff]
        %v4348 = vld [vmem:[%s4344 + $0x18] sm:$0xff]
        %v4349 = vld [vmem:[%s4344 + $0x20] sm:$0xff]
        %v4350 = vld [vmem:[%s4344 + $0x28] sm:$0xff]
        %v4351 = vld [vmem:[%s4344 + $0x30] sm:$0xff]
        %v4352 = vld [vmem:[%s4344 + $0x38] sm:$0xff]
        %v4353 = vld [vmem:[%s4344 + $0x40] sm:$0xff]
        %v4354 = vld [vmem:[%s4344 + $0x48] sm:$0xff]
        %v4355 = vld [vmem:[%s4344 + $0x50] sm:$0xff]
        %v4356 = vld [vmem:[%s4344 + $0x58] sm:$0xff]
        %v4357 = vld [vmem:[%s4344 + $0x60] sm:$0xff]
        %v4358 = vld [vmem:[%s4344 + $0x68] sm:$0xff]
        %v4359 = vld [vmem:[%s4344 + $0x70] sm:$0xff]
        %v4360 = vld [vmem:[%s4344 + $0x78] sm:$0xff]
        %v4361 = vld [vmem:[%s4344 + $0x80] sm:$0xff]
        %v4362 = vld [vmem:[%s4344 + $0x88] sm:$0xff]
        %v4363 = vld [vmem:[%s4344 + $0x90] sm:$0xff]
        %v4364 = vld [vmem:[%s4344 + $0x98] sm:$0xff]
        %v4365 = vld [vmem:[%s4344 + $0xa0] sm:$0xff]
        %v4366 = vld [vmem:[%s4344 + $0xa8] sm:$0xff]
        %v4367 = vld [vmem:[%s4344 + $0xb0] sm:$0xff]
        %v4368 = vld [vmem:[%s4344 + $0xb8] sm:$0xff]
        %v4369 = vld [vmem:[%s4344 + $0xc0] sm:$0xff]
        %v4370 = vld [vmem:[%s4344 + $0xc8] sm:$0xff]
        %v4371 = vld [vmem:[%s4344 + $0xd0] sm:$0xff]
        %v4372 = vld [vmem:[%s4344 + $0xd8] sm:$0xff]
        %v4373 = vld [vmem:[%s4344 + $0xe0] sm:$0xff]
        %v4374 = vld [vmem:[%s4344 + $0xe8] sm:$0xff]
        %v4375 = vld [vmem:[%s4344 + $0xf0] sm:$0xff]
        %v4376 = vld [vmem:[%s4344 + $0xf8] sm:$0xff]
        %4379 = vst [vmem:[#allocation1] ss:$2 sm:$0xff] %v4339
        %s4380 = scalar_lea.vmem [#allocation1], 1
        %4381 = vst [vmem:[%s4380] ss:$2 sm:$0xff] %v4343
        %v4382 = vld.sshfl [vmem:[#allocation1] sm:$0xff pattern:$0x75316420]
        %v4383 = vld.sshfl [vmem:[#allocation1 + $0x8] sm:$0xff pattern:$0x75316420]
        %4386 = vmatpush.msra.mxu0 %v4360
        %4387 = vmatpush.msra.mxu0 %v4359
        %4388 = vmatpush.msra.mxu0 %v4358
        %4389 = vmatpush.msra.mxu0 %v4357
        %4390 = vmatpush.msra.mxu0 %v4356
        %4391 = vmatpush.msra.mxu0 %v4355
        %4392 = vmatpush.msra.mxu0 %v4354
        %4393 = vmatpush.msra.mxu0 %v4353
        %4394 = vmatpush.msra.mxu0 %v4352
        %4395 = vmatpush.msra.mxu0 %v4351
        %4396 = vmatpush.msra.mxu0 %v4350
        %4397 = vmatpush.msra.mxu0 %v4349
        %4398 = vmatpush.msra.mxu0 %v4348
        %4399 = vmatpush.msra.mxu0 %v4347
        %4400 = vmatpush.msra.mxu0 %v4346
        %4401 = vmatpush.msra.mxu0 %v4345
        %4402 = vmatmul.f32.gmra.mxu0 %v4382
        %v4403 = vpop.f32.mrf.mxu0
        %v4404 = vadd.f32 0.0, %v4403
        %4405 = vdwg.mxu0
        %4406 = vmatpush.msra.mxu0 %v4376
        %4407 = vmatpush.msra.mxu0 %v4375
        %4408 = vmatpush.msra.mxu0 %v4374
        %4409 = vmatpush.msra.mxu0 %v4373
        %4410 = vmatpush.msra.mxu0 %v4372
        %4411 = vmatpush.msra.mxu0 %v4371
        %4412 = vmatpush.msra.mxu0 %v4370
        %4413 = vmatpush.msra.mxu0 %v4369
        %4414 = vmatpush.msra.mxu0 %v4368
        %4415 = vmatpush.msra.mxu0 %v4367
        %4416 = vmatpush.msra.mxu0 %v4366
        %4417 = vmatpush.msra.mxu0 %v4365
        %4418 = vmatpush.msra.mxu0 %v4364
        %4419 = vmatpush.msra.mxu0 %v4363
        %4420 = vmatpush.msra.mxu0 %v4362
        %4421 = vmatpush.msra.mxu0 %v4361
        %4422 = vmatmul.f32.gmra.mxu0 %v4383
        %v4423 = vpop.f32.mrf.mxu0
        %v4424 = vadd.f32 %v4404, %v4423
        %4425 = vdwg.mxu0
        %v4426 = vadd.f32 %v4314, %v4424
        %4427 = vst [vmem:[#allocation1] sm:$0xff] %v3921
        %4428 = vst [vmem:[#allocation1 + $0x9] sm:$0xff] %v3922
        %4429 = vst [vmem:[#allocation1 + $0x12] sm:$0xff] %v3923
        %4430 = vst [vmem:[#allocation1 + $0x1b] sm:$0xff] %v3924
        %4431 = vst [vmem:[#allocation1 + $0x24] sm:$0xff] %v3925
        %4432 = vst [vmem:[#allocation1 + $0x2d] sm:$0xff] %v3926
        %4433 = vst [vmem:[#allocation1 + $0x36] sm:$0xff] %v3927
        %4434 = vst [vmem:[#allocation1 + $0x3f] sm:$0xff] %v3928
        %s4435 = scalar_lea.vmem [#allocation1], 4
        %v4436 = vld [vmem:[%s4435] ss:$9 sm:$0xff]
        %4437 = vst [vmem:[#allocation1] sm:$0xff] %v3929
        %4438 = vst [vmem:[#allocation1 + $0x9] sm:$0xff] %v3930
        %4439 = vst [vmem:[#allocation1 + $0x12] sm:$0xff] %v3931
        %4440 = vst [vmem:[#allocation1 + $0x1b] sm:$0xff] %v3932
        %4441 = vst [vmem:[#allocation1 + $0x24] sm:$0xff] %v3933
        %4442 = vst [vmem:[#allocation1 + $0x2d] sm:$0xff] %v3934
        %4443 = vst [vmem:[#allocation1 + $0x36] sm:$0xff] %v3935
        %4444 = vst [vmem:[#allocation1 + $0x3f] sm:$0xff] %v3936
        %v4445 = vld [vmem:[%s4435] ss:$9 sm:$0xff]
        %v4449 = vunpack.c.l.s4 1966171168
        %v4450 = vunpack.c.0.s8 %v4449
        %v4451 = vperm.slane %v4436, %v4450
        %v4453 = vunpack.c.l.s4 1966171168
        %v4454 = vunpack.c.0.s8 %v4453
        %v4455 = vperm.slane %v4445, %v4454
        %s4456 = scalar_lea.vmem %s7, 1024
        %v4457 = vld [vmem:[%s4456] sm:$0xff]
        %v4458 = vld [vmem:[%s4456 + $0x8] sm:$0xff]
        %v4459 = vld [vmem:[%s4456 + $0x10] sm:$0xff]
        %v4460 = vld [vmem:[%s4456 + $0x18] sm:$0xff]
        %v4461 = vld [vmem:[%s4456 + $0x20] sm:$0xff]
        %v4462 = vld [vmem:[%s4456 + $0x28] sm:$0xff]
        %v4463 = vld [vmem:[%s4456 + $0x30] sm:$0xff]
        %v4464 = vld [vmem:[%s4456 + $0x38] sm:$0xff]
        %v4465 = vld [vmem:[%s4456 + $0x40] sm:$0xff]
        %v4466 = vld [vmem:[%s4456 + $0x48] sm:$0xff]
        %v4467 = vld [vmem:[%s4456 + $0x50] sm:$0xff]
        %v4468 = vld [vmem:[%s4456 + $0x58] sm:$0xff]
        %v4469 = vld [vmem:[%s4456 + $0x60] sm:$0xff]
        %v4470 = vld [vmem:[%s4456 + $0x68] sm:$0xff]
        %v4471 = vld [vmem:[%s4456 + $0x70] sm:$0xff]
        %v4472 = vld [vmem:[%s4456 + $0x78] sm:$0xff]
        %v4473 = vld [vmem:[%s4456 + $0x80] sm:$0xff]
        %v4474 = vld [vmem:[%s4456 + $0x88] sm:$0xff]
        %v4475 = vld [vmem:[%s4456 + $0x90] sm:$0xff]
        %v4476 = vld [vmem:[%s4456 + $0x98] sm:$0xff]
        %v4477 = vld [vmem:[%s4456 + $0xa0] sm:$0xff]
        %v4478 = vld [vmem:[%s4456 + $0xa8] sm:$0xff]
        %v4479 = vld [vmem:[%s4456 + $0xb0] sm:$0xff]
        %v4480 = vld [vmem:[%s4456 + $0xb8] sm:$0xff]
        %v4481 = vld [vmem:[%s4456 + $0xc0] sm:$0xff]
        %v4482 = vld [vmem:[%s4456 + $0xc8] sm:$0xff]
        %v4483 = vld [vmem:[%s4456 + $0xd0] sm:$0xff]
        %v4484 = vld [vmem:[%s4456 + $0xd8] sm:$0xff]
        %v4485 = vld [vmem:[%s4456 + $0xe0] sm:$0xff]
        %v4486 = vld [vmem:[%s4456 + $0xe8] sm:$0xff]
        %v4487 = vld [vmem:[%s4456 + $0xf0] sm:$0xff]
        %v4488 = vld [vmem:[%s4456 + $0xf8] sm:$0xff]
        %4491 = vst [vmem:[#allocation1] ss:$2 sm:$0xff] %v4451
        %s4492 = scalar_lea.vmem [#allocation1], 1
        %4493 = vst [vmem:[%s4492] ss:$2 sm:$0xff] %v4455
        %v4494 = vld.sshfl [vmem:[#allocation1] sm:$0xff pattern:$0x75316420]
        %v4495 = vld.sshfl [vmem:[#allocation1 + $0x8] sm:$0xff pattern:$0x75316420]
        %4498 = vmatpush.msra.mxu0 %v4472
        %4499 = vmatpush.msra.mxu0 %v4471
        %4500 = vmatpush.msra.mxu0 %v4470
        %4501 = vmatpush.msra.mxu0 %v4469
        %4502 = vmatpush.msra.mxu0 %v4468
        %4503 = vmatpush.msra.mxu0 %v4467
        %4504 = vmatpush.msra.mxu0 %v4466
        %4505 = vmatpush.msra.mxu0 %v4465
        %4506 = vmatpush.msra.mxu0 %v4464
        %4507 = vmatpush.msra.mxu0 %v4463
        %4508 = vmatpush.msra.mxu0 %v4462
        %4509 = vmatpush.msra.mxu0 %v4461
        %4510 = vmatpush.msra.mxu0 %v4460
        %4511 = vmatpush.msra.mxu0 %v4459
        %4512 = vmatpush.msra.mxu0 %v4458
        %4513 = vmatpush.msra.mxu0 %v4457
        %4514 = vmatmul.f32.gmra.mxu0 %v4494
        %v4515 = vpop.f32.mrf.mxu0
        %v4516 = vadd.f32 0.0, %v4515
        %4517 = vdwg.mxu0
        %4518 = vmatpush.msra.mxu0 %v4488
        %4519 = vmatpush.msra.mxu0 %v4487
        %4520 = vmatpush.msra.mxu0 %v4486
        %4521 = vmatpush.msra.mxu0 %v4485
        %4522 = vmatpush.msra.mxu0 %v4484
        %4523 = vmatpush.msra.mxu0 %v4483
        %4524 = vmatpush.msra.mxu0 %v4482
        %4525 = vmatpush.msra.mxu0 %v4481
        %4526 = vmatpush.msra.mxu0 %v4480
        %4527 = vmatpush.msra.mxu0 %v4479
        %4528 = vmatpush.msra.mxu0 %v4478
        %4529 = vmatpush.msra.mxu0 %v4477
        %4530 = vmatpush.msra.mxu0 %v4476
        %4531 = vmatpush.msra.mxu0 %v4475
        %4532 = vmatpush.msra.mxu0 %v4474
        %4533 = vmatpush.msra.mxu0 %v4473
        %4534 = vmatmul.f32.gmra.mxu0 %v4495
        %v4535 = vpop.f32.mrf.mxu0
        %v4536 = vadd.f32 %v4516, %v4535
        %4537 = vdwg.mxu0
        %v4538 = vadd.f32 %v4426, %v4536
        %4539 = vst [vmem:[#allocation1] sm:$0xff] %v3921
        %4540 = vst [vmem:[#allocation1 + $0x9] sm:$0xff] %v3922
        %4541 = vst [vmem:[#allocation1 + $0x12] sm:$0xff] %v3923
        %4542 = vst [vmem:[#allocation1 + $0x1b] sm:$0xff] %v3924
        %4543 = vst [vmem:[#allocation1 + $0x24] sm:$0xff] %v3925
        %4544 = vst [vmem:[#allocation1 + $0x2d] sm:$0xff] %v3926
        %4545 = vst [vmem:[#allocation1 + $0x36] sm:$0xff] %v3927
        %4546 = vst [vmem:[#allocation1 + $0x3f] sm:$0xff] %v3928
        %s4547 = scalar_lea.vmem [#allocation1], 5
        %v4548 = vld [vmem:[%s4547] ss:$9 sm:$0xff]
        %4549 = vst [vmem:[#allocation1] sm:$0xff] %v3929
        %4550 = vst [vmem:[#allocation1 + $0x9] sm:$0xff] %v3930
        %4551 = vst [vmem:[#allocation1 + $0x12] sm:$0xff] %v3931
        %4552 = vst [vmem:[#allocation1 + $0x1b] sm:$0xff] %v3932
        %4553 = vst [vmem:[#allocation1 + $0x24] sm:$0xff] %v3933
        %4554 = vst [vmem:[#allocation1 + $0x2d] sm:$0xff] %v3934
        %4555 = vst [vmem:[#allocation1 + $0x36] sm:$0xff] %v3935
        %4556 = vst [vmem:[#allocation1 + $0x3f] sm:$0xff] %v3936
        %v4557 = vld [vmem:[%s4547] ss:$9 sm:$0xff]
        %v4561 = vunpack.c.l.s4 1966171168
        %v4562 = vunpack.c.0.s8 %v4561
        %v4563 = vperm.slane %v4548, %v4562
        %v4565 = vunpack.c.l.s4 1966171168
        %v4566 = vunpack.c.0.s8 %v4565
        %v4567 = vperm.slane %v4557, %v4566
        %s4568 = scalar_lea.vmem %s7, 1280
        %v4569 = vld [vmem:[%s4568] sm:$0xff]
        %v4570 = vld [vmem:[%s4568 + $0x8] sm:$0xff]
        %v4571 = vld [vmem:[%s4568 + $0x10] sm:$0xff]
        %v4572 = vld [vmem:[%s4568 + $0x18] sm:$0xff]
        %v4573 = vld [vmem:[%s4568 + $0x20] sm:$0xff]
        %v4574 = vld [vmem:[%s4568 + $0x28] sm:$0xff]
        %v4575 = vld [vmem:[%s4568 + $0x30] sm:$0xff]
        %v4576 = vld [vmem:[%s4568 + $0x38] sm:$0xff]
        %v4577 = vld [vmem:[%s4568 + $0x40] sm:$0xff]
        %v4578 = vld [vmem:[%s4568 + $0x48] sm:$0xff]
        %v4579 = vld [vmem:[%s4568 + $0x50] sm:$0xff]
        %v4580 = vld [vmem:[%s4568 + $0x58] sm:$0xff]
        %v4581 = vld [vmem:[%s4568 + $0x60] sm:$0xff]
        %v4582 = vld [vmem:[%s4568 + $0x68] sm:$0xff]
        %v4583 = vld [vmem:[%s4568 + $0x70] sm:$0xff]
        %v4584 = vld [vmem:[%s4568 + $0x78] sm:$0xff]
        %v4585 = vld [vmem:[%s4568 + $0x80] sm:$0xff]
        %v4586 = vld [vmem:[%s4568 + $0x88] sm:$0xff]
        %v4587 = vld [vmem:[%s4568 + $0x90] sm:$0xff]
        %v4588 = vld [vmem:[%s4568 + $0x98] sm:$0xff]
        %v4589 = vld [vmem:[%s4568 + $0xa0] sm:$0xff]
        %v4590 = vld [vmem:[%s4568 + $0xa8] sm:$0xff]
        %v4591 = vld [vmem:[%s4568 + $0xb0] sm:$0xff]
        %v4592 = vld [vmem:[%s4568 + $0xb8] sm:$0xff]
        %v4593 = vld [vmem:[%s4568 + $0xc0] sm:$0xff]
        %v4594 = vld [vmem:[%s4568 + $0xc8] sm:$0xff]
        %v4595 = vld [vmem:[%s4568 + $0xd0] sm:$0xff]
        %v4596 = vld [vmem:[%s4568 + $0xd8] sm:$0xff]
        %v4597 = vld [vmem:[%s4568 + $0xe0] sm:$0xff]
        %v4598 = vld [vmem:[%s4568 + $0xe8] sm:$0xff]
        %v4599 = vld [vmem:[%s4568 + $0xf0] sm:$0xff]
        %v4600 = vld [vmem:[%s4568 + $0xf8] sm:$0xff]
        %4603 = vst [vmem:[#allocation1] ss:$2 sm:$0xff] %v4563
        %s4604 = scalar_lea.vmem [#allocation1], 1
        %4605 = vst [vmem:[%s4604] ss:$2 sm:$0xff] %v4567
        %v4606 = vld.sshfl [vmem:[#allocation1] sm:$0xff pattern:$0x75316420]
        %v4607 = vld.sshfl [vmem:[#allocation1 + $0x8] sm:$0xff pattern:$0x75316420]
        %4610 = vmatpush.msra.mxu0 %v4584
        %4611 = vmatpush.msra.mxu0 %v4583
        %4612 = vmatpush.msra.mxu0 %v4582
        %4613 = vmatpush.msra.mxu0 %v4581
        %4614 = vmatpush.msra.mxu0 %v4580
        %4615 = vmatpush.msra.mxu0 %v4579
        %4616 = vmatpush.msra.mxu0 %v4578
        %4617 = vmatpush.msra.mxu0 %v4577
        %4618 = vmatpush.msra.mxu0 %v4576
        %4619 = vmatpush.msra.mxu0 %v4575
        %4620 = vmatpush.msra.mxu0 %v4574
        %4621 = vmatpush.msra.mxu0 %v4573
        %4622 = vmatpush.msra.mxu0 %v4572
        %4623 = vmatpush.msra.mxu0 %v4571
        %4624 = vmatpush.msra.mxu0 %v4570
        %4625 = vmatpush.msra.mxu0 %v4569
        %4626 = vmatmul.f32.gmra.mxu0 %v4606
        %v4627 = vpop.f32.mrf.mxu0
        %v4628 = vadd.f32 0.0, %v4627
        %4629 = vdwg.mxu0
        %4630 = vmatpush.msra.mxu0 %v4600
        %4631 = vmatpush.msra.mxu0 %v4599
        %4632 = vmatpush.msra.mxu0 %v4598
        %4633 = vmatpush.msra.mxu0 %v4597
        %4634 = vmatpush.msra.mxu0 %v4596
        %4635 = vmatpush.msra.mxu0 %v4595
        %4636 = vmatpush.msra.mxu0 %v4594
        %4637 = vmatpush.msra.mxu0 %v4593
        %4638 = vmatpush.msra.mxu0 %v4592
        %4639 = vmatpush.msra.mxu0 %v4591
        %4640 = vmatpush.msra.mxu0 %v4590
        %4641 = vmatpush.msra.mxu0 %v4589
        %4642 = vmatpush.msra.mxu0 %v4588
        %4643 = vmatpush.msra.mxu0 %v4587
        %4644 = vmatpush.msra.mxu0 %v4586
        %4645 = vmatpush.msra.mxu0 %v4585
        %4646 = vmatmul.f32.gmra.mxu0 %v4607
        %v4647 = vpop.f32.mrf.mxu0
        %v4648 = vadd.f32 %v4628, %v4647
        %4649 = vdwg.mxu0
        %v4650 = vadd.f32 %v4538, %v4648
        %4651 = vst [vmem:[#allocation1] sm:$0xff] %v3921
        %4652 = vst [vmem:[#allocation1 + $0x9] sm:$0xff] %v3922
        %4653 = vst [vmem:[#allocation1 + $0x12] sm:$0xff] %v3923
        %4654 = vst [vmem:[#allocation1 + $0x1b] sm:$0xff] %v3924
        %4655 = vst [vmem:[#allocation1 + $0x24] sm:$0xff] %v3925
        %4656 = vst [vmem:[#allocation1 + $0x2d] sm:$0xff] %v3926
        %4657 = vst [vmem:[#allocation1 + $0x36] sm:$0xff] %v3927
        %4658 = vst [vmem:[#allocation1 + $0x3f] sm:$0xff] %v3928
        %s4659 = scalar_lea.vmem [#allocation1], 6
        %v4660 = vld [vmem:[%s4659] ss:$9 sm:$0xff]
        %4661 = vst [vmem:[#allocation1] sm:$0xff] %v3929
        %4662 = vst [vmem:[#allocation1 + $0x9] sm:$0xff] %v3930
        %4663 = vst [vmem:[#allocation1 + $0x12] sm:$0xff] %v3931
        %4664 = vst [vmem:[#allocation1 + $0x1b] sm:$0xff] %v3932
        %4665 = vst [vmem:[#allocation1 + $0x24] sm:$0xff] %v3933
        %4666 = vst [vmem:[#allocation1 + $0x2d] sm:$0xff] %v3934
        %4667 = vst [vmem:[#allocation1 + $0x36] sm:$0xff] %v3935
        %4668 = vst [vmem:[#allocation1 + $0x3f] sm:$0xff] %v3936
        %v4669 = vld [vmem:[%s4659] ss:$9 sm:$0xff]
        %v4673 = vunpack.c.l.s4 1966171168
        %v4674 = vunpack.c.0.s8 %v4673
        %v4675 = vperm.slane %v4660, %v4674
        %v4677 = vunpack.c.l.s4 1966171168
        %v4678 = vunpack.c.0.s8 %v4677
        %v4679 = vperm.slane %v4669, %v4678
        %s4680 = scalar_lea.vmem %s7, 1536
        %v4681 = vld [vmem:[%s4680] sm:$0xff]
        %v4682 = vld [vmem:[%s4680 + $0x8] sm:$0xff]
        %v4683 = vld [vmem:[%s4680 + $0x10] sm:$0xff]
        %v4684 = vld [vmem:[%s4680 + $0x18] sm:$0xff]
        %v4685 = vld [vmem:[%s4680 + $0x20] sm:$0xff]
        %v4686 = vld [vmem:[%s4680 + $0x28] sm:$0xff]
        %v4687 = vld [vmem:[%s4680 + $0x30] sm:$0xff]
        %v4688 = vld [vmem:[%s4680 + $0x38] sm:$0xff]
        %v4689 = vld [vmem:[%s4680 + $0x40] sm:$0xff]
        %v4690 = vld [vmem:[%s4680 + $0x48] sm:$0xff]
        %v4691 = vld [vmem:[%s4680 + $0x50] sm:$0xff]
        %v4692 = vld [vmem:[%s4680 + $0x58] sm:$0xff]
        %v4693 = vld [vmem:[%s4680 + $0x60] sm:$0xff]
        %v4694 = vld [vmem:[%s4680 + $0x68] sm:$0xff]
        %v4695 = vld [vmem:[%s4680 + $0x70] sm:$0xff]
        %v4696 = vld [vmem:[%s4680 + $0x78] sm:$0xff]
        %v4697 = vld [vmem:[%s4680 + $0x80] sm:$0xff]
        %v4698 = vld [vmem:[%s4680 + $0x88] sm:$0xff]
        %v4699 = vld [vmem:[%s4680 + $0x90] sm:$0xff]
        %v4700 = vld [vmem:[%s4680 + $0x98] sm:$0xff]
        %v4701 = vld [vmem:[%s4680 + $0xa0] sm:$0xff]
        %v4702 = vld [vmem:[%s4680 + $0xa8] sm:$0xff]
        %v4703 = vld [vmem:[%s4680 + $0xb0] sm:$0xff]
        %v4704 = vld [vmem:[%s4680 + $0xb8] sm:$0xff]
        %v4705 = vld [vmem:[%s4680 + $0xc0] sm:$0xff]
        %v4706 = vld [vmem:[%s4680 + $0xc8] sm:$0xff]
        %v4707 = vld [vmem:[%s4680 + $0xd0] sm:$0xff]
        %v4708 = vld [vmem:[%s4680 + $0xd8] sm:$0xff]
        %v4709 = vld [vmem:[%s4680 + $0xe0] sm:$0xff]
        %v4710 = vld [vmem:[%s4680 + $0xe8] sm:$0xff]
        %v4711 = vld [vmem:[%s4680 + $0xf0] sm:$0xff]
        %v4712 = vld [vmem:[%s4680 + $0xf8] sm:$0xff]
        %4715 = vst [vmem:[#allocation1] ss:$2 sm:$0xff] %v4675
        %s4716 = scalar_lea.vmem [#allocation1], 1
        %4717 = vst [vmem:[%s4716] ss:$2 sm:$0xff] %v4679
        %v4718 = vld.sshfl [vmem:[#allocation1] sm:$0xff pattern:$0x75316420]
        %v4719 = vld.sshfl [vmem:[#allocation1 + $0x8] sm:$0xff pattern:$0x75316420]
        %4722 = vmatpush.msra.mxu0 %v4696
        %4723 = vmatpush.msra.mxu0 %v4695
        %4724 = vmatpush.msra.mxu0 %v4694
        %4725 = vmatpush.msra.mxu0 %v4693
        %4726 = vmatpush.msra.mxu0 %v4692
        %4727 = vmatpush.msra.mxu0 %v4691
        %4728 = vmatpush.msra.mxu0 %v4690
        %4729 = vmatpush.msra.mxu0 %v4689
        %4730 = vmatpush.msra.mxu0 %v4688
        %4731 = vmatpush.msra.mxu0 %v4687
        %4732 = vmatpush.msra.mxu0 %v4686
        %4733 = vmatpush.msra.mxu0 %v4685
        %4734 = vmatpush.msra.mxu0 %v4684
        %4735 = vmatpush.msra.mxu0 %v4683
        %4736 = vmatpush.msra.mxu0 %v4682
        %4737 = vmatpush.msra.mxu0 %v4681
        %4738 = vmatmul.f32.gmra.mxu0 %v4718
        %v4739 = vpop.f32.mrf.mxu0
        %v4740 = vadd.f32 0.0, %v4739
        %4741 = vdwg.mxu0
        %4742 = vmatpush.msra.mxu0 %v4712
        %4743 = vmatpush.msra.mxu0 %v4711
        %4744 = vmatpush.msra.mxu0 %v4710
        %4745 = vmatpush.msra.mxu0 %v4709
        %4746 = vmatpush.msra.mxu0 %v4708
        %4747 = vmatpush.msra.mxu0 %v4707
        %4748 = vmatpush.msra.mxu0 %v4706
        %4749 = vmatpush.msra.mxu0 %v4705
        %4750 = vmatpush.msra.mxu0 %v4704
        %4751 = vmatpush.msra.mxu0 %v4703
        %4752 = vmatpush.msra.mxu0 %v4702
        %4753 = vmatpush.msra.mxu0 %v4701
        %4754 = vmatpush.msra.mxu0 %v4700
        %4755 = vmatpush.msra.mxu0 %v4699
        %4756 = vmatpush.msra.mxu0 %v4698
        %4757 = vmatpush.msra.mxu0 %v4697
        %4758 = vmatmul.f32.gmra.mxu0 %v4719
        %v4759 = vpop.f32.mrf.mxu0
        %v4760 = vadd.f32 %v4740, %v4759
        %4761 = vdwg.mxu0
        %v4762 = vadd.f32 %v4650, %v4760
        %4763 = vst [vmem:[#allocation1] sm:$0xff] %v3921
        %4764 = vst [vmem:[#allocation1 + $0x9] sm:$0xff] %v3922
        %4765 = vst [vmem:[#allocation1 + $0x12] sm:$0xff] %v3923
        %4766 = vst [vmem:[#allocation1 + $0x1b] sm:$0xff] %v3924
        %4767 = vst [vmem:[#allocation1 + $0x24] sm:$0xff] %v3925
        %4768 = vst [vmem:[#allocation1 + $0x2d] sm:$0xff] %v3926
        %4769 = vst [vmem:[#allocation1 + $0x36] sm:$0xff] %v3927
        %4770 = vst [vmem:[#allocation1 + $0x3f] sm:$0xff] %v3928
        %s4771 = scalar_lea.vmem [#allocation1], 7
        %v4772 = vld [vmem:[%s4771] ss:$9 sm:$0xff]
        %4773 = vst [vmem:[#allocation1] sm:$0xff] %v3929
        %4774 = vst [vmem:[#allocation1 + $0x9] sm:$0xff] %v3930
        %4775 = vst [vmem:[#allocation1 + $0x12] sm:$0xff] %v3931
        %4776 = vst [vmem:[#allocation1 + $0x1b] sm:$0xff] %v3932
        %4777 = vst [vmem:[#allocation1 + $0x24] sm:$0xff] %v3933
        %4778 = vst [vmem:[#allocation1 + $0x2d] sm:$0xff] %v3934
        %4779 = vst [vmem:[#allocation1 + $0x36] sm:$0xff] %v3935
        %4780 = vst [vmem:[#allocation1 + $0x3f] sm:$0xff] %v3936
        %v4781 = vld [vmem:[%s4771] ss:$9 sm:$0xff]
        %v4785 = vunpack.c.l.s4 1966171168
        %v4786 = vunpack.c.0.s8 %v4785
        %v4787 = vperm.slane %v4772, %v4786
        %v4789 = vunpack.c.l.s4 1966171168
        %v4790 = vunpack.c.0.s8 %v4789
        %v4791 = vperm.slane %v4781, %v4790
        %s4792 = scalar_lea.vmem %s7, 1792
        %v4793 = vld [vmem:[%s4792] sm:$0xff]
        %v4794 = vld [vmem:[%s4792 + $0x8] sm:$0xff]
        %v4795 = vld [vmem:[%s4792 + $0x10] sm:$0xff]
        %v4796 = vld [vmem:[%s4792 + $0x18] sm:$0xff]
        %v4797 = vld [vmem:[%s4792 + $0x20] sm:$0xff]
        %v4798 = vld [vmem:[%s4792 + $0x28] sm:$0xff]
        %v4799 = vld [vmem:[%s4792 + $0x30] sm:$0xff]
        %v4800 = vld [vmem:[%s4792 + $0x38] sm:$0xff]
        %v4801 = vld [vmem:[%s4792 + $0x40] sm:$0xff]
        %v4802 = vld [vmem:[%s4792 + $0x48] sm:$0xff]
        %v4803 = vld [vmem:[%s4792 + $0x50] sm:$0xff]
        %v4804 = vld [vmem:[%s4792 + $0x58] sm:$0xff]
        %v4805 = vld [vmem:[%s4792 + $0x60] sm:$0xff]
        %v4806 = vld [vmem:[%s4792 + $0x68] sm:$0xff]
        %v4807 = vld [vmem:[%s4792 + $0x70] sm:$0xff]
        %v4808 = vld [vmem:[%s4792 + $0x78] sm:$0xff]
        %v4809 = vld [vmem:[%s4792 + $0x80] sm:$0xff]
        %v4810 = vld [vmem:[%s4792 + $0x88] sm:$0xff]
        %v4811 = vld [vmem:[%s4792 + $0x90] sm:$0xff]
        %v4812 = vld [vmem:[%s4792 + $0x98] sm:$0xff]
        %v4813 = vld [vmem:[%s4792 + $0xa0] sm:$0xff]
        %v4814 = vld [vmem:[%s4792 + $0xa8] sm:$0xff]
        %v4815 = vld [vmem:[%s4792 + $0xb0] sm:$0xff]
        %v4816 = vld [vmem:[%s4792 + $0xb8] sm:$0xff]
        %v4817 = vld [vmem:[%s4792 + $0xc0] sm:$0xff]
        %v4818 = vld [vmem:[%s4792 + $0xc8] sm:$0xff]
        %v4819 = vld [vmem:[%s4792 + $0xd0] sm:$0xff]
        %v4820 = vld [vmem:[%s4792 + $0xd8] sm:$0xff]
        %v4821 = vld [vmem:[%s4792 + $0xe0] sm:$0xff]
        %v4822 = vld [vmem:[%s4792 + $0xe8] sm:$0xff]
        %v4823 = vld [vmem:[%s4792 + $0xf0] sm:$0xff]
        %v4824 = vld [vmem:[%s4792 + $0xf8] sm:$0xff]
        %4827 = vst [vmem:[#allocation1] ss:$2 sm:$0xff] %v4787
        %s4828 = scalar_lea.vmem [#allocation1], 1
        %4829 = vst [vmem:[%s4828] ss:$2 sm:$0xff] %v4791
        %v4830 = vld.sshfl [vmem:[#allocation1] sm:$0xff pattern:$0x75316420]
        %v4831 = vld.sshfl [vmem:[#allocation1 + $0x8] sm:$0xff pattern:$0x75316420]
        %4834 = vmatpush.msra.mxu0 %v4808
        %4835 = vmatpush.msra.mxu0 %v4807
        %4836 = vmatpush.msra.mxu0 %v4806
        %4837 = vmatpush.msra.mxu0 %v4805
        %4838 = vmatpush.msra.mxu0 %v4804
        %4839 = vmatpush.msra.mxu0 %v4803
        %4840 = vmatpush.msra.mxu0 %v4802
        %4841 = vmatpush.msra.mxu0 %v4801
        %4842 = vmatpush.msra.mxu0 %v4800
        %4843 = vmatpush.msra.mxu0 %v4799
        %4844 = vmatpush.msra.mxu0 %v4798
        %4845 = vmatpush.msra.mxu0 %v4797
        %4846 = vmatpush.msra.mxu0 %v4796
        %4847 = vmatpush.msra.mxu0 %v4795
        %4848 = vmatpush.msra.mxu0 %v4794
        %4849 = vmatpush.msra.mxu0 %v4793
        %4850 = vmatmul.f32.gmra.mxu0 %v4830
        %v4851 = vpop.f32.mrf.mxu0
        %v4852 = vadd.f32 0.0, %v4851
        %4853 = vdwg.mxu0
        %4854 = vmatpush.msra.mxu0 %v4824
        %4855 = vmatpush.msra.mxu0 %v4823
        %4856 = vmatpush.msra.mxu0 %v4822
        %4857 = vmatpush.msra.mxu0 %v4821
        %4858 = vmatpush.msra.mxu0 %v4820
        %4859 = vmatpush.msra.mxu0 %v4819
        %4860 = vmatpush.msra.mxu0 %v4818
        %4861 = vmatpush.msra.mxu0 %v4817
        %4862 = vmatpush.msra.mxu0 %v4816
        %4863 = vmatpush.msra.mxu0 %v4815
        %4864 = vmatpush.msra.mxu0 %v4814
        %4865 = vmatpush.msra.mxu0 %v4813
        %4866 = vmatpush.msra.mxu0 %v4812
        %4867 = vmatpush.msra.mxu0 %v4811
        %4868 = vmatpush.msra.mxu0 %v4810
        %4869 = vmatpush.msra.mxu0 %v4809
        %4870 = vmatmul.f32.gmra.mxu0 %v4831
        %v4871 = vpop.f32.mrf.mxu0
        %v4872 = vadd.f32 %v4852, %v4871
        %4873 = vdwg.mxu0
        %v4874 = vadd.f32 %v4762, %v4872
        %v4891 = vrot.slane %v3938, 7
        %v4892 = vrot.slane %v3939, 6
        %v4893 = vrot.slane %v3940, 5
        %v4894 = vrot.slane %v3941, 4
        %v4895 = vrot.slane %v3942, 3
        %v4896 = vrot.slane %v3943, 2
        %v4897 = vrot.slane %v3944, 1
        %v4898 = vrot.slane %v3946, 7
        %v4899 = vrot.slane %v3947, 6
        %v4900 = vrot.slane %v3948, 5
        %v4901 = vrot.slane %v3949, 4
        %v4902 = vrot.slane %v3950, 3
        %v4903 = vrot.slane %v3951, 2
        %v4904 = vrot.slane %v3952, 1
        %v4905 = vsel %vm1638, %v3937, %v4891
        %v4906 = vsel %vm3984, %v4892, %v4893
        %v4907 = vsel %vm1655, %v4905, %v4906
        %v4908 = vsel %vm3987, %v4894, %v4895
        %v4909 = vsel %vm3989, %v4896, %v4897
        %v4910 = vsel %vm3991, %v4908, %v4909
        %v4911 = vsel %vm1689, %v4907, %v4910
        %v4912 = vsel %vm1638, %v3945, %v4898
        %v4913 = vsel %vm3984, %v4899, %v4900
        %v4914 = vsel %vm1655, %v4912, %v4913
        %v4915 = vsel %vm3987, %v4901, %v4902
        %v4916 = vsel %vm3989, %v4903, %v4904
        %v4917 = vsel %vm3991, %v4915, %v4916
        %v4918 = vsel %vm1689, %v4914, %v4917
        %v4922 = vunpack.c.l.s4 1966171168
        %v4923 = vunpack.c.0.s8 %v4922
        %v4924 = vperm.slane %v4911, %v4923
        %v4926 = vunpack.c.l.s4 1966171168
        %v4927 = vunpack.c.0.s8 %v4926
        %v4928 = vperm.slane %v4918, %v4927
        %s4929 = scalar_lea.vmem %s7, 2048
        %v4930 = vld [vmem:[%s4929] sm:$0xff]
        %v4931 = vld [vmem:[%s4929 + $0x8] sm:$0xff]
        %v4932 = vld [vmem:[%s4929 + $0x10] sm:$0xff]
        %v4933 = vld [vmem:[%s4929 + $0x18] sm:$0xff]
        %v4934 = vld [vmem:[%s4929 + $0x20] sm:$0xff]
        %v4935 = vld [vmem:[%s4929 + $0x28] sm:$0xff]
        %v4936 = vld [vmem:[%s4929 + $0x30] sm:$0xff]
        %v4937 = vld [vmem:[%s4929 + $0x38] sm:$0xff]
        %v4938 = vld [vmem:[%s4929 + $0x40] sm:$0xff]
        %v4939 = vld [vmem:[%s4929 + $0x48] sm:$0xff]
        %v4940 = vld [vmem:[%s4929 + $0x50] sm:$0xff]
        %v4941 = vld [vmem:[%s4929 + $0x58] sm:$0xff]
        %v4942 = vld [vmem:[%s4929 + $0x60] sm:$0xff]
        %v4943 = vld [vmem:[%s4929 + $0x68] sm:$0xff]
        %v4944 = vld [vmem:[%s4929 + $0x70] sm:$0xff]
        %v4945 = vld [vmem:[%s4929 + $0x78] sm:$0xff]
        %v4946 = vld [vmem:[%s4929 + $0x80] sm:$0xff]
        %v4947 = vld [vmem:[%s4929 + $0x88] sm:$0xff]
        %v4948 = vld [vmem:[%s4929 + $0x90] sm:$0xff]
        %v4949 = vld [vmem:[%s4929 + $0x98] sm:$0xff]
        %v4950 = vld [vmem:[%s4929 + $0xa0] sm:$0xff]
        %v4951 = vld [vmem:[%s4929 + $0xa8] sm:$0xff]
        %v4952 = vld [vmem:[%s4929 + $0xb0] sm:$0xff]
        %v4953 = vld [vmem:[%s4929 + $0xb8] sm:$0xff]
        %v4954 = vld [vmem:[%s4929 + $0xc0] sm:$0xff]
        %v4955 = vld [vmem:[%s4929 + $0xc8] sm:$0xff]
        %v4956 = vld [vmem:[%s4929 + $0xd0] sm:$0xff]
        %v4957 = vld [vmem:[%s4929 + $0xd8] sm:$0xff]
        %v4958 = vld [vmem:[%s4929 + $0xe0] sm:$0xff]
        %v4959 = vld [vmem:[%s4929 + $0xe8] sm:$0xff]
        %v4960 = vld [vmem:[%s4929 + $0xf0] sm:$0xff]
        %v4961 = vld [vmem:[%s4929 + $0xf8] sm:$0xff]
        %4964 = vst [vmem:[#allocation1] ss:$2 sm:$0xff] %v4924
        %s4965 = scalar_lea.vmem [#allocation1], 1
        %4966 = vst [vmem:[%s4965] ss:$2 sm:$0xff] %v4928
        %v4967 = vld.sshfl [vmem:[#allocation1] sm:$0xff pattern:$0x75316420]
        %v4968 = vld.sshfl [vmem:[#allocation1 + $0x8] sm:$0xff pattern:$0x75316420]
        %4971 = vmatpush.msra.mxu0 %v4945
        %4972 = vmatpush.msra.mxu0 %v4944
        %4973 = vmatpush.msra.mxu0 %v4943
        %4974 = vmatpush.msra.mxu0 %v4942
        %4975 = vmatpush.msra.mxu0 %v4941
        %4976 = vmatpush.msra.mxu0 %v4940
        %4977 = vmatpush.msra.mxu0 %v4939
        %4978 = vmatpush.msra.mxu0 %v4938
        %4979 = vmatpush.msra.mxu0 %v4937
        %4980 = vmatpush.msra.mxu0 %v4936
        %4981 = vmatpush.msra.mxu0 %v4935
        %4982 = vmatpush.msra.mxu0 %v4934
        %4983 = vmatpush.msra.mxu0 %v4933
        %4984 = vmatpush.msra.mxu0 %v4932
        %4985 = vmatpush.msra.mxu0 %v4931
        %4986 = vmatpush.msra.mxu0 %v4930
        %4987 = vmatmul.f32.gmra.mxu0 %v4967
        %v4988 = vpop.f32.mrf.mxu0
        %v4989 = vadd.f32 0.0, %v4988
        %4990 = vdwg.mxu0
        %4991 = vmatpush.msra.mxu0 %v4961
        %4992 = vmatpush.msra.mxu0 %v4960
        %4993 = vmatpush.msra.mxu0 %v4959
        %4994 = vmatpush.msra.mxu0 %v4958
        %4995 = vmatpush.msra.mxu0 %v4957
        %4996 = vmatpush.msra.mxu0 %v4956
        %4997 = vmatpush.msra.mxu0 %v4955
        %4998 = vmatpush.msra.mxu0 %v4954
        %4999 = vmatpush.msra.mxu0 %v4953
        %5000 = vmatpush.msra.mxu0 %v4952
        %5001 = vmatpush.msra.mxu0 %v4951
        %5002 = vmatpush.msra.mxu0 %v4950
        %5003 = vmatpush.msra.mxu0 %v4949
        %5004 = vmatpush.msra.mxu0 %v4948
        %5005 = vmatpush.msra.mxu0 %v4947
        %5006 = vmatpush.msra.mxu0 %v4946
        %5007 = vmatmul.f32.gmra.mxu0 %v4968
        %v5008 = vpop.f32.mrf.mxu0
        %v5009 = vadd.f32 %v4989, %v5008
        %5010 = vdwg.mxu0
        %v5011 = vadd.f32 %v4874, %v5009
        %5012 = vst [vmem:[#allocation1] sm:$0xff] %v3937
        %5013 = vst [vmem:[#allocation1 + $0x9] sm:$0xff] %v3938
        %5014 = vst [vmem:[#allocation1 + $0x12] sm:$0xff] %v3939
        %5015 = vst [vmem:[#allocation1 + $0x1b] sm:$0xff] %v3940
        %5016 = vst [vmem:[#allocation1 + $0x24] sm:$0xff] %v3941
        %5017 = vst [vmem:[#allocation1 + $0x2d] sm:$0xff] %v3942
        %5018 = vst [vmem:[#allocation1 + $0x36] sm:$0xff] %v3943
        %5019 = vst [vmem:[#allocation1 + $0x3f] sm:$0xff] %v3944
        %s5020 = scalar_lea.vmem [#allocation1], 1
        %v5021 = vld [vmem:[%s5020] ss:$9 sm:$0xff]
        %5022 = vst [vmem:[#allocation1] sm:$0xff] %v3945
        %5023 = vst [vmem:[#allocation1 + $0x9] sm:$0xff] %v3946
        %5024 = vst [vmem:[#allocation1 + $0x12] sm:$0xff] %v3947
        %5025 = vst [vmem:[#allocation1 + $0x1b] sm:$0xff] %v3948
        %5026 = vst [vmem:[#allocation1 + $0x24] sm:$0xff] %v3949
        %5027 = vst [vmem:[#allocation1 + $0x2d] sm:$0xff] %v3950
        %5028 = vst [vmem:[#allocation1 + $0x36] sm:$0xff] %v3951
        %5029 = vst [vmem:[#allocation1 + $0x3f] sm:$0xff] %v3952
        %v5030 = vld [vmem:[%s5020] ss:$9 sm:$0xff]
        %v5034 = vunpack.c.l.s4 1966171168
        %v5035 = vunpack.c.0.s8 %v5034
        %v5036 = vperm.slane %v5021, %v5035
        %v5038 = vunpack.c.l.s4 1966171168
        %v5039 = vunpack.c.0.s8 %v5038
        %v5040 = vperm.slane %v5030, %v5039
        %s5041 = scalar_lea.vmem %s7, 2304
        %v5042 = vld [vmem:[%s5041] sm:$0xff]
        %v5043 = vld [vmem:[%s5041 + $0x8] sm:$0xff]
        %v5044 = vld [vmem:[%s5041 + $0x10] sm:$0xff]
        %v5045 = vld [vmem:[%s5041 + $0x18] sm:$0xff]
        %v5046 = vld [vmem:[%s5041 + $0x20] sm:$0xff]
        %v5047 = vld [vmem:[%s5041 + $0x28] sm:$0xff]
        %v5048 = vld [vmem:[%s5041 + $0x30] sm:$0xff]
        %v5049 = vld [vmem:[%s5041 + $0x38] sm:$0xff]
        %v5050 = vld [vmem:[%s5041 + $0x40] sm:$0xff]
        %v5051 = vld [vmem:[%s5041 + $0x48] sm:$0xff]
        %v5052 = vld [vmem:[%s5041 + $0x50] sm:$0xff]
        %v5053 = vld [vmem:[%s5041 + $0x58] sm:$0xff]
        %v5054 = vld [vmem:[%s5041 + $0x60] sm:$0xff]
        %v5055 = vld [vmem:[%s5041 + $0x68] sm:$0xff]
        %v5056 = vld [vmem:[%s5041 + $0x70] sm:$0xff]
        %v5057 = vld [vmem:[%s5041 + $0x78] sm:$0xff]
        %v5058 = vld [vmem:[%s5041 + $0x80] sm:$0xff]
        %v5059 = vld [vmem:[%s5041 + $0x88] sm:$0xff]
        %v5060 = vld [vmem:[%s5041 + $0x90] sm:$0xff]
        %v5061 = vld [vmem:[%s5041 + $0x98] sm:$0xff]
        %v5062 = vld [vmem:[%s5041 + $0xa0] sm:$0xff]
        %v5063 = vld [vmem:[%s5041 + $0xa8] sm:$0xff]
        %v5064 = vld [vmem:[%s5041 + $0xb0] sm:$0xff]
        %v5065 = vld [vmem:[%s5041 + $0xb8] sm:$0xff]
        %v5066 = vld [vmem:[%s5041 + $0xc0] sm:$0xff]
        %v5067 = vld [vmem:[%s5041 + $0xc8] sm:$0xff]
        %v5068 = vld [vmem:[%s5041 + $0xd0] sm:$0xff]
        %v5069 = vld [vmem:[%s5041 + $0xd8] sm:$0xff]
        %v5070 = vld [vmem:[%s5041 + $0xe0] sm:$0xff]
        %v5071 = vld [vmem:[%s5041 + $0xe8] sm:$0xff]
        %v5072 = vld [vmem:[%s5041 + $0xf0] sm:$0xff]
        %v5073 = vld [vmem:[%s5041 + $0xf8] sm:$0xff]
        %5076 = vst [vmem:[#allocation1] ss:$2 sm:$0xff] %v5036
        %s5077 = scalar_lea.vmem [#allocation1], 1
        %5078 = vst [vmem:[%s5077] ss:$2 sm:$0xff] %v5040
        %v5079 = vld.sshfl [vmem:[#allocation1] sm:$0xff pattern:$0x75316420]
        %v5080 = vld.sshfl [vmem:[#allocation1 + $0x8] sm:$0xff pattern:$0x75316420]
        %5083 = vmatpush.msra.mxu0 %v5057
        %5084 = vmatpush.msra.mxu0 %v5056
        %5085 = vmatpush.msra.mxu0 %v5055
        %5086 = vmatpush.msra.mxu0 %v5054
        %5087 = vmatpush.msra.mxu0 %v5053
        %5088 = vmatpush.msra.mxu0 %v5052
        %5089 = vmatpush.msra.mxu0 %v5051
        %5090 = vmatpush.msra.mxu0 %v5050
        %5091 = vmatpush.msra.mxu0 %v5049
        %5092 = vmatpush.msra.mxu0 %v5048
        %5093 = vmatpush.msra.mxu0 %v5047
        %5094 = vmatpush.msra.mxu0 %v5046
        %5095 = vmatpush.msra.mxu0 %v5045
        %5096 = vmatpush.msra.mxu0 %v5044
        %5097 = vmatpush.msra.mxu0 %v5043
        %5098 = vmatpush.msra.mxu0 %v5042
        %5099 = vmatmul.f32.gmra.mxu0 %v5079
        %v5100 = vpop.f32.mrf.mxu0
        %v5101 = vadd.f32 0.0, %v5100
        %5102 = vdwg.mxu0
        %5103 = vmatpush.msra.mxu0 %v5073
        %5104 = vmatpush.msra.mxu0 %v5072
        %5105 = vmatpush.msra.mxu0 %v5071
        %5106 = vmatpush.msra.mxu0 %v5070
        %5107 = vmatpush.msra.mxu0 %v5069
        %5108 = vmatpush.msra.mxu0 %v5068
        %5109 = vmatpush.msra.mxu0 %v5067
        %5110 = vmatpush.msra.mxu0 %v5066
        %5111 = vmatpush.msra.mxu0 %v5065
        %5112 = vmatpush.msra.mxu0 %v5064
        %5113 = vmatpush.msra.mxu0 %v5063
        %5114 = vmatpush.msra.mxu0 %v5062
        %5115 = vmatpush.msra.mxu0 %v5061
        %5116 = vmatpush.msra.mxu0 %v5060
        %5117 = vmatpush.msra.mxu0 %v5059
        %5118 = vmatpush.msra.mxu0 %v5058
        %5119 = vmatmul.f32.gmra.mxu0 %v5080
        %v5120 = vpop.f32.mrf.mxu0
        %v5121 = vadd.f32 %v5101, %v5120
        %5122 = vdwg.mxu0
        %v5123 = vadd.f32 %v5011, %v5121
        %5124 = vst [vmem:[#allocation1] sm:$0xff] %v3937
        %5125 = vst [vmem:[#allocation1 + $0x9] sm:$0xff] %v3938
        %5126 = vst [vmem:[#allocation1 + $0x12] sm:$0xff] %v3939
        %5127 = vst [vmem:[#allocation1 + $0x1b] sm:$0xff] %v3940
        %5128 = vst [vmem:[#allocation1 + $0x24] sm:$0xff] %v3941
        %5129 = vst [vmem:[#allocation1 + $0x2d] sm:$0xff] %v3942
        %5130 = vst [vmem:[#allocation1 + $0x36] sm:$0xff] %v3943
        %5131 = vst [vmem:[#allocation1 + $0x3f] sm:$0xff] %v3944
        %s5132 = scalar_lea.vmem [#allocation1], 2
        %v5133 = vld [vmem:[%s5132] ss:$9 sm:$0xff]
        %5134 = vst [vmem:[#allocation1] sm:$0xff] %v3945
        %5135 = vst [vmem:[#allocation1 + $0x9] sm:$0xff] %v3946
        %5136 = vst [vmem:[#allocation1 + $0x12] sm:$0xff] %v3947
        %5137 = vst [vmem:[#allocation1 + $0x1b] sm:$0xff] %v3948
        %5138 = vst [vmem:[#allocation1 + $0x24] sm:$0xff] %v3949
        %5139 = vst [vmem:[#allocation1 + $0x2d] sm:$0xff] %v3950
        %5140 = vst [vmem:[#allocation1 + $0x36] sm:$0xff] %v3951
        %5141 = vst [vmem:[#allocation1 + $0x3f] sm:$0xff] %v3952
        %v5142 = vld [vmem:[%s5132] ss:$9 sm:$0xff]
        %v5146 = vunpack.c.l.s4 1966171168
        %v5147 = vunpack.c.0.s8 %v5146
        %v5148 = vperm.slane %v5133, %v5147
        %v5150 = vunpack.c.l.s4 1966171168
        %v5151 = vunpack.c.0.s8 %v5150
        %v5152 = vperm.slane %v5142, %v5151
        %s5153 = scalar_lea.vmem %s7, 2560
        %v5154 = vld [vmem:[%s5153] sm:$0xff]
        %v5155 = vld [vmem:[%s5153 + $0x8] sm:$0xff]
        %v5156 = vld [vmem:[%s5153 + $0x10] sm:$0xff]
        %v5157 = vld [vmem:[%s5153 + $0x18] sm:$0xff]
        %v5158 = vld [vmem:[%s5153 + $0x20] sm:$0xff]
        %v5159 = vld [vmem:[%s5153 + $0x28] sm:$0xff]
        %v5160 = vld [vmem:[%s5153 + $0x30] sm:$0xff]
        %v5161 = vld [vmem:[%s5153 + $0x38] sm:$0xff]
        %v5162 = vld [vmem:[%s5153 + $0x40] sm:$0xff]
        %v5163 = vld [vmem:[%s5153 + $0x48] sm:$0xff]
        %v5164 = vld [vmem:[%s5153 + $0x50] sm:$0xff]
        %v5165 = vld [vmem:[%s5153 + $0x58] sm:$0xff]
        %v5166 = vld [vmem:[%s5153 + $0x60] sm:$0xff]
        %v5167 = vld [vmem:[%s5153 + $0x68] sm:$0xff]
        %v5168 = vld [vmem:[%s5153 + $0x70] sm:$0xff]
        %v5169 = vld [vmem:[%s5153 + $0x78] sm:$0xff]
        %v5170 = vld [vmem:[%s5153 + $0x80] sm:$0xff]
        %v5171 = vld [vmem:[%s5153 + $0x88] sm:$0xff]
        %v5172 = vld [vmem:[%s5153 + $0x90] sm:$0xff]
        %v5173 = vld [vmem:[%s5153 + $0x98] sm:$0xff]
        %v5174 = vld [vmem:[%s5153 + $0xa0] sm:$0xff]
        %v5175 = vld [vmem:[%s5153 + $0xa8] sm:$0xff]
        %v5176 = vld [vmem:[%s5153 + $0xb0] sm:$0xff]
        %v5177 = vld [vmem:[%s5153 + $0xb8] sm:$0xff]
        %v5178 = vld [vmem:[%s5153 + $0xc0] sm:$0xff]
        %v5179 = vld [vmem:[%s5153 + $0xc8] sm:$0xff]
        %v5180 = vld [vmem:[%s5153 + $0xd0] sm:$0xff]
        %v5181 = vld [vmem:[%s5153 + $0xd8] sm:$0xff]
        %v5182 = vld [vmem:[%s5153 + $0xe0] sm:$0xff]
        %v5183 = vld [vmem:[%s5153 + $0xe8] sm:$0xff]
        %v5184 = vld [vmem:[%s5153 + $0xf0] sm:$0xff]
        %v5185 = vld [vmem:[%s5153 + $0xf8] sm:$0xff]
        %5188 = vst [vmem:[#allocation1] ss:$2 sm:$0xff] %v5148
        %s5189 = scalar_lea.vmem [#allocation1], 1
        %5190 = vst [vmem:[%s5189] ss:$2 sm:$0xff] %v5152
        %v5191 = vld.sshfl [vmem:[#allocation1] sm:$0xff pattern:$0x75316420]
        %v5192 = vld.sshfl [vmem:[#allocation1 + $0x8] sm:$0xff pattern:$0x75316420]
        %5195 = vmatpush.msra.mxu0 %v5169
        %5196 = vmatpush.msra.mxu0 %v5168
        %5197 = vmatpush.msra.mxu0 %v5167
        %5198 = vmatpush.msra.mxu0 %v5166
        %5199 = vmatpush.msra.mxu0 %v5165
        %5200 = vmatpush.msra.mxu0 %v5164
        %5201 = vmatpush.msra.mxu0 %v5163
        %5202 = vmatpush.msra.mxu0 %v5162
        %5203 = vmatpush.msra.mxu0 %v5161
        %5204 = vmatpush.msra.mxu0 %v5160
        %5205 = vmatpush.msra.mxu0 %v5159
        %5206 = vmatpush.msra.mxu0 %v5158
        %5207 = vmatpush.msra.mxu0 %v5157
        %5208 = vmatpush.msra.mxu0 %v5156
        %5209 = vmatpush.msra.mxu0 %v5155
        %5210 = vmatpush.msra.mxu0 %v5154
        %5211 = vmatmul.f32.gmra.mxu0 %v5191
        %v5212 = vpop.f32.mrf.mxu0
        %v5213 = vadd.f32 0.0, %v5212
        %5214 = vdwg.mxu0
        %5215 = vmatpush.msra.mxu0 %v5185
        %5216 = vmatpush.msra.mxu0 %v5184
        %5217 = vmatpush.msra.mxu0 %v5183
        %5218 = vmatpush.msra.mxu0 %v5182
        %5219 = vmatpush.msra.mxu0 %v5181
        %5220 = vmatpush.msra.mxu0 %v5180
        %5221 = vmatpush.msra.mxu0 %v5179
        %5222 = vmatpush.msra.mxu0 %v5178
        %5223 = vmatpush.msra.mxu0 %v5177
        %5224 = vmatpush.msra.mxu0 %v5176
        %5225 = vmatpush.msra.mxu0 %v5175
        %5226 = vmatpush.msra.mxu0 %v5174
        %5227 = vmatpush.msra.mxu0 %v5173
        %5228 = vmatpush.msra.mxu0 %v5172
        %5229 = vmatpush.msra.mxu0 %v5171
        %5230 = vmatpush.msra.mxu0 %v5170
        %5231 = vmatmul.f32.gmra.mxu0 %v5192
        %v5232 = vpop.f32.mrf.mxu0
        %v5233 = vadd.f32 %v5213, %v5232
        %5234 = vdwg.mxu0
        %v5235 = vadd.f32 %v5123, %v5233
        %5236 = vst [vmem:[#allocation1] sm:$0xff] %v3937
        %5237 = vst [vmem:[#allocation1 + $0x9] sm:$0xff] %v3938
        %5238 = vst [vmem:[#allocation1 + $0x12] sm:$0xff] %v3939
        %5239 = vst [vmem:[#allocation1 + $0x1b] sm:$0xff] %v3940
        %5240 = vst [vmem:[#allocation1 + $0x24] sm:$0xff] %v3941
        %5241 = vst [vmem:[#allocation1 + $0x2d] sm:$0xff] %v3942
        %5242 = vst [vmem:[#allocation1 + $0x36] sm:$0xff] %v3943
        %5243 = vst [vmem:[#allocation1 + $0x3f] sm:$0xff] %v3944
        %s5244 = scalar_lea.vmem [#allocation1], 3
        %v5245 = vld [vmem:[%s5244] ss:$9 sm:$0xff]
        %5246 = vst [vmem:[#allocation1] sm:$0xff] %v3945
        %5247 = vst [vmem:[#allocation1 + $0x9] sm:$0xff] %v3946
        %5248 = vst [vmem:[#allocation1 + $0x12] sm:$0xff] %v3947
        %5249 = vst [vmem:[#allocation1 + $0x1b] sm:$0xff] %v3948
        %5250 = vst [vmem:[#allocation1 + $0x24] sm:$0xff] %v3949
        %5251 = vst [vmem:[#allocation1 + $0x2d] sm:$0xff] %v3950
        %5252 = vst [vmem:[#allocation1 + $0x36] sm:$0xff] %v3951
        %5253 = vst [vmem:[#allocation1 + $0x3f] sm:$0xff] %v3952
        %v5254 = vld [vmem:[%s5244] ss:$9 sm:$0xff]
        %v5258 = vunpack.c.l.s4 1966171168
        %v5259 = vunpack.c.0.s8 %v5258
        %v5260 = vperm.slane %v5245, %v5259
        %v5262 = vunpack.c.l.s4 1966171168
        %v5263 = vunpack.c.0.s8 %v5262
        %v5264 = vperm.slane %v5254, %v5263
        %s5265 = scalar_lea.vmem %s7, 2816
        %v5266 = vld [vmem:[%s5265] sm:$0xff]
        %v5267 = vld [vmem:[%s5265 + $0x8] sm:$0xff]
        %v5268 = vld [vmem:[%s5265 + $0x10] sm:$0xff]
        %v5269 = vld [vmem:[%s5265 + $0x18] sm:$0xff]
        %v5270 = vld [vmem:[%s5265 + $0x20] sm:$0xff]
        %v5271 = vld [vmem:[%s5265 + $0x28] sm:$0xff]
        %v5272 = vld [vmem:[%s5265 + $0x30] sm:$0xff]
        %v5273 = vld [vmem:[%s5265 + $0x38] sm:$0xff]
        %v5274 = vld [vmem:[%s5265 + $0x40] sm:$0xff]
        %v5275 = vld [vmem:[%s5265 + $0x48] sm:$0xff]
        %v5276 = vld [vmem:[%s5265 + $0x50] sm:$0xff]
        %v5277 = vld [vmem:[%s5265 + $0x58] sm:$0xff]
        %v5278 = vld [vmem:[%s5265 + $0x60] sm:$0xff]
        %v5279 = vld [vmem:[%s5265 + $0x68] sm:$0xff]
        %v5280 = vld [vmem:[%s5265 + $0x70] sm:$0xff]
        %v5281 = vld [vmem:[%s5265 + $0x78] sm:$0xff]
        %v5282 = vld [vmem:[%s5265 + $0x80] sm:$0xff]
        %v5283 = vld [vmem:[%s5265 + $0x88] sm:$0xff]
        %v5284 = vld [vmem:[%s5265 + $0x90] sm:$0xff]
        %v5285 = vld [vmem:[%s5265 + $0x98] sm:$0xff]
        %v5286 = vld [vmem:[%s5265 + $0xa0] sm:$0xff]
        %v5287 = vld [vmem:[%s5265 + $0xa8] sm:$0xff]
        %v5288 = vld [vmem:[%s5265 + $0xb0] sm:$0xff]
        %v5289 = vld [vmem:[%s5265 + $0xb8] sm:$0xff]
        %v5290 = vld [vmem:[%s5265 + $0xc0] sm:$0xff]
        %v5291 = vld [vmem:[%s5265 + $0xc8] sm:$0xff]
        %v5292 = vld [vmem:[%s5265 + $0xd0] sm:$0xff]
        %v5293 = vld [vmem:[%s5265 + $0xd8] sm:$0xff]
        %v5294 = vld [vmem:[%s5265 + $0xe0] sm:$0xff]
        %v5295 = vld [vmem:[%s5265 + $0xe8] sm:$0xff]
        %v5296 = vld [vmem:[%s5265 + $0xf0] sm:$0xff]
        %v5297 = vld [vmem:[%s5265 + $0xf8] sm:$0xff]
        %5300 = vst [vmem:[#allocation1] ss:$2 sm:$0xff] %v5260
        %s5301 = scalar_lea.vmem [#allocation1], 1
        %5302 = vst [vmem:[%s5301] ss:$2 sm:$0xff] %v5264
        %v5303 = vld.sshfl [vmem:[#allocation1] sm:$0xff pattern:$0x75316420]
        %v5304 = vld.sshfl [vmem:[#allocation1 + $0x8] sm:$0xff pattern:$0x75316420]
        %5307 = vmatpush.msra.mxu0 %v5281
        %5308 = vmatpush.msra.mxu0 %v5280
        %5309 = vmatpush.msra.mxu0 %v5279
        %5310 = vmatpush.msra.mxu0 %v5278
        %5311 = vmatpush.msra.mxu0 %v5277
        %5312 = vmatpush.msra.mxu0 %v5276
        %5313 = vmatpush.msra.mxu0 %v5275
        %5314 = vmatpush.msra.mxu0 %v5274
        %5315 = vmatpush.msra.mxu0 %v5273
        %5316 = vmatpush.msra.mxu0 %v5272
        %5317 = vmatpush.msra.mxu0 %v5271
        %5318 = vmatpush.msra.mxu0 %v5270
        %5319 = vmatpush.msra.mxu0 %v5269
        %5320 = vmatpush.msra.mxu0 %v5268
        %5321 = vmatpush.msra.mxu0 %v5267
        %5322 = vmatpush.msra.mxu0 %v5266
        %5323 = vmatmul.f32.gmra.mxu0 %v5303
        %v5324 = vpop.f32.mrf.mxu0
        %v5325 = vadd.f32 0.0, %v5324
        %5326 = vdwg.mxu0
        %5327 = vmatpush.msra.mxu0 %v5297
        %5328 = vmatpush.msra.mxu0 %v5296
        %5329 = vmatpush.msra.mxu0 %v5295
        %5330 = vmatpush.msra.mxu0 %v5294
        %5331 = vmatpush.msra.mxu0 %v5293
        %5332 = vmatpush.msra.mxu0 %v5292
        %5333 = vmatpush.msra.mxu0 %v5291
        %5334 = vmatpush.msra.mxu0 %v5290
        %5335 = vmatpush.msra.mxu0 %v5289
        %5336 = vmatpush.msra.mxu0 %v5288
        %5337 = vmatpush.msra.mxu0 %v5287
        %5338 = vmatpush.msra.mxu0 %v5286
        %5339 = vmatpush.msra.mxu0 %v5285
        %5340 = vmatpush.msra.mxu0 %v5284
        %5341 = vmatpush.msra.mxu0 %v5283
        %5342 = vmatpush.msra.mxu0 %v5282
        %5343 = vmatmul.f32.gmra.mxu0 %v5304
        %v5344 = vpop.f32.mrf.mxu0
        %v5345 = vadd.f32 %v5325, %v5344
        %5346 = vdwg.mxu0
        %v5347 = vadd.f32 %v5235, %v5345
        %5348 = vst [vmem:[#allocation1] sm:$0xff] %v3937
        %5349 = vst [vmem:[#allocation1 + $0x9] sm:$0xff] %v3938
        %5350 = vst [vmem:[#allocation1 + $0x12] sm:$0xff] %v3939
        %5351 = vst [vmem:[#allocation1 + $0x1b] sm:$0xff] %v3940
        %5352 = vst [vmem:[#allocation1 + $0x24] sm:$0xff] %v3941
        %5353 = vst [vmem:[#allocation1 + $0x2d] sm:$0xff] %v3942
        %5354 = vst [vmem:[#allocation1 + $0x36] sm:$0xff] %v3943
        %5355 = vst [vmem:[#allocation1 + $0x3f] sm:$0xff] %v3944
        %s5356 = scalar_lea.vmem [#allocation1], 4
        %v5357 = vld [vmem:[%s5356] ss:$9 sm:$0xff]
        %5358 = vst [vmem:[#allocation1] sm:$0xff] %v3945
        %5359 = vst [vmem:[#allocation1 + $0x9] sm:$0xff] %v3946
        %5360 = vst [vmem:[#allocation1 + $0x12] sm:$0xff] %v3947
        %5361 = vst [vmem:[#allocation1 + $0x1b] sm:$0xff] %v3948
        %5362 = vst [vmem:[#allocation1 + $0x24] sm:$0xff] %v3949
        %5363 = vst [vmem:[#allocation1 + $0x2d] sm:$0xff] %v3950
        %5364 = vst [vmem:[#allocation1 + $0x36] sm:$0xff] %v3951
        %5365 = vst [vmem:[#allocation1 + $0x3f] sm:$0xff] %v3952
        %v5366 = vld [vmem:[%s5356] ss:$9 sm:$0xff]
        %v5370 = vunpack.c.l.s4 1966171168
        %v5371 = vunpack.c.0.s8 %v5370
        %v5372 = vperm.slane %v5357, %v5371
        %v5374 = vunpack.c.l.s4 1966171168
        %v5375 = vunpack.c.0.s8 %v5374
        %v5376 = vperm.slane %v5366, %v5375
        %s5377 = scalar_lea.vmem %s7, 3072
        %v5378 = vld [vmem:[%s5377] sm:$0xff]
        %v5379 = vld [vmem:[%s5377 + $0x8] sm:$0xff]
        %v5380 = vld [vmem:[%s5377 + $0x10] sm:$0xff]
        %v5381 = vld [vmem:[%s5377 + $0x18] sm:$0xff]
        %v5382 = vld [vmem:[%s5377 + $0x20] sm:$0xff]
        %v5383 = vld [vmem:[%s5377 + $0x28] sm:$0xff]
        %v5384 = vld [vmem:[%s5377 + $0x30] sm:$0xff]
        %v5385 = vld [vmem:[%s5377 + $0x38] sm:$0xff]
        %v5386 = vld [vmem:[%s5377 + $0x40] sm:$0xff]
        %v5387 = vld [vmem:[%s5377 + $0x48] sm:$0xff]
        %v5388 = vld [vmem:[%s5377 + $0x50] sm:$0xff]
        %v5389 = vld [vmem:[%s5377 + $0x58] sm:$0xff]
        %v5390 = vld [vmem:[%s5377 + $0x60] sm:$0xff]
        %v5391 = vld [vmem:[%s5377 + $0x68] sm:$0xff]
        %v5392 = vld [vmem:[%s5377 + $0x70] sm:$0xff]
        %v5393 = vld [vmem:[%s5377 + $0x78] sm:$0xff]
        %v5394 = vld [vmem:[%s5377 + $0x80] sm:$0xff]
        %v5395 = vld [vmem:[%s5377 + $0x88] sm:$0xff]
        %v5396 = vld [vmem:[%s5377 + $0x90] sm:$0xff]
        %v5397 = vld [vmem:[%s5377 + $0x98] sm:$0xff]
        %v5398 = vld [vmem:[%s5377 + $0xa0] sm:$0xff]
        %v5399 = vld [vmem:[%s5377 + $0xa8] sm:$0xff]
        %v5400 = vld [vmem:[%s5377 + $0xb0] sm:$0xff]
        %v5401 = vld [vmem:[%s5377 + $0xb8] sm:$0xff]
        %v5402 = vld [vmem:[%s5377 + $0xc0] sm:$0xff]
        %v5403 = vld [vmem:[%s5377 + $0xc8] sm:$0xff]
        %v5404 = vld [vmem:[%s5377 + $0xd0] sm:$0xff]
        %v5405 = vld [vmem:[%s5377 + $0xd8] sm:$0xff]
        %v5406 = vld [vmem:[%s5377 + $0xe0] sm:$0xff]
        %v5407 = vld [vmem:[%s5377 + $0xe8] sm:$0xff]
        %v5408 = vld [vmem:[%s5377 + $0xf0] sm:$0xff]
        %v5409 = vld [vmem:[%s5377 + $0xf8] sm:$0xff]
        %5412 = vst [vmem:[#allocation1] ss:$2 sm:$0xff] %v5372
        %s5413 = scalar_lea.vmem [#allocation1], 1
        %5414 = vst [vmem:[%s5413] ss:$2 sm:$0xff] %v5376
        %v5415 = vld.sshfl [vmem:[#allocation1] sm:$0xff pattern:$0x75316420]
        %v5416 = vld.sshfl [vmem:[#allocation1 + $0x8] sm:$0xff pattern:$0x75316420]
        %5419 = vmatpush.msra.mxu0 %v5393
        %5420 = vmatpush.msra.mxu0 %v5392
        %5421 = vmatpush.msra.mxu0 %v5391
        %5422 = vmatpush.msra.mxu0 %v5390
        %5423 = vmatpush.msra.mxu0 %v5389
        %5424 = vmatpush.msra.mxu0 %v5388
        %5425 = vmatpush.msra.mxu0 %v5387
        %5426 = vmatpush.msra.mxu0 %v5386
        %5427 = vmatpush.msra.mxu0 %v5385
        %5428 = vmatpush.msra.mxu0 %v5384
        %5429 = vmatpush.msra.mxu0 %v5383
        %5430 = vmatpush.msra.mxu0 %v5382
        %5431 = vmatpush.msra.mxu0 %v5381
        %5432 = vmatpush.msra.mxu0 %v5380
        %5433 = vmatpush.msra.mxu0 %v5379
        %5434 = vmatpush.msra.mxu0 %v5378
        %5435 = vmatmul.f32.gmra.mxu0 %v5415
        %v5436 = vpop.f32.mrf.mxu0
        %v5437 = vadd.f32 0.0, %v5436
        %5438 = vdwg.mxu0
        %5439 = vmatpush.msra.mxu0 %v5409
        %5440 = vmatpush.msra.mxu0 %v5408
        %5441 = vmatpush.msra.mxu0 %v5407
        %5442 = vmatpush.msra.mxu0 %v5406
        %5443 = vmatpush.msra.mxu0 %v5405
        %5444 = vmatpush.msra.mxu0 %v5404
        %5445 = vmatpush.msra.mxu0 %v5403
        %5446 = vmatpush.msra.mxu0 %v5402
        %5447 = vmatpush.msra.mxu0 %v5401
        %5448 = vmatpush.msra.mxu0 %v5400
        %5449 = vmatpush.msra.mxu0 %v5399
        %5450 = vmatpush.msra.mxu0 %v5398
        %5451 = vmatpush.msra.mxu0 %v5397
        %5452 = vmatpush.msra.mxu0 %v5396
        %5453 = vmatpush.msra.mxu0 %v5395
        %5454 = vmatpush.msra.mxu0 %v5394
        %5455 = vmatmul.f32.gmra.mxu0 %v5416
        %v5456 = vpop.f32.mrf.mxu0
        %v5457 = vadd.f32 %v5437, %v5456
        %5458 = vdwg.mxu0
        %v5459 = vadd.f32 %v5347, %v5457
        %5460 = vst [vmem:[#allocation1] sm:$0xff] %v3937
        %5461 = vst [vmem:[#allocation1 + $0x9] sm:$0xff] %v3938
        %5462 = vst [vmem:[#allocation1 + $0x12] sm:$0xff] %v3939
        %5463 = vst [vmem:[#allocation1 + $0x1b] sm:$0xff] %v3940
        %5464 = vst [vmem:[#allocation1 + $0x24] sm:$0xff] %v3941
        %5465 = vst [vmem:[#allocation1 + $0x2d] sm:$0xff] %v3942
        %5466 = vst [vmem:[#allocation1 + $0x36] sm:$0xff] %v3943
        %5467 = vst [vmem:[#allocation1 + $0x3f] sm:$0xff] %v3944
        %s5468 = scalar_lea.vmem [#allocation1], 5
        %v5469 = vld [vmem:[%s5468] ss:$9 sm:$0xff]
        %5470 = vst [vmem:[#allocation1] sm:$0xff] %v3945
        %5471 = vst [vmem:[#allocation1 + $0x9] sm:$0xff] %v3946
        %5472 = vst [vmem:[#allocation1 + $0x12] sm:$0xff] %v3947
        %5473 = vst [vmem:[#allocation1 + $0x1b] sm:$0xff] %v3948
        %5474 = vst [vmem:[#allocation1 + $0x24] sm:$0xff] %v3949
        %5475 = vst [vmem:[#allocation1 + $0x2d] sm:$0xff] %v3950
        %5476 = vst [vmem:[#allocation1 + $0x36] sm:$0xff] %v3951
        %5477 = vst [vmem:[#allocation1 + $0x3f] sm:$0xff] %v3952
        %v5478 = vld [vmem:[%s5468] ss:$9 sm:$0xff]
        %v5482 = vunpack.c.l.s4 1966171168
        %v5483 = vunpack.c.0.s8 %v5482
        %v5484 = vperm.slane %v5469, %v5483
        %v5486 = vunpack.c.l.s4 1966171168
        %v5487 = vunpack.c.0.s8 %v5486
        %v5488 = vperm.slane %v5478, %v5487
        %s5489 = scalar_lea.vmem %s7, 3328
        %v5490 = vld [vmem:[%s5489] sm:$0xff]
        %v5491 = vld [vmem:[%s5489 + $0x8] sm:$0xff]
        %v5492 = vld [vmem:[%s5489 + $0x10] sm:$0xff]
        %v5493 = vld [vmem:[%s5489 + $0x18] sm:$0xff]
        %v5494 = vld [vmem:[%s5489 + $0x20] sm:$0xff]
        %v5495 = vld [vmem:[%s5489 + $0x28] sm:$0xff]
        %v5496 = vld [vmem:[%s5489 + $0x30] sm:$0xff]
        %v5497 = vld [vmem:[%s5489 + $0x38] sm:$0xff]
        %v5498 = vld [vmem:[%s5489 + $0x40] sm:$0xff]
        %v5499 = vld [vmem:[%s5489 + $0x48] sm:$0xff]
        %v5500 = vld [vmem:[%s5489 + $0x50] sm:$0xff]
        %v5501 = vld [vmem:[%s5489 + $0x58] sm:$0xff]
        %v5502 = vld [vmem:[%s5489 + $0x60] sm:$0xff]
        %v5503 = vld [vmem:[%s5489 + $0x68] sm:$0xff]
        %v5504 = vld [vmem:[%s5489 + $0x70] sm:$0xff]
        %v5505 = vld [vmem:[%s5489 + $0x78] sm:$0xff]
        %v5506 = vld [vmem:[%s5489 + $0x80] sm:$0xff]
        %v5507 = vld [vmem:[%s5489 + $0x88] sm:$0xff]
        %v5508 = vld [vmem:[%s5489 + $0x90] sm:$0xff]
        %v5509 = vld [vmem:[%s5489 + $0x98] sm:$0xff]
        %v5510 = vld [vmem:[%s5489 + $0xa0] sm:$0xff]
        %v5511 = vld [vmem:[%s5489 + $0xa8] sm:$0xff]
        %v5512 = vld [vmem:[%s5489 + $0xb0] sm:$0xff]
        %v5513 = vld [vmem:[%s5489 + $0xb8] sm:$0xff]
        %v5514 = vld [vmem:[%s5489 + $0xc0] sm:$0xff]
        %v5515 = vld [vmem:[%s5489 + $0xc8] sm:$0xff]
        %v5516 = vld [vmem:[%s5489 + $0xd0] sm:$0xff]
        %v5517 = vld [vmem:[%s5489 + $0xd8] sm:$0xff]
        %v5518 = vld [vmem:[%s5489 + $0xe0] sm:$0xff]
        %v5519 = vld [vmem:[%s5489 + $0xe8] sm:$0xff]
        %v5520 = vld [vmem:[%s5489 + $0xf0] sm:$0xff]
        %v5521 = vld [vmem:[%s5489 + $0xf8] sm:$0xff]
        %5524 = vst [vmem:[#allocation1] ss:$2 sm:$0xff] %v5484
        %s5525 = scalar_lea.vmem [#allocation1], 1
        %5526 = vst [vmem:[%s5525] ss:$2 sm:$0xff] %v5488
        %v5527 = vld.sshfl [vmem:[#allocation1] sm:$0xff pattern:$0x75316420]
        %v5528 = vld.sshfl [vmem:[#allocation1 + $0x8] sm:$0xff pattern:$0x75316420]
        %5531 = vmatpush.msra.mxu0 %v5505
        %5532 = vmatpush.msra.mxu0 %v5504
        %5533 = vmatpush.msra.mxu0 %v5503
        %5534 = vmatpush.msra.mxu0 %v5502
        %5535 = vmatpush.msra.mxu0 %v5501
        %5536 = vmatpush.msra.mxu0 %v5500
        %5537 = vmatpush.msra.mxu0 %v5499
        %5538 = vmatpush.msra.mxu0 %v5498
        %5539 = vmatpush.msra.mxu0 %v5497
        %5540 = vmatpush.msra.mxu0 %v5496
        %5541 = vmatpush.msra.mxu0 %v5495
        %5542 = vmatpush.msra.mxu0 %v5494
        %5543 = vmatpush.msra.mxu0 %v5493
        %5544 = vmatpush.msra.mxu0 %v5492
        %5545 = vmatpush.msra.mxu0 %v5491
        %5546 = vmatpush.msra.mxu0 %v5490
        %5547 = vmatmul.f32.gmra.mxu0 %v5527
        %v5548 = vpop.f32.mrf.mxu0
        %v5549 = vadd.f32 0.0, %v5548
        %5550 = vdwg.mxu0
        %5551 = vmatpush.msra.mxu0 %v5521
        %5552 = vmatpush.msra.mxu0 %v5520
        %5553 = vmatpush.msra.mxu0 %v5519
        %5554 = vmatpush.msra.mxu0 %v5518
        %5555 = vmatpush.msra.mxu0 %v5517
        %5556 = vmatpush.msra.mxu0 %v5516
        %5557 = vmatpush.msra.mxu0 %v5515
        %5558 = vmatpush.msra.mxu0 %v5514
        %5559 = vmatpush.msra.mxu0 %v5513
        %5560 = vmatpush.msra.mxu0 %v5512
        %5561 = vmatpush.msra.mxu0 %v5511
        %5562 = vmatpush.msra.mxu0 %v5510
        %5563 = vmatpush.msra.mxu0 %v5509
        %5564 = vmatpush.msra.mxu0 %v5508
        %5565 = vmatpush.msra.mxu0 %v5507
        %5566 = vmatpush.msra.mxu0 %v5506
        %5567 = vmatmul.f32.gmra.mxu0 %v5528
        %v5568 = vpop.f32.mrf.mxu0
        %v5569 = vadd.f32 %v5549, %v5568
        %5570 = vdwg.mxu0
        %v5571 = vadd.f32 %v5459, %v5569
        %5572 = vst [vmem:[#allocation1] sm:$0xff] %v3937
        %5573 = vst [vmem:[#allocation1 + $0x9] sm:$0xff] %v3938
        %5574 = vst [vmem:[#allocation1 + $0x12] sm:$0xff] %v3939
        %5575 = vst [vmem:[#allocation1 + $0x1b] sm:$0xff] %v3940
        %5576 = vst [vmem:[#allocation1 + $0x24] sm:$0xff] %v3941
        %5577 = vst [vmem:[#allocation1 + $0x2d] sm:$0xff] %v3942
        %5578 = vst [vmem:[#allocation1 + $0x36] sm:$0xff] %v3943
        %5579 = vst [vmem:[#allocation1 + $0x3f] sm:$0xff] %v3944
        %s5580 = scalar_lea.vmem [#allocation1], 6
        %v5581 = vld [vmem:[%s5580] ss:$9 sm:$0xff]
        %5582 = vst [vmem:[#allocation1] sm:$0xff] %v3945
        %5583 = vst [vmem:[#allocation1 + $0x9] sm:$0xff] %v3946
        %5584 = vst [vmem:[#allocation1 + $0x12] sm:$0xff] %v3947
        %5585 = vst [vmem:[#allocation1 + $0x1b] sm:$0xff] %v3948
        %5586 = vst [vmem:[#allocation1 + $0x24] sm:$0xff] %v3949
        %5587 = vst [vmem:[#allocation1 + $0x2d] sm:$0xff] %v3950
        %5588 = vst [vmem:[#allocation1 + $0x36] sm:$0xff] %v3951
        %5589 = vst [vmem:[#allocation1 + $0x3f] sm:$0xff] %v3952
        %v5590 = vld [vmem:[%s5580] ss:$9 sm:$0xff]
        %v5594 = vunpack.c.l.s4 1966171168
        %v5595 = vunpack.c.0.s8 %v5594
        %v5596 = vperm.slane %v5581, %v5595
        %v5598 = vunpack.c.l.s4 1966171168
        %v5599 = vunpack.c.0.s8 %v5598
        %v5600 = vperm.slane %v5590, %v5599
        %s5601 = scalar_lea.vmem %s7, 3584
        %v5602 = vld [vmem:[%s5601] sm:$0xff]
        %v5603 = vld [vmem:[%s5601 + $0x8] sm:$0xff]
        %v5604 = vld [vmem:[%s5601 + $0x10] sm:$0xff]
        %v5605 = vld [vmem:[%s5601 + $0x18] sm:$0xff]
        %v5606 = vld [vmem:[%s5601 + $0x20] sm:$0xff]
        %v5607 = vld [vmem:[%s5601 + $0x28] sm:$0xff]
        %v5608 = vld [vmem:[%s5601 + $0x30] sm:$0xff]
        %v5609 = vld [vmem:[%s5601 + $0x38] sm:$0xff]
        %v5610 = vld [vmem:[%s5601 + $0x40] sm:$0xff]
        %v5611 = vld [vmem:[%s5601 + $0x48] sm:$0xff]
        %v5612 = vld [vmem:[%s5601 + $0x50] sm:$0xff]
        %v5613 = vld [vmem:[%s5601 + $0x58] sm:$0xff]
        %v5614 = vld [vmem:[%s5601 + $0x60] sm:$0xff]
        %v5615 = vld [vmem:[%s5601 + $0x68] sm:$0xff]
        %v5616 = vld [vmem:[%s5601 + $0x70] sm:$0xff]
        %v5617 = vld [vmem:[%s5601 + $0x78] sm:$0xff]
        %v5618 = vld [vmem:[%s5601 + $0x80] sm:$0xff]
        %v5619 = vld [vmem:[%s5601 + $0x88] sm:$0xff]
        %v5620 = vld [vmem:[%s5601 + $0x90] sm:$0xff]
        %v5621 = vld [vmem:[%s5601 + $0x98] sm:$0xff]
        %v5622 = vld [vmem:[%s5601 + $0xa0] sm:$0xff]
        %v5623 = vld [vmem:[%s5601 + $0xa8] sm:$0xff]
        %v5624 = vld [vmem:[%s5601 + $0xb0] sm:$0xff]
        %v5625 = vld [vmem:[%s5601 + $0xb8] sm:$0xff]
        %v5626 = vld [vmem:[%s5601 + $0xc0] sm:$0xff]
        %v5627 = vld [vmem:[%s5601 + $0xc8] sm:$0xff]
        %v5628 = vld [vmem:[%s5601 + $0xd0] sm:$0xff]
        %v5629 = vld [vmem:[%s5601 + $0xd8] sm:$0xff]
        %v5630 = vld [vmem:[%s5601 + $0xe0] sm:$0xff]
        %v5631 = vld [vmem:[%s5601 + $0xe8] sm:$0xff]
        %v5632 = vld [vmem:[%s5601 + $0xf0] sm:$0xff]
        %v5633 = vld [vmem:[%s5601 + $0xf8] sm:$0xff]
        %5636 = vst [vmem:[#allocation1] ss:$2 sm:$0xff] %v5596
        %s5637 = scalar_lea.vmem [#allocation1], 1
        %5638 = vst [vmem:[%s5637] ss:$2 sm:$0xff] %v5600
        %v5639 = vld.sshfl [vmem:[#allocation1] sm:$0xff pattern:$0x75316420]
        %v5640 = vld.sshfl [vmem:[#allocation1 + $0x8] sm:$0xff pattern:$0x75316420]
        %5643 = vmatpush.msra.mxu0 %v5617
        %5644 = vmatpush.msra.mxu0 %v5616
        %5645 = vmatpush.msra.mxu0 %v5615
        %5646 = vmatpush.msra.mxu0 %v5614
        %5647 = vmatpush.msra.mxu0 %v5613
        %5648 = vmatpush.msra.mxu0 %v5612
        %5649 = vmatpush.msra.mxu0 %v5611
        %5650 = vmatpush.msra.mxu0 %v5610
        %5651 = vmatpush.msra.mxu0 %v5609
        %5652 = vmatpush.msra.mxu0 %v5608
        %5653 = vmatpush.msra.mxu0 %v5607
        %5654 = vmatpush.msra.mxu0 %v5606
        %5655 = vmatpush.msra.mxu0 %v5605
        %5656 = vmatpush.msra.mxu0 %v5604
        %5657 = vmatpush.msra.mxu0 %v5603
        %5658 = vmatpush.msra.mxu0 %v5602
        %5659 = vmatmul.f32.gmra.mxu0 %v5639
        %v5660 = vpop.f32.mrf.mxu0
        %v5661 = vadd.f32 0.0, %v5660
        %5662 = vdwg.mxu0
        %5663 = vmatpush.msra.mxu0 %v5633
        %5664 = vmatpush.msra.mxu0 %v5632
        %5665 = vmatpush.msra.mxu0 %v5631
        %5666 = vmatpush.msra.mxu0 %v5630
        %5667 = vmatpush.msra.mxu0 %v5629
        %5668 = vmatpush.msra.mxu0 %v5628
        %5669 = vmatpush.msra.mxu0 %v5627
        %5670 = vmatpush.msra.mxu0 %v5626
        %5671 = vmatpush.msra.mxu0 %v5625
        %5672 = vmatpush.msra.mxu0 %v5624
        %5673 = vmatpush.msra.mxu0 %v5623
        %5674 = vmatpush.msra.mxu0 %v5622
        %5675 = vmatpush.msra.mxu0 %v5621
        %5676 = vmatpush.msra.mxu0 %v5620
        %5677 = vmatpush.msra.mxu0 %v5619
        %5678 = vmatpush.msra.mxu0 %v5618
        %5679 = vmatmul.f32.gmra.mxu0 %v5640
        %v5680 = vpop.f32.mrf.mxu0
        %v5681 = vadd.f32 %v5661, %v5680
        %5682 = vdwg.mxu0
        %v5683 = vadd.f32 %v5571, %v5681
        %5684 = vst [vmem:[#allocation1] sm:$0xff] %v3937
        %5685 = vst [vmem:[#allocation1 + $0x9] sm:$0xff] %v3938
        %5686 = vst [vmem:[#allocation1 + $0x12] sm:$0xff] %v3939
        %5687 = vst [vmem:[#allocation1 + $0x1b] sm:$0xff] %v3940
        %5688 = vst [vmem:[#allocation1 + $0x24] sm:$0xff] %v3941
        %5689 = vst [vmem:[#allocation1 + $0x2d] sm:$0xff] %v3942
        %5690 = vst [vmem:[#allocation1 + $0x36] sm:$0xff] %v3943
        %5691 = vst [vmem:[#allocation1 + $0x3f] sm:$0xff] %v3944
        %s5692 = scalar_lea.vmem [#allocation1], 7
        %v5693 = vld [vmem:[%s5692] ss:$9 sm:$0xff]
        %5694 = vst [vmem:[#allocation1] sm:$0xff] %v3945
        %5695 = vst [vmem:[#allocation1 + $0x9] sm:$0xff] %v3946
        %5696 = vst [vmem:[#allocation1 + $0x12] sm:$0xff] %v3947
        %5697 = vst [vmem:[#allocation1 + $0x1b] sm:$0xff] %v3948
        %5698 = vst [vmem:[#allocation1 + $0x24] sm:$0xff] %v3949
        %5699 = vst [vmem:[#allocation1 + $0x2d] sm:$0xff] %v3950
        %5700 = vst [vmem:[#allocation1 + $0x36] sm:$0xff] %v3951
        %5701 = vst [vmem:[#allocation1 + $0x3f] sm:$0xff] %v3952
        %v5702 = vld [vmem:[%s5692] ss:$9 sm:$0xff]
        %v5706 = vunpack.c.l.s4 1966171168
        %v5707 = vunpack.c.0.s8 %v5706
        %v5708 = vperm.slane %v5693, %v5707
        %v5710 = vunpack.c.l.s4 1966171168
        %v5711 = vunpack.c.0.s8 %v5710
        %v5712 = vperm.slane %v5702, %v5711
        %s5713 = scalar_lea.vmem %s7, 3840
        %v5714 = vld [vmem:[%s5713] sm:$0xff]
        %v5715 = vld [vmem:[%s5713 + $0x8] sm:$0xff]
        %v5716 = vld [vmem:[%s5713 + $0x10] sm:$0xff]
        %v5717 = vld [vmem:[%s5713 + $0x18] sm:$0xff]
        %v5718 = vld [vmem:[%s5713 + $0x20] sm:$0xff]
        %v5719 = vld [vmem:[%s5713 + $0x28] sm:$0xff]
        %v5720 = vld [vmem:[%s5713 + $0x30] sm:$0xff]
        %v5721 = vld [vmem:[%s5713 + $0x38] sm:$0xff]
        %v5722 = vld [vmem:[%s5713 + $0x40] sm:$0xff]
        %v5723 = vld [vmem:[%s5713 + $0x48] sm:$0xff]
        %v5724 = vld [vmem:[%s5713 + $0x50] sm:$0xff]
        %v5725 = vld [vmem:[%s5713 + $0x58] sm:$0xff]
        %v5726 = vld [vmem:[%s5713 + $0x60] sm:$0xff]
        %v5727 = vld [vmem:[%s5713 + $0x68] sm:$0xff]
        %v5728 = vld [vmem:[%s5713 + $0x70] sm:$0xff]
        %v5729 = vld [vmem:[%s5713 + $0x78] sm:$0xff]
        %v5730 = vld [vmem:[%s5713 + $0x80] sm:$0xff]
        %v5731 = vld [vmem:[%s5713 + $0x88] sm:$0xff]
        %v5732 = vld [vmem:[%s5713 + $0x90] sm:$0xff]
        %v5733 = vld [vmem:[%s5713 + $0x98] sm:$0xff]
        %v5734 = vld [vmem:[%s5713 + $0xa0] sm:$0xff]
        %v5735 = vld [vmem:[%s5713 + $0xa8] sm:$0xff]
        %v5736 = vld [vmem:[%s5713 + $0xb0] sm:$0xff]
        %v5737 = vld [vmem:[%s5713 + $0xb8] sm:$0xff]
        %v5738 = vld [vmem:[%s5713 + $0xc0] sm:$0xff]
        %v5739 = vld [vmem:[%s5713 + $0xc8] sm:$0xff]
        %v5740 = vld [vmem:[%s5713 + $0xd0] sm:$0xff]
        %v5741 = vld [vmem:[%s5713 + $0xd8] sm:$0xff]
        %v5742 = vld [vmem:[%s5713 + $0xe0] sm:$0xff]
        %v5743 = vld [vmem:[%s5713 + $0xe8] sm:$0xff]
        %v5744 = vld [vmem:[%s5713 + $0xf0] sm:$0xff]
        %v5745 = vld [vmem:[%s5713 + $0xf8] sm:$0xff]
        %5748 = vst [vmem:[#allocation1] ss:$2 sm:$0xff] %v5708
        %s5749 = scalar_lea.vmem [#allocation1], 1
        %5750 = vst [vmem:[%s5749] ss:$2 sm:$0xff] %v5712
        %v5751 = vld.sshfl [vmem:[#allocation1] sm:$0xff pattern:$0x75316420]
        %v5752 = vld.sshfl [vmem:[#allocation1 + $0x8] sm:$0xff pattern:$0x75316420]
        %5755 = vmatpush.msra.mxu0 %v5729
        %5756 = vmatpush.msra.mxu0 %v5728
        %5757 = vmatpush.msra.mxu0 %v5727
        %5758 = vmatpush.msra.mxu0 %v5726
        %5759 = vmatpush.msra.mxu0 %v5725
        %5760 = vmatpush.msra.mxu0 %v5724
        %5761 = vmatpush.msra.mxu0 %v5723
        %5762 = vmatpush.msra.mxu0 %v5722
        %5763 = vmatpush.msra.mxu0 %v5721
        %5764 = vmatpush.msra.mxu0 %v5720
        %5765 = vmatpush.msra.mxu0 %v5719
        %5766 = vmatpush.msra.mxu0 %v5718
        %5767 = vmatpush.msra.mxu0 %v5717
        %5768 = vmatpush.msra.mxu0 %v5716
        %5769 = vmatpush.msra.mxu0 %v5715
        %5770 = vmatpush.msra.mxu0 %v5714
        %5771 = vmatmul.f32.gmra.mxu0 %v5751
        %v5772 = vpop.f32.mrf.mxu0
        %v5773 = vadd.f32 0.0, %v5772
        %5774 = vdwg.mxu0
        %5775 = vmatpush.msra.mxu0 %v5745
        %5776 = vmatpush.msra.mxu0 %v5744
        %5777 = vmatpush.msra.mxu0 %v5743
        %5778 = vmatpush.msra.mxu0 %v5742
        %5779 = vmatpush.msra.mxu0 %v5741
        %5780 = vmatpush.msra.mxu0 %v5740
        %5781 = vmatpush.msra.mxu0 %v5739
        %5782 = vmatpush.msra.mxu0 %v5738
        %5783 = vmatpush.msra.mxu0 %v5737
        %5784 = vmatpush.msra.mxu0 %v5736
        %5785 = vmatpush.msra.mxu0 %v5735
        %5786 = vmatpush.msra.mxu0 %v5734
        %5787 = vmatpush.msra.mxu0 %v5733
        %5788 = vmatpush.msra.mxu0 %v5732
        %5789 = vmatpush.msra.mxu0 %v5731
        %5790 = vmatpush.msra.mxu0 %v5730
        %5791 = vmatmul.f32.gmra.mxu0 %v5752
        %v5792 = vpop.f32.mrf.mxu0
        %v5793 = vadd.f32 %v5773, %v5792
        %5794 = vdwg.mxu0
        %v5795 = vadd.f32 %v5683, %v5793
        %v5796 = vld [vmem:[%s8] sm:$0x1]
        %v5798 = vperm.slane %v5796, 0
        %v5800 = vadd.f32 %v5795, %v5798
        %v5801 = vmax.f32 %v5800, 0.0
        %v5802 = vld [vmem:[%s9] sm:$0xff]
        %v5803 = vld [vmem:[%s9 + $0x8] sm:$0xff]
        %v5804 = vld [vmem:[%s9 + $0x10] sm:$0xff]
        %v5805 = vld [vmem:[%s9 + $0x18] sm:$0xff]
        %v5806 = vld [vmem:[%s10] sm:$0x1]
        %v5808 = vperm.slane %v5806, 0
        %v5811 = vsel %vm2495, %v5801, 0
        %5813 = vmatpush.msra.mxu0 0.0
        %5814 = vmatpush.msra.mxu0 0.0
        %5815 = vmatpush.msra.mxu0 0.0
        %5816 = vmatpush.msra.mxu0 0.0
        %5817 = vmatpush.msra.mxu0 0.0
        %5818 = vmatpush.msra.mxu0 0.0
        %5819 = vmatpush.msra.mxu0 0.0
        %5820 = vmatpush.msra.mxu0 0.0
        %5821 = vmatpush.msra.mxu0 0.0
        %5822 = vmatpush.msra.mxu0 0.0
        %5823 = vmatpush.msra.mxu0 0.0
        %5824 = vmatpush.msra.mxu0 0.0
        %5825 = vmatpush.msra.mxu0 %v5805
        %5826 = vmatpush.msra.mxu0 %v5804
        %5827 = vmatpush.msra.mxu0 %v5803
        %5828 = vmatpush.msra.mxu0 %v5802
        %5829 = vmatmul.f32.gmra.mxu0 %v5811
        %v5830 = vpop.f32.mrf.mxu0
        %v5831 = vadd.f32 %v5808, %v5830
        %5832 = vdwg.mxu0
        %5833 = vst [vmem:[%s378] sm:$0xff] %v5831
        %s5834 = sand.u32 %s269, 1
        %s5835 = scalar_lea.sflag [#allocation3], %s5834
        %s5836 = sand.u32 %s269, 1
        %s5837 = smul.addr %s5836, 8
        %s5838 = scalar_lea.vmem [#allocation2], %s5837
        // Predicated region
        $region65: #{sketch_cnn_forward.1} parent=63 // pred_check
          %p5839 = pneg %p279
        $region66: #{sketch_cnn_forward.1} parent=63 // pred_check_branch
          %5841 = sbr.rel (%p5839) target = $region68
        $region67: #{sketch_cnn_forward.1} parent=63 // pred_region
          %5843 = vsyncadd %s5835, 0
          %s5844 = smul.addr %s25, 8
          %s5845 = scalar_lea.hbm %s11, %s5844
          %s5847 = sshll.u32 %s5838, 4
          %s5848 = int_to_ptr.vmem [resolvable:$true] %s5847
          %s5849 = sshll.u32 %s5845, 4
          %s5850 = int_to_ptr.hbm [resolvable:$true] %s5849
          %5852 = dma.vmem_to_hbm [thread:$0]  %s5848, 128, %s5850, %s5835
        $region68: #{sketch_cnn_forward.1} parent=63 // pred_fallthru
          _
      $region64: #{sketch_cnn_forward.1} parent=5 // pred_fallthru
        _
      %p5853 = scmp.le.s32.totalorder 2, %s20
      // Predicated region
      $region69: #{sketch_cnn_forward.1} parent=5 // pred_check
        %p5854 = pneg %p5853
      $region70: #{sketch_cnn_forward.1} parent=5 // pred_check_branch
        %5856 = sbr.rel (%p5854) target = $region72
      $region71: #{sketch_cnn_forward.1} parent=5 // pred_region
        %s5857 = ssub.s32 %s20, 2
        // Predicated region
        $region73: #{sketch_cnn_forward.1} parent=71 // pred_check
          %p5858 = pneg %p285
        $region74: #{sketch_cnn_forward.1} parent=71 // pred_check_branch
          %5860 = sbr.rel (%p5858) target = $region76
        $region75: #{sketch_cnn_forward.1} parent=71 // pred_region
          %s5861 = sand.u32 %s270, 1
          %s5862 = scalar_lea.sflag [#allocation3], %s5861
          %s5863 = sand.u32 %s270, 1
          %s5864 = smul.addr %s5863, 8
          %s5865 = scalar_lea.vmem [#allocation2], %s5864
          %5867 = dma.done %s5862, 128
        $region76: #{sketch_cnn_forward.1} parent=71 // pred_fallthru
          _
      $region72: #{sketch_cnn_forward.1} parent=5 // pred_fallthru
        _
    $region6: #{sketch_cnn_forward.1} parent=1 // loop_footer
      %s24 = sadd.s32 1, %s20
    $region7: #{sketch_cnn_forward.1} parent=1 // loop_footer_branch
      %19 = sbr.rel target = $region3
    $region8: #{sketch_cnn_forward.1} parent=1 // loop_exit
      _
    %5868 = vsyncpa [#allocation3], 1
    %s5869 = scalar_lea.sflag [#allocation3], 1
    %5870 = vsyncpa %s5869, 1

</llo_original>
